<compile_context>
chip_gen: v7x
topology: tpu7x:2x2x1
jax: 0.10.0
libtpu: 0.0.40
codegen_flags: <defaults>
</compile_context>

<pallas_src>
import functools

import jax
import jax.numpy as jnp
from jax import lax
from jax.experimental import pallas as pl
from jax.experimental.pallas import tpu as pltpu


# ----------------------------------------------------------------------------
# helpers
# ----------------------------------------------------------------------------
def _vmem_limit_bytes(frac=0.85):
    """Generation-aware VMEM budget instead of a hard-coded 32 MiB."""
    try:
        return int(pltpu.get_tpu_info().vmem_capacity_bytes * frac)
    except Exception:  # pragma: no cover - fall back to the compiler default
        return None


def _pick_row_tile(n):
    """Row tile for the inner SAGE pipeline (caps f32 temporaries, keeps
    sublane-aligned unmasked stores). Falls back to whole-N for tiny graphs."""
    for cand in (256, 128, 64, 32, 16, 8):
        if n % cand == 0:
            return cand
    return n


def _pick_batch_tile(b):
    """Batch tile for the attention/classifier kernel."""
    for cand in (512, 256, 128, 64, 32, 16, 8):
        if b % cand == 0:
            return cand
    return b


# ----------------------------------------------------------------------------
# Kernel 1: fused multi-layer GraphSage for one meta-path + one-hot batch gather
#   grid = (M,)  [one grid step per meta-path, "parallel"]
#   nodes_ref : [B, 1]      int32 (batch node ids)
#   a_ref     : [N, N]      bf16  (row-normalized adjacency, this meta-path)
#   x_ref     : [N, DP]     bf16  (raw features zero-padded to 128 lanes)
#   w_ref     : [L, DP, DP] bf16  (per-layer weights, zero-padded)
#   out_ref   : [B, DP]     bf16  (gathered batch embeddings, this meta-path)
#   h_a, h_b  : [N, DP]     bf16  VMEM scratches (ping-pong layer activations)
# ----------------------------------------------------------------------------
def _sage_multi_layer_kernel(nodes_ref, a_ref, x_ref, w_ref, out_ref,
                             h_a, h_b, *, tile_rows):
    n = a_ref.shape[0]
    num_layers = w_ref.shape[0]
    n_tiles = n // tile_rows
    scratches = (h_a, h_b)

    def run_layer(src_ref, dst_ref, layer):
        w_l = w_ref[layer]                                     # [DP, DP] bf16 (hoisted)

        if n_tiles == 1:
            agg = jnp.dot(a_ref[...], src_ref[...],
                          preferred_element_type=jnp.float32)   # [N, DP] f32
            hid = jnp.dot(agg.astype(jnp.bfloat16), w_l,
                          preferred_element_type=jnp.float32)   # [N, DP] f32
            dst_ref[...] = jnp.maximum(hid, 0.0).astype(jnp.bfloat16)
        else:
            def tile_body(t, carry):
                r = pl.multiple_of(t * tile_rows, tile_rows)
                agg = jnp.dot(a_ref[pl.ds(r, tile_rows), :], src_ref[...],
                              preferred_element_type=jnp.float32)   # [T, DP] f32
                hid = jnp.dot(agg.astype(jnp.bfloat16), w_l,
                              preferred_element_type=jnp.float32)   # [T, DP] f32
                dst_ref[pl.ds(r, tile_rows), :] = (
                    jnp.maximum(hid, 0.0).astype(jnp.bfloat16))
                return carry

            lax.fori_loop(0, n_tiles, tile_body, 0)

    # layer 0 reads the padded raw features directly; later layers ping-pong.
    run_layer(x_ref, scratches[0], 0)
    for layer in range(1, num_layers):
        run_layer(scratches[(layer + 1) % 2], scratches[layer % 2], layer)
    h_final = scratches[(num_layers - 1) % 2]

    # one-hot MXU gather of the B batch nodes: single full-width matmul + store
    b = out_ref.shape[0]
    ids = nodes_ref[...]                                        # [B, 1] int32
    col = lax.broadcasted_iota(jnp.int32, (b, n), 1)            # [B, N]
    onehot = (col == ids).astype(jnp.bfloat16)                  # [B, N]
    gathered = jnp.dot(onehot, h_final[...],
                       preferred_element_type=jnp.float32)      # [B, DP] f32
    out_ref[...] = gathered.astype(out_ref.dtype)


def sage_encode(nodes_2d, adj, feat, ws):
    """adj:[M,N,N] bf16, feat:[N,DP] bf16, ws:[M,L,DP,DP] bf16 -> [M,B,DP] bf16."""
    M, N, _ = adj.shape
    L = ws.shape[1]
    DP = feat.shape[1]
    B = nodes_2d.shape[0]
    tile_rows = _pick_row_tile(N)

    flops = M * (L * (2 * N * N * DP + 2 * N * DP * DP) + 2 * B * N * DP)
    bytes_accessed = (M * N * N * 2 + N * DP * 2
                      + M * L * DP * DP * 2 + M * B * DP * 2 + B * 4)

    grid_spec = pltpu.PrefetchScalarGridSpec(
        num_scalar_prefetch=0,
        grid=(M,),
        in_specs=[
            pl.BlockSpec((B, 1), lambda m: (0, 0)),
            pl.BlockSpec((pl.Squeezed(), N, N), lambda m: (m, 0, 0)),
            pl.BlockSpec((N, DP), lambda m: (0, 0)),
            pl.BlockSpec((pl.Squeezed(), L, DP, DP), lambda m: (m, 0, 0, 0)),
        ],
        out_specs=pl.BlockSpec((pl.Squeezed(), B, DP), lambda m: (m, 0, 0)),
        scratch_shapes=[pltpu.VMEM((N, DP), jnp.bfloat16),
                        pltpu.VMEM((N, DP), jnp.bfloat16)],
    )

    return pl.pallas_call(
        functools.partial(_sage_multi_layer_kernel, tile_rows=tile_rows),
        out_shape=jax.ShapeDtypeStruct((M, B, DP), jnp.bfloat16),
        grid_spec=grid_spec,
        compiler_params=pltpu.CompilerParams(
            dimension_semantics=("parallel",),
            vmem_limit_bytes=_vmem_limit_bytes(),
        ),
        cost_estimate=pl.CostEstimate(
            flops=flops, transcendentals=0, bytes_accessed=bytes_accessed),
    )(nodes_2d, adj, feat, ws)


# ----------------------------------------------------------------------------
# Kernel 2: HAN semantic attention over meta-paths + classifier (B-tiled grid)
#   me:[M,TB,DP] bf16  wa:[DP,DP] bf16  ba:[1,DP] f32  q:[1,DP] f32
#   wc:[DP,CP] bf16    bc:[1,CP] f32    -> out:[TB,CP] f32 (padded; sliced outside)
# ----------------------------------------------------------------------------
def _attn_clf_kernel(me_ref, wa_ref, ba_ref, q_ref, wc_ref, bc_ref, out_ref):
    num_meta, tb, dp = me_ref.shape
    wa = wa_ref[...]                                            # [DP, DP] bf16
    ba = ba_ref[...]                                            # [1, DP]  f32
    q = q_ref[...]                                              # [1, DP]  f32

    # per-meta-path projection + score: s_m = <tanh(h_m @ Wa + ba), q>
    h_list, scores = [], []
    for m in range(num_meta):
        h_m = me_ref[m]                                         # [TB, DP] bf16
        h_list.append(h_m)
        p_m = jnp.tanh(
            jnp.dot(h_m, wa, preferred_element_type=jnp.float32) + ba)   # f32
        scores.append(jnp.sum(p_m * q, axis=-1, keepdims=True))          # [TB, 1]

    # numerically-stable softmax over the (static, tiny) meta-path axis
    s_max = scores[0]
    for m in range(1, num_meta):
        s_max = jnp.maximum(s_max, scores[m])
    exps = [jnp.exp(s - s_max) for s in scores]
    denom = exps[0]
    for m in range(1, num_meta):
        denom = denom + exps[m]
    inv = pl.reciprocal(denom, approx=True)                     # EUP slot

    # beta-weighted fusion of meta-path embeddings
    fuse = jnp.zeros((tb, dp), jnp.float32)
    for m in range(num_meta):
        fuse = fuse + (exps[m] * inv) * h_list[m].astype(jnp.float32)

    # classifier (Linear) — lane-dense padded logits
    logits = jnp.dot(fuse.astype(jnp.bfloat16), wc_ref[...],
                     preferred_element_type=jnp.float32)        # [TB, CP]
    out_ref[...] = (logits + bc_ref[...]).astype(out_ref.dtype)


def attn_classify(me, wa, ba, q, wc, bc):
    M, B, DP = me.shape
    CP = wc.shape[1]
    TB = _pick_batch_tile(B)

    flops = 2 * M * B * DP * DP + 6 * M * B * DP + 2 * B * DP * CP
    transcendentals = M * B * DP + M * B
    bytes_accessed = (2 * (M * B * DP + DP * DP + DP * CP)
                      + 4 * (2 * DP + CP) + 4 * B * CP)

    grid_spec = pltpu.PrefetchScalarGridSpec(
        num_scalar_prefetch=0,
        grid=(B // TB,),
        in_specs=[
            pl.BlockSpec((M, TB, DP), lambda b: (0, b, 0)),
            pl.BlockSpec((DP, DP), lambda b: (0, 0)),
            pl.BlockSpec((1, DP), lambda b: (0, 0)),
            pl.BlockSpec((1, DP), lambda b: (0, 0)),
            pl.BlockSpec((DP, CP), lambda b: (0, 0)),
            pl.BlockSpec((1, CP), lambda b: (0, 0)),
        ],
        out_specs=pl.BlockSpec((TB, CP), lambda b: (b, 0)),
    )

    return pl.pallas_call(
        _attn_clf_kernel,
        out_shape=jax.ShapeDtypeStruct((B, CP), jnp.float32),
        grid_spec=grid_spec,
        compiler_params=pltpu.CompilerParams(
            dimension_semantics=("parallel",),
            vmem_limit_bytes=_vmem_limit_bytes(),
        ),
        cost_estimate=pl.CostEstimate(
            flops=flops, transcendentals=transcendentals,
            bytes_accessed=bytes_accessed),
    )(me, wa, ba, q, wc, bc)


# ----------------------------------------------------------------------------
# HANSage forward (thin jitted glue around the two Pallas kernels)
# ----------------------------------------------------------------------------
@functools.partial(jax.jit, static_argnames=("num_classes",))
def han_sage_forward(nodes_2d, adj_bf16, feat_pad, ws_bf16,
                     wa_p, ba_p, q_p, wc_p, bc_p, *, num_classes):
    me = sage_encode(nodes_2d, adj_bf16, feat_pad, ws_bf16)       # [M, B, DP] bf16
    logits_pad = attn_classify(me, wa_p, ba_p, q_p, wc_p, bc_p)   # [B, CP]  f32
    return logits_pad[:, :num_classes]                            # [B, C]


# ----------------------------------------------------------------------------
# Deterministic setup + smoke test
# ----------------------------------------------------------------------------
if __name__ == "__main__":
    key = jax.random.PRNGKey(0)

    N = 512          # number of graph nodes (exercises the row-tiled inner loop)
    F = 16           # raw feature dim
    D = 32           # embed_dim
    C = 8            # num_classes
    M = 3            # number of meta-paths (len(adj_lists))
    num_layers = 2
    B = 8            # batch of query nodes

    DP = 128         # lane-dense padded feature/embed width
    CP = 128         # lane-dense padded class width

    keys = jax.random.split(key, 16)

    # node features
    feat_data = jax.random.normal(keys[0], (N, F), dtype=jnp.float32)

    # dense row-normalized adjacencies (one per meta-path), self-loops added
    adj_norms = []
    for m in range(M):
        a = (jax.random.uniform(keys[1 + m], (N, N)) < 0.05).astype(jnp.float32)
        a = a + jnp.eye(N, dtype=jnp.float32)
        a = a / jnp.sum(a, axis=1, keepdims=True)
        adj_norms.append(a)
    adj_norms = jnp.stack(adj_norms, axis=0)                   # [M, N, N]

    # GraphSage weights stacked + zero-padded to [M, L, DP, DP]
    # (layer 0 maps F->D, later layers D->D; padded rows/cols are zero so the
    #  padded lanes stay exactly zero through every layer)
    ws = jnp.zeros((M, num_layers, DP, DP), dtype=jnp.float32)
    for m in range(M):
        for l in range(num_layers):
            d_in = F if l == 0 else D
            k = jax.random.fold_in(keys[5], m * num_layers + l)
            w = (jax.random.normal(k, (d_in, D), dtype=jnp.float32)
                 * (1.0 / jnp.sqrt(d_in)))
            ws = ws.at[m, l, :d_in, :D].set(w)

    # AttentionLayer(D, D) params
    wa = jax.random.normal(keys[6], (D, D), dtype=jnp.float32) * (1.0 / jnp.sqrt(D))
    ba = jax.random.normal(keys[7], (1, D), dtype=jnp.float32) * 0.01
    q = jax.random.normal(keys[8], (D, 1), dtype=jnp.float32) * (1.0 / jnp.sqrt(D))

    # Classifer: Linear(D, C)
    wc = jax.random.normal(keys[9], (D, C), dtype=jnp.float32) * (1.0 / jnp.sqrt(D))
    bc = jax.random.normal(keys[10], (1, C), dtype=jnp.float32) * 0.01

    # batch of node indices
    nodes = jax.random.randint(keys[11], (B,), 0, N, dtype=jnp.int32)
    nodes_2d = nodes.reshape(B, 1)

    # --- host-side padding to 128 lanes + bf16 casts for MXU inputs ---
    feat_pad = jnp.zeros((N, DP), jnp.float32).at[:, :F].set(feat_data)
    feat_pad = feat_pad.astype(jnp.bfloat16)
    adj_bf16 = adj_norms.astype(jnp.bfloat16)
    ws_bf16 = ws.astype(jnp.bfloat16)

    wa_p = jnp.zeros((DP, DP), jnp.float32).at[:D, :D].set(wa).astype(jnp.bfloat16)
    ba_p = jnp.zeros((1, DP), jnp.float32).at[:, :D].set(ba)
    q_p = jnp.zeros((1, DP), jnp.float32).at[:, :D].set(q.T)
    wc_p = jnp.zeros((DP, CP), jnp.float32).at[:D, :C].set(wc).astype(jnp.bfloat16)
    bc_p = jnp.zeros((1, CP), jnp.float32).at[:, :C].set(bc)

    out = han_sage_forward(nodes_2d, adj_bf16, feat_pad, ws_bf16,
                           wa_p, ba_p, q_p, wc_p, bc_p, num_classes=C)
    jax.block_until_ready(out)
    assert out.shape == (B, C), out.shape
    assert bool(jnp.all(jnp.isfinite(out)))
    print("KERNEL_OK")
</pallas_src>

<mosaic_0001>
module attributes {stable_mosaic.version = 11 : i64} {
  func.func @_sage_multi_layer_kernel(%arg0: i32, %arg1: memref<8x1xi32, #tpu.memory_space<vmem>>, %arg2: memref<1x512x512xbf16, #tpu.memory_space<vmem>>, %arg3: memref<512x128xbf16, #tpu.memory_space<vmem>>, %arg4: memref<1x2x128x128xbf16, #tpu.memory_space<vmem>>, %arg5: memref<1x8x128xbf16, #tpu.memory_space<vmem>>, %arg6: memref<512x128xbf16, #tpu.memory_space<vmem>>, %arg7: memref<512x128xbf16, #tpu.memory_space<vmem>>) attributes {dimension_semantics = [#tpu.dimension_semantics<parallel>], iteration_bounds = array<i64: 3>, scalar_prefetch = 0 : i64, scratch_operands = 2 : i64, tpu.core_type = #tpu.core_type<tc>, window_params = [{pipeline_mode = #tpu.pipeline_mode<synchronous>, transform_indices = @transform_0, window_bounds = array<i64: 8, 1>}, {transform_indices = @transform_1, window_bounds = array<i64: 1, 512, 512>}, {pipeline_mode = #tpu.pipeline_mode<synchronous>, transform_indices = @transform_2, window_bounds = array<i64: 512, 128>}, {transform_indices = @transform_3, window_bounds = array<i64: 1, 2, 128, 128>}, {transform_indices = @transform_4, window_bounds = array<i64: 1, 8, 128>}]} {
    %c0 = arith.constant 0 : index
    %c0_0 = arith.constant 0 : index
    %c0_1 = arith.constant 0 : index
    %c0_2 = arith.constant 0 : index
    %0 = vector.load %arg4[%c0, %c0_0, %c0_1, %c0_2] : memref<1x2x128x128xbf16, #tpu.memory_space<vmem>>, vector<1x1x128x128xbf16>
    %1 = vector.shape_cast %0 : vector<1x1x128x128xbf16> to vector<128x128xbf16>
    %c0_i32 = arith.constant 0 : i32
    %c2_i32 = arith.constant 2 : i32
    %2 = arith.addi %c0_i32, %c2_i32 : i32
    %c1_i32 = arith.constant 1 : i32
    scf.for %arg8 = %c0_i32 to %2 step %c1_i32  : i32 {
      %c256_i32 = arith.constant 256 : i32
      %19 = arith.muli %arg8, %c256_i32 : i32
      %20 = tpu.assume_multiple %19, 256 : i32
      %c0_18 = arith.constant 0 : index
      %21 = arith.index_cast %20 : i32 to index
      %c0_19 = arith.constant 0 : index
      %22 = vector.load %arg2[%c0_18, %21, %c0_19] : memref<1x512x512xbf16, #tpu.memory_space<vmem>>, vector<1x256x512xbf16>
      %23 = vector.shape_cast %22 : vector<1x256x512xbf16> to vector<256x512xbf16>
      %c0_20 = arith.constant 0 : index
      %c0_21 = arith.constant 0 : index
      %24 = vector.load %arg3[%c0_20, %c0_21] : memref<512x128xbf16, #tpu.memory_space<vmem>>, vector<512x128xbf16>
      %cst_22 = arith.constant dense<0.000000e+00> : vector<256x128xf32>
      %25 = tpu.matmul %23, %24, %cst_22 {dimension_numbers = #tpu.dot_dimension_numbers<[1], [0], [0], [1], [0, 0, 1, 1], [], []>} : vector<256x512xbf16>, vector<512x128xbf16>, vector<256x128xf32> -> vector<256x128xf32>
      %26 = arith.truncf %25 : vector<256x128xf32> to vector<256x128xbf16>
      %cst_23 = arith.constant dense<0.000000e+00> : vector<256x128xf32>
      %27 = tpu.matmul %26, %1, %cst_23 {dimension_numbers = #tpu.dot_dimension_numbers<[1], [0], [0], [1], [0, 0, 1, 1], [], []>} : vector<256x128xbf16>, vector<128x128xbf16>, vector<256x128xf32> -> vector<256x128xf32>
      %cst_24 = arith.constant 0.000000e+00 : f32
      %28 = vector.broadcast %cst_24 : f32 to vector<256x128xf32>
      %29 = arith.maximumf %27, %28 : vector<256x128xf32>
      %30 = arith.truncf %29 : vector<256x128xf32> to vector<256x128xbf16>
      %31 = arith.index_cast %20 : i32 to index
      %c0_25 = arith.constant 0 : index
      %32 = vector.load %arg6[%31, %c0_25] : memref<512x128xbf16, #tpu.memory_space<vmem>>, vector<256x128xbf16>
      tpu.vector_store %arg6[%31, %c0_25], %30 {strides = array<i32>} : memref<512x128xbf16, #tpu.memory_space<vmem>>, vector<256x128xbf16>,
    }
    %c2_i32_3 = arith.constant 2 : i32
    %c0_4 = arith.constant 0 : index
    %c1 = arith.constant 1 : index
    %c0_5 = arith.constant 0 : index
    %c0_6 = arith.constant 0 : index
    %3 = vector.load %arg4[%c0_4, %c1, %c0_5, %c0_6] : memref<1x2x128x128xbf16, #tpu.memory_space<vmem>>, vector<1x1x128x128xbf16>
    %4 = vector.shape_cast %3 : vector<1x1x128x128xbf16> to vector<128x128xbf16>
    %c0_i32_7 = arith.constant 0 : i32
    %c2_i32_8 = arith.constant 2 : i32
    %5 = arith.addi %c0_i32_7, %c2_i32_8 : i32
    %c1_i32_9 = arith.constant 1 : i32
    scf.for %arg8 = %c0_i32_7 to %5 step %c1_i32_9  : i32 {
      %c256_i32 = arith.constant 256 : i32
      %19 = arith.muli %arg8, %c256_i32 : i32
      %20 = tpu.assume_multiple %19, 256 : i32
      %c0_18 = arith.constant 0 : index
      %21 = arith.index_cast %20 : i32 to index
      %c0_19 = arith.constant 0 : index
      %22 = vector.load %arg2[%c0_18, %21, %c0_19] : memref<1x512x512xbf16, #tpu.memory_space<vmem>>, vector<1x256x512xbf16>
      %23 = vector.shape_cast %22 : vector<1x256x512xbf16> to vector<256x512xbf16>
      %c0_20 = arith.constant 0 : index
      %c0_21 = arith.constant 0 : index
      %24 = vector.load %arg6[%c0_20, %c0_21] : memref<512x128xbf16, #tpu.memory_space<vmem>>, vector<512x128xbf16>
      %cst_22 = arith.constant dense<0.000000e+00> : vector<256x128xf32>
      %25 = tpu.matmul %23, %24, %cst_22 {dimension_numbers = #tpu.dot_dimension_numbers<[1], [0], [0], [1], [0, 0, 1, 1], [], []>} : vector<256x512xbf16>, vector<512x128xbf16>, vector<256x128xf32> -> vector<256x128xf32>
      %26 = arith.truncf %25 : vector<256x128xf32> to vector<256x128xbf16>
      %cst_23 = arith.constant dense<0.000000e+00> : vector<256x128xf32>
      %27 = tpu.matmul %26, %4, %cst_23 {dimension_numbers = #tpu.dot_dimension_numbers<[1], [0], [0], [1], [0, 0, 1, 1], [], []>} : vector<256x128xbf16>, vector<128x128xbf16>, vector<256x128xf32> -> vector<256x128xf32>
      %cst_24 = arith.constant 0.000000e+00 : f32
      %28 = vector.broadcast %cst_24 : f32 to vector<256x128xf32>
      %29 = arith.maximumf %27, %28 : vector<256x128xf32>
      %30 = arith.truncf %29 : vector<256x128xf32> to vector<256x128xbf16>
      %31 = arith.index_cast %20 : i32 to index
      %c0_25 = arith.constant 0 : index
      %32 = vector.load %arg7[%31, %c0_25] : memref<512x128xbf16, #tpu.memory_space<vmem>>, vector<256x128xbf16>
      tpu.vector_store %arg7[%31, %c0_25], %30 {strides = array<i32>} : memref<512x128xbf16, #tpu.memory_space<vmem>>, vector<256x128xbf16>,
    }
    %c2_i32_10 = arith.constant 2 : i32
    %c0_11 = arith.constant 0 : index
    %c0_12 = arith.constant 0 : index
    %6 = vector.load %arg1[%c0_11, %c0_12] : memref<8x1xi32, #tpu.memory_space<vmem>>, vector<8x1xi32>
    %7 = tpu.iota {dimensions = array<i32: 1>} : vector<8x512xi32>
    %8 = vector.broadcast %6 : vector<8x1xi32> to vector<8x512xi32>
    %9 = arith.cmpi eq, %7, %8 : vector<8x512xi32>
    %10 = arith.extui %9 : vector<8x512xi1> to vector<8x512xi32>
    %11 = arith.sitofp %10 : vector<8x512xi32> to vector<8x512xf32>
    %12 = arith.truncf %11 : vector<8x512xf32> to vector<8x512xbf16>
    %c0_13 = arith.constant 0 : index
    %c0_14 = arith.constant 0 : index
    %13 = vector.load %arg7[%c0_13, %c0_14] : memref<512x128xbf16, #tpu.memory_space<vmem>>, vector<512x128xbf16>
    %cst = arith.constant dense<0.000000e+00> : vector<8x128xf32>
    %14 = tpu.matmul %12, %13, %cst {dimension_numbers = #tpu.dot_dimension_numbers<[1], [0], [0], [1], [0, 0, 1, 1], [], []>} : vector<8x512xbf16>, vector<512x128xbf16>, vector<8x128xf32> -> vector<8x128xf32>
    %15 = arith.truncf %14 : vector<8x128xf32> to vector<8x128xbf16>
    %c0_15 = arith.constant 0 : index
    %c0_16 = arith.constant 0 : index
    %c0_17 = arith.constant 0 : index
    %16 = vector.load %arg5[%c0_15, %c0_16, %c0_17] : memref<1x8x128xbf16, #tpu.memory_space<vmem>>, vector<1x8x128xbf16>
    %17 = vector.shape_cast %16 : vector<1x8x128xbf16> to vector<8x128xbf16>
    %18 = vector.shape_cast %15 : vector<8x128xbf16> to vector<1x8x128xbf16>
    tpu.vector_store %arg5[%c0_15, %c0_16, %c0_17], %18 {strides = array<i32>} : memref<1x8x128xbf16, #tpu.memory_space<vmem>>, vector<1x8x128xbf16>,
    return
  }
  func.func @transform_0(%arg0: i32) -> (i32, i32) {
    %c0_i32 = arith.constant 0 : i32
    %c0_i32_0 = arith.constant 0 : i32
    %c0_i32_1 = arith.constant 0 : i32
    return %c0_i32, %c0_i32_0 : i32, i32
  }
  func.func @transform_1(%arg0: i32) -> (i32, i32, i32) {
    %c0_i32 = arith.constant 0 : i32
    %c0_i32_0 = arith.constant 0 : i32
    %c0_i32_1 = arith.constant 0 : i32
    return %arg0, %c0_i32, %c0_i32_0 : i32, i32, i32
  }
  func.func @transform_2(%arg0: i32) -> (i32, i32) {
    %c0_i32 = arith.constant 0 : i32
    %c0_i32_0 = arith.constant 0 : i32
    %c0_i32_1 = arith.constant 0 : i32
    return %c0_i32, %c0_i32_0 : i32, i32
  }
  func.func @transform_3(%arg0: i32) -> (i32, i32, i32, i32) {
    %c0_i32 = arith.constant 0 : i32
    %c0_i32_0 = arith.constant 0 : i32
    %c0_i32_1 = arith.constant 0 : i32
    %c0_i32_2 = arith.constant 0 : i32
    return %arg0, %c0_i32, %c0_i32_0, %c0_i32_1 : i32, i32, i32, i32
  }
  func.func @transform_4(%arg0: i32) -> (i32, i32, i32) {
    %c0_i32 = arith.constant 0 : i32
    %c0_i32_0 = arith.constant 0 : i32
    %c0_i32_1 = arith.constant 0 : i32
    return %arg0, %c0_i32, %c0_i32_0 : i32, i32, i32
  }
}

module attributes {stable_mosaic.version = 11 : i64} {
  func.func @_attn_clf_kernel(%arg0: i32, %arg1: memref<3x8x128xbf16, #tpu.memory_space<vmem>>, %arg2: memref<128x128xbf16, #tpu.memory_space<vmem>>, %arg3: memref<1x128xf32, #tpu.memory_space<vmem>>, %arg4: memref<1x128xf32, #tpu.memory_space<vmem>>, %arg5: memref<128x128xbf16, #tpu.memory_space<vmem>>, %arg6: memref<1x128xf32, #tpu.memory_space<vmem>>, %arg7: memref<8x128xf32, #tpu.memory_space<vmem>>) attributes {dimension_semantics = [#tpu.dimension_semantics<parallel>], iteration_bounds = array<i64: 1>, scalar_prefetch = 0 : i64, scratch_operands = 0 : i64, tpu.core_type = #tpu.core_type<tc>, window_params = [{transform_indices = @transform_0, window_bounds = array<i64: 3, 8, 128>}, {pipeline_mode = #tpu.pipeline_mode<synchronous>, transform_indices = @transform_1, window_bounds = array<i64: 128, 128>}, {pipeline_mode = #tpu.pipeline_mode<synchronous>, transform_indices = @transform_2, window_bounds = array<i64: 1, 128>}, {pipeline_mode = #tpu.pipeline_mode<synchronous>, transform_indices = @transform_3, window_bounds = array<i64: 1, 128>}, {pipeline_mode = #tpu.pipeline_mode<synchronous>, transform_indices = @transform_4, window_bounds = array<i64: 128, 128>}, {pipeline_mode = #tpu.pipeline_mode<synchronous>, transform_indices = @transform_5, window_bounds = array<i64: 1, 128>}, {transform_indices = @transform_6, window_bounds = array<i64: 8, 128>}]} {
    %c0 = arith.constant 0 : index
    %c0_0 = arith.constant 0 : index
    %0 = vector.load %arg2[%c0, %c0_0] : memref<128x128xbf16, #tpu.memory_space<vmem>>, vector<128x128xbf16>
    %c0_1 = arith.constant 0 : index
    %c0_2 = arith.constant 0 : index
    %1 = vector.load %arg3[%c0_1, %c0_2] : memref<1x128xf32, #tpu.memory_space<vmem>>, vector<1x128xf32>
    %c0_3 = arith.constant 0 : index
    %c0_4 = arith.constant 0 : index
    %2 = vector.load %arg4[%c0_3, %c0_4] : memref<1x128xf32, #tpu.memory_space<vmem>>, vector<1x128xf32>
    %c0_5 = arith.constant 0 : index
    %c0_6 = arith.constant 0 : index
    %c0_7 = arith.constant 0 : index
    %3 = vector.load %arg1[%c0_5, %c0_6, %c0_7] : memref<3x8x128xbf16, #tpu.memory_space<vmem>>, vector<1x8x128xbf16>
    %4 = vector.shape_cast %3 : vector<1x8x128xbf16> to vector<8x128xbf16>
    %cst = arith.constant dense<0.000000e+00> : vector<8x128xf32>
    %5 = tpu.matmul %4, %0, %cst {dimension_numbers = #tpu.dot_dimension_numbers<[1], [0], [0], [1], [0, 0, 1, 1], [], []>} : vector<8x128xbf16>, vector<128x128xbf16>, vector<8x128xf32> -> vector<8x128xf32>
    %6 = vector.broadcast %1 : vector<1x128xf32> to vector<8x128xf32>
    %7 = arith.addf %5, %6 : vector<8x128xf32>
    %8 = math.tanh %7 : vector<8x128xf32>
    %9 = vector.broadcast %2 : vector<1x128xf32> to vector<8x128xf32>
    %10 = arith.mulf %8, %9 : vector<8x128xf32>
    %cst_8 = arith.constant dense<0.000000e+00> : vector<8xf32>
    %11 = vector.multi_reduction <add>, %10, %cst_8 [1] : vector<8x128xf32> to vector<8xf32>
    %12 = vector.shape_cast %11 : vector<8xf32> to vector<8x1xf32>
    %c1 = arith.constant 1 : index
    %c0_9 = arith.constant 0 : index
    %c0_10 = arith.constant 0 : index
    %13 = vector.load %arg1[%c1, %c0_9, %c0_10] : memref<3x8x128xbf16, #tpu.memory_space<vmem>>, vector<1x8x128xbf16>
    %14 = vector.shape_cast %13 : vector<1x8x128xbf16> to vector<8x128xbf16>
    %cst_11 = arith.constant dense<0.000000e+00> : vector<8x128xf32>
    %15 = tpu.matmul %14, %0, %cst_11 {dimension_numbers = #tpu.dot_dimension_numbers<[1], [0], [0], [1], [0, 0, 1, 1], [], []>} : vector<8x128xbf16>, vector<128x128xbf16>, vector<8x128xf32> -> vector<8x128xf32>
    %16 = vector.broadcast %1 : vector<1x128xf32> to vector<8x128xf32>
    %17 = arith.addf %15, %16 : vector<8x128xf32>
    %18 = math.tanh %17 : vector<8x128xf32>
    %19 = vector.broadcast %2 : vector<1x128xf32> to vector<8x128xf32>
    %20 = arith.mulf %18, %19 : vector<8x128xf32>
    %cst_12 = arith.constant dense<0.000000e+00> : vector<8xf32>
    %21 = vector.multi_reduction <add>, %20, %cst_12 [1] : vector<8x128xf32> to vector<8xf32>
    %22 = vector.shape_cast %21 : vector<8xf32> to vector<8x1xf32>
    %c2 = arith.constant 2 : index
    %c0_13 = arith.constant 0 : index
    %c0_14 = arith.constant 0 : index
    %23 = vector.load %arg1[%c2, %c0_13, %c0_14] : memref<3x8x128xbf16, #tpu.memory_space<vmem>>, vector<1x8x128xbf16>
    %24 = vector.shape_cast %23 : vector<1x8x128xbf16> to vector<8x128xbf16>
    %cst_15 = arith.constant dense<0.000000e+00> : vector<8x128xf32>
    %25 = tpu.matmul %24, %0, %cst_15 {dimension_numbers = #tpu.dot_dimension_numbers<[1], [0], [0], [1], [0, 0, 1, 1], [], []>} : vector<8x128xbf16>, vector<128x128xbf16>, vector<8x128xf32> -> vector<8x128xf32>
    %26 = vector.broadcast %1 : vector<1x128xf32> to vector<8x128xf32>
    %27 = arith.addf %25, %26 : vector<8x128xf32>
    %28 = math.tanh %27 : vector<8x128xf32>
    %29 = vector.broadcast %2 : vector<1x128xf32> to vector<8x128xf32>
    %30 = arith.mulf %28, %29 : vector<8x128xf32>
    %cst_16 = arith.constant dense<0.000000e+00> : vector<8xf32>
    %31 = vector.multi_reduction <add>, %30, %cst_16 [1] : vector<8x128xf32> to vector<8xf32>
    %32 = vector.shape_cast %31 : vector<8xf32> to vector<8x1xf32>
    %33 = arith.maximumf %12, %22 : vector<8x1xf32>
    %34 = arith.maximumf %33, %32 : vector<8x1xf32>
    %35 = arith.subf %12, %34 : vector<8x1xf32>
    %36 = math.exp %35 : vector<8x1xf32>
    %37 = arith.subf %22, %34 : vector<8x1xf32>
    %38 = math.exp %37 : vector<8x1xf32>
    %39 = arith.subf %32, %34 : vector<8x1xf32>
    %40 = math.exp %39 : vector<8x1xf32>
    %41 = arith.addf %36, %38 : vector<8x1xf32>
    %42 = arith.addf %41, %40 : vector<8x1xf32>
    %43 = tpu.reciprocal %42 {approx = true} : vector<8x1xf32> -> vector<8x1xf32>
    %cst_17 = arith.constant 0.000000e+00 : f32
    %44 = vector.broadcast %cst_17 : f32 to vector<8x128xf32>
    %45 = arith.mulf %36, %43 : vector<8x1xf32>
    %46 = arith.extf %4 : vector<8x128xbf16> to vector<8x128xf32>
    %47 = vector.broadcast %45 : vector<8x1xf32> to vector<8x128xf32>
    %48 = arith.mulf %47, %46 : vector<8x128xf32>
    %49 = arith.addf %44, %48 : vector<8x128xf32>
    %50 = arith.mulf %38, %43 : vector<8x1xf32>
    %51 = arith.extf %14 : vector<8x128xbf16> to vector<8x128xf32>
    %52 = vector.broadcast %50 : vector<8x1xf32> to vector<8x128xf32>
    %53 = arith.mulf %52, %51 : vector<8x128xf32>
    %54 = arith.addf %49, %53 : vector<8x128xf32>
    %55 = arith.mulf %40, %43 : vector<8x1xf32>
    %56 = arith.extf %24 : vector<8x128xbf16> to vector<8x128xf32>
    %57 = vector.broadcast %55 : vector<8x1xf32> to vector<8x128xf32>
    %58 = arith.mulf %57, %56 : vector<8x128xf32>
    %59 = arith.addf %54, %58 : vector<8x128xf32>
    %60 = arith.truncf %59 : vector<8x128xf32> to vector<8x128xbf16>
    %c0_18 = arith.constant 0 : index
    %c0_19 = arith.constant 0 : index
    %61 = vector.load %arg5[%c0_18, %c0_19] : memref<128x128xbf16, #tpu.memory_space<vmem>>, vector<128x128xbf16>
    %cst_20 = arith.constant dense<0.000000e+00> : vector<8x128xf32>
    %62 = tpu.matmul %60, %61, %cst_20 {dimension_numbers = #tpu.dot_dimension_numbers<[1], [0], [0], [1], [0, 0, 1, 1], [], []>} : vector<8x128xbf16>, vector<128x128xbf16>, vector<8x128xf32> -> vector<8x128xf32>
    %c0_21 = arith.constant 0 : index
    %c0_22 = arith.constant 0 : index
    %63 = vector.load %arg6[%c0_21, %c0_22] : memref<1x128xf32, #tpu.memory_space<vmem>>, vector<1x128xf32>
    %64 = vector.broadcast %63 : vector<1x128xf32> to vector<8x128xf32>
    %65 = arith.addf %62, %64 : vector<8x128xf32>
    %c0_23 = arith.constant 0 : index
    %c0_24 = arith.constant 0 : index
    %66 = vector.load %arg7[%c0_23, %c0_24] : memref<8x128xf32, #tpu.memory_space<vmem>>, vector<8x128xf32>
    tpu.vector_store %arg7[%c0_23, %c0_24], %65 {strides = array<i32>} : memref<8x128xf32, #tpu.memory_space<vmem>>, vector<8x128xf32>,
    return
  }
  func.func @transform_0(%arg0: i32) -> (i32, i32, i32) {
    %c0_i32 = arith.constant 0 : i32
    %c0_i32_0 = arith.constant 0 : i32
    %c0_i32_1 = arith.constant 0 : i32
    return %c0_i32, %arg0, %c0_i32_0 : i32, i32, i32
  }
  func.func @transform_1(%arg0: i32) -> (i32, i32) {
    %c0_i32 = arith.constant 0 : i32
    %c0_i32_0 = arith.constant 0 : i32
    %c0_i32_1 = arith.constant 0 : i32
    return %c0_i32, %c0_i32_0 : i32, i32
  }
  func.func @transform_2(%arg0: i32) -> (i32, i32) {
    %c0_i32 = arith.constant 0 : i32
    %c0_i32_0 = arith.constant 0 : i32
    %c0_i32_1 = arith.constant 0 : i32
    return %c0_i32, %c0_i32_0 : i32, i32
  }
  func.func @transform_3(%arg0: i32) -> (i32, i32) {
    %c0_i32 = arith.constant 0 : i32
    %c0_i32_0 = arith.constant 0 : i32
    %c0_i32_1 = arith.constant 0 : i32
    return %c0_i32, %c0_i32_0 : i32, i32
  }
  func.func @transform_4(%arg0: i32) -> (i32, i32) {
    %c0_i32 = arith.constant 0 : i32
    %c0_i32_0 = arith.constant 0 : i32
    %c0_i32_1 = arith.constant 0 : i32
    return %c0_i32, %c0_i32_0 : i32, i32
  }
  func.func @transform_5(%arg0: i32) -> (i32, i32) {
    %c0_i32 = arith.constant 0 : i32
    %c0_i32_0 = arith.constant 0 : i32
    %c0_i32_1 = arith.constant 0 : i32
    return %c0_i32, %c0_i32_0 : i32, i32
  }
  func.func @transform_6(%arg0: i32) -> (i32, i32) {
    %c0_i32 = arith.constant 0 : i32
    %c0_i32_0 = arith.constant 0 : i32
    return %arg0, %c0_i32 : i32, i32
  }
}

</mosaic_0001>

<llo_original>
// kernel: han_sage_forward.3
$region0: #{han_sage_forward.3}
  #allocation0 [shape = 'u32[]', space=smem, size = 0x4, offset = 0x4, fixed_abs, tag = 'smem constant byte address 0x4 - core index']
  #allocation1 [shape = 'u32[144,128]{1,0:T(1,128)}', space=vmem, size = 0x12000, scoped, tag = 'internal scratch']
  %s0 = inlined_call_operand.vmem [shape: bf16[3,8,128], index: 0, kind: input, shape index: {}]
  %s1 = inlined_call_operand.vmem [shape: bf16[128,128], index: 1, kind: input, shape index: {}]
  %s2 = inlined_call_operand.vmem [shape: f32[1,128], index: 2, kind: input, shape index: {}]
  %s3 = inlined_call_operand.vmem [shape: f32[1,128], index: 3, kind: input, shape index: {}]
  %s4 = inlined_call_operand.vmem [shape: bf16[128,128], index: 4, kind: input, shape index: {}]
  %s5 = inlined_call_operand.vmem [shape: f32[1,128], index: 5, kind: input, shape index: {}]
  %s6 = inlined_call_operand.hbm [shape: f32[8,128], index: 6, kind: output, shape index: {}]
  %s7 = sld [smem:[#allocation0]]
  $region34: #{han_sage_forward.3} parent=0
    _
  %s9 = ssub.s32 1, %s7
  %s10 = scalar_select 0, %s9, %s7
  $region1: #{han_sage_forward.3} parent=0
    #allocation2 [shape = 'u8[4096]{0}', space=vmem, size = 0x1000, scoped, tag = 'output window, operand 0, single buffered']
    #allocation3 [shape = 's32[1]{0}', space=sflag, size = 0x4, scoped, tag = 'scoped memory for han_sage_forward.3']
    %11 = vsyncpa [#allocation3], 0
    // Predicated region
    $region2: #{han_sage_forward.3} parent=1 // pred_check
      _
    $region3: #{han_sage_forward.3} parent=1 // pred_check_branch
      %13 = sbr.rel (0) target = $region5
    $region4: #{han_sage_forward.3} parent=1 // pred_region
      _
    $region5: #{han_sage_forward.3} parent=1 // pred_fallthru
      _
    // Predicated region
    $region6: #{han_sage_forward.3} parent=1 // pred_check
      _
    $region7: #{han_sage_forward.3} parent=1 // pred_check_branch
      %15 = sbr.rel (0) target = $region9
    $region8: #{han_sage_forward.3} parent=1 // pred_region
      _
    $region9: #{han_sage_forward.3} parent=1 // pred_fallthru
      _
    // Predicated region
    $region10: #{han_sage_forward.3} parent=1 // pred_check
      _
    $region11: #{han_sage_forward.3} parent=1 // pred_check_branch
      %17 = sbr.rel (0) target = $region13
    $region12: #{han_sage_forward.3} parent=1 // pred_region
      _
    $region13: #{han_sage_forward.3} parent=1 // pred_fallthru
      _
    // Predicated region
    $region14: #{han_sage_forward.3} parent=1 // pred_check
      _
    $region15: #{han_sage_forward.3} parent=1 // pred_check_branch
      %19 = sbr.rel (0) target = $region17
    $region16: #{han_sage_forward.3} parent=1 // pred_region
      _
    $region17: #{han_sage_forward.3} parent=1 // pred_fallthru
      _
    // Predicated region
    $region18: #{han_sage_forward.3} parent=1 // pred_check
      _
    $region19: #{han_sage_forward.3} parent=1 // pred_check_branch
      %21 = sbr.rel (0) target = $region21
    $region20: #{han_sage_forward.3} parent=1 // pred_region
      _
    $region21: #{han_sage_forward.3} parent=1 // pred_fallthru
      _
    // Predicated region
    $region22: #{han_sage_forward.3} parent=1 // pred_check
      _
    $region23: #{han_sage_forward.3} parent=1 // pred_check_branch
      %23 = sbr.rel (0) target = $region25
    $region24: #{han_sage_forward.3} parent=1 // pred_region
      _
    $region25: #{han_sage_forward.3} parent=1 // pred_fallthru
      _
    %v25 = vld [vmem:[%s1] sm:$0xf]
    %v26 = vld [vmem:[%s1 + $0x4] sm:$0xf]
    %v27 = vld [vmem:[%s1 + $0x8] sm:$0xf]
    %v28 = vld [vmem:[%s1 + $0xc] sm:$0xf]
    %v29 = vld [vmem:[%s1 + $0x10] sm:$0xf]
    %v30 = vld [vmem:[%s1 + $0x14] sm:$0xf]
    %v31 = vld [vmem:[%s1 + $0x18] sm:$0xf]
    %v32 = vld [vmem:[%s1 + $0x1c] sm:$0xf]
    %v33 = vld [vmem:[%s1 + $0x20] sm:$0xf]
    %v34 = vld [vmem:[%s1 + $0x24] sm:$0xf]
    %v35 = vld [vmem:[%s1 + $0x28] sm:$0xf]
    %v36 = vld [vmem:[%s1 + $0x2c] sm:$0xf]
    %v37 = vld [vmem:[%s1 + $0x30] sm:$0xf]
    %v38 = vld [vmem:[%s1 + $0x34] sm:$0xf]
    %v39 = vld [vmem:[%s1 + $0x38] sm:$0xf]
    %v40 = vld [vmem:[%s1 + $0x3c] sm:$0xf]
    %v41 = vld [vmem:[%s2] sm:$0x1]
    %v42 = vld [vmem:[%s3] sm:$0x1]
    %v43 = vld [vmem:[%s0] sm:$0xf]
    %v45 = vlaneseq
    %v46 = vshrl.u32 %v45, 7
    %v47 = vsub.s32 0, %v46
    %v48 = vrot.slane %v41, %v47
    %v66 = vunpack.c.l.b16 %v25
    %v67 = vunpack.c.l.b16 %v26
    %v68 = vunpack.c.l.b16 %v27
    %v69 = vunpack.c.l.b16 %v28
    %v70 = vunpack.c.l.b16 %v29
    %v71 = vunpack.c.l.b16 %v30
    %v72 = vunpack.c.l.b16 %v31
    %v73 = vunpack.c.l.b16 %v32
    %v74 = vunpack.c.l.b16 %v33
    %v75 = vunpack.c.l.b16 %v34
    %v76 = vunpack.c.l.b16 %v35
    %v77 = vunpack.c.l.b16 %v36
    %v78 = vunpack.c.l.b16 %v37
    %v79 = vunpack.c.l.b16 %v38
    %v80 = vunpack.c.l.b16 %v39
    %v81 = vunpack.c.l.b16 %v40
    %v82 = vpack.c.b16 %v67, %v66
    %v83 = vpack.c.b16 %v69, %v68
    %v84 = vpack.c.b16 %v71, %v70
    %v85 = vpack.c.b16 %v73, %v72
    %v86 = vpack.c.b16 %v75, %v74
    %v87 = vpack.c.b16 %v77, %v76
    %v88 = vpack.c.b16 %v79, %v78
    %v89 = vpack.c.b16 %v81, %v80
    %98 = vmatprep.subr.bf16.mxu0 0
    %99 = vmatpush1.bf16.msra.mxu0 %v82
    %100 = vmatprep.subr.bf16.mxu0 0
    %101 = vmatpush1.bf16.msra.mxu0 %v83
    %102 = vmatprep.subr.bf16.mxu0 0
    %103 = vmatpush1.bf16.msra.mxu0 %v84
    %104 = vmatprep.subr.bf16.mxu0 0
    %105 = vmatpush1.bf16.msra.mxu0 %v85
    %106 = vmatprep.subr.bf16.mxu0 0
    %107 = vmatpush1.bf16.msra.mxu0 %v86
    %108 = vmatprep.subr.bf16.mxu0 0
    %109 = vmatpush1.bf16.msra.mxu0 %v87
    %110 = vmatprep.subr.bf16.mxu0 0
    %111 = vmatpush1.bf16.msra.mxu0 %v88
    %112 = vmatprep.subr.bf16.mxu0 0
    %113 = vmatpush1.bf16.msra.mxu0 %v89
    %114 = vmatprep.subr.bf16.mxu0 0
    %115 = vmatpush1.bf16.msra.mxu0 0
    %116 = vmatprep.subr.bf16.mxu0 0
    %117 = vmatpush1.bf16.msra.mxu0 0
    %118 = vmatprep.subr.bf16.mxu0 0
    %119 = vmatpush1.bf16.msra.mxu0 0
    %120 = vmatprep.subr.bf16.mxu0 0
    %121 = vmatpush1.bf16.msra.mxu0 0
    %122 = vmatprep.subr.bf16.mxu0 0
    %123 = vmatpush1.bf16.msra.mxu0 0
    %124 = vmatprep.subr.bf16.mxu0 0
    %125 = vmatpush1.bf16.msra.mxu0 0
    %126 = vmatprep.subr.bf16.mxu0 0
    %127 = vmatpush1.bf16.msra.mxu0 0
    %128 = vmatprep.subr.bf16.mxu0 0
    %129 = vmatpush1.bf16.msra.mxu0 0
    %130 = vmatprep.mubr.bf16.mxu0 0
    %131 = vmatmul.mubr.bf16.gmra.mrb[0].mxu0 %v43
    %v132 = vpop.f32.mrb[0].mxu0
    %v133 = vadd.f32 %v48, %v132
    %v134 = vpop.f32.mrb[0].mxu0
    %v135 = vpop.f32.mrb[0].mxu0
    %v136 = vpop.f32.mrb[0].mxu0
    %137 = vdwg.mxu0
    %v138 = vtanh.pop %v133
    %v140 = vlaneseq
    %v141 = vshrl.u32 %v140, 7
    %v142 = vsub.s32 0, %v141
    %v143 = vrot.slane %v42, %v142
    %v145 = vmul.f32 %v138, %v143
    %146 = vadd.xlane.f32.xlu0 %v145
    %v147 = vpop.xlane.xlu0 %146
    %s148 = scalar_lea.vmem %s0, 4
    %v149 = vld [vmem:[%s148] sm:$0xf]
    %150 = vmatprep.subr.bf16.mxu0 0
    %151 = vmatpush1.bf16.msra.mxu0 %v82
    %152 = vmatprep.subr.bf16.mxu0 0
    %153 = vmatpush1.bf16.msra.mxu0 %v83
    %154 = vmatprep.subr.bf16.mxu0 0
    %155 = vmatpush1.bf16.msra.mxu0 %v84
    %156 = vmatprep.subr.bf16.mxu0 0
    %157 = vmatpush1.bf16.msra.mxu0 %v85
    %158 = vmatprep.subr.bf16.mxu0 0
    %159 = vmatpush1.bf16.msra.mxu0 %v86
    %160 = vmatprep.subr.bf16.mxu0 0
    %161 = vmatpush1.bf16.msra.mxu0 %v87
    %162 = vmatprep.subr.bf16.mxu0 0
    %163 = vmatpush1.bf16.msra.mxu0 %v88
    %164 = vmatprep.subr.bf16.mxu0 0
    %165 = vmatpush1.bf16.msra.mxu0 %v89
    %166 = vmatprep.subr.bf16.mxu0 0
    %167 = vmatpush1.bf16.msra.mxu0 0
    %168 = vmatprep.subr.bf16.mxu0 0
    %169 = vmatpush1.bf16.msra.mxu0 0
    %170 = vmatprep.subr.bf16.mxu0 0
    %171 = vmatpush1.bf16.msra.mxu0 0
    %172 = vmatprep.subr.bf16.mxu0 0
    %173 = vmatpush1.bf16.msra.mxu0 0
    %174 = vmatprep.subr.bf16.mxu0 0
    %175 = vmatpush1.bf16.msra.mxu0 0
    %176 = vmatprep.subr.bf16.mxu0 0
    %177 = vmatpush1.bf16.msra.mxu0 0
    %178 = vmatprep.subr.bf16.mxu0 0
    %179 = vmatpush1.bf16.msra.mxu0 0
    %180 = vmatprep.subr.bf16.mxu0 0
    %181 = vmatpush1.bf16.msra.mxu0 0
    %182 = vmatprep.mubr.bf16.mxu0 0
    %183 = vmatmul.mubr.bf16.gmra.mrb[0].mxu0 %v149
    %v184 = vpop.f32.mrb[0].mxu0
    %v185 = vadd.f32 %v48, %v184
    %v186 = vpop.f32.mrb[0].mxu0
    %v187 = vpop.f32.mrb[0].mxu0
    %v188 = vpop.f32.mrb[0].mxu0
    %189 = vdwg.mxu0
    %v190 = vtanh.pop %v185
    %v191 = vmul.f32 %v190, %v143
    %192 = vadd.xlane.f32.xlu0 %v191
    %v193 = vpop.xlane.xlu0 %192
    %s194 = scalar_lea.vmem %s0, 8
    %v195 = vld [vmem:[%s194] sm:$0xf]
    %196 = vmatprep.subr.bf16.mxu0 0
    %197 = vmatpush1.bf16.msra.mxu0 %v82
    %198 = vmatprep.subr.bf16.mxu0 0
    %199 = vmatpush1.bf16.msra.mxu0 %v83
    %200 = vmatprep.subr.bf16.mxu0 0
    %201 = vmatpush1.bf16.msra.mxu0 %v84
    %202 = vmatprep.subr.bf16.mxu0 0
    %203 = vmatpush1.bf16.msra.mxu0 %v85
    %204 = vmatprep.subr.bf16.mxu0 0
    %205 = vmatpush1.bf16.msra.mxu0 %v86
    %206 = vmatprep.subr.bf16.mxu0 0
    %207 = vmatpush1.bf16.msra.mxu0 %v87
    %208 = vmatprep.subr.bf16.mxu0 0
    %209 = vmatpush1.bf16.msra.mxu0 %v88
    %210 = vmatprep.subr.bf16.mxu0 0
    %211 = vmatpush1.bf16.msra.mxu0 %v89
    %212 = vmatprep.subr.bf16.mxu0 0
    %213 = vmatpush1.bf16.msra.mxu0 0
    %214 = vmatprep.subr.bf16.mxu0 0
    %215 = vmatpush1.bf16.msra.mxu0 0
    %216 = vmatprep.subr.bf16.mxu0 0
    %217 = vmatpush1.bf16.msra.mxu0 0
    %218 = vmatprep.subr.bf16.mxu0 0
    %219 = vmatpush1.bf16.msra.mxu0 0
    %220 = vmatprep.subr.bf16.mxu0 0
    %221 = vmatpush1.bf16.msra.mxu0 0
    %222 = vmatprep.subr.bf16.mxu0 0
    %223 = vmatpush1.bf16.msra.mxu0 0
    %224 = vmatprep.subr.bf16.mxu0 0
    %225 = vmatpush1.bf16.msra.mxu0 0
    %226 = vmatprep.subr.bf16.mxu0 0
    %227 = vmatpush1.bf16.msra.mxu0 0
    %228 = vmatprep.mubr.bf16.mxu0 0
    %229 = vmatmul.mubr.bf16.gmra.mrb[0].mxu0 %v195
    %v230 = vpop.f32.mrb[0].mxu0
    %v231 = vadd.f32 %v48, %v230
    %v232 = vpop.f32.mrb[0].mxu0
    %v233 = vpop.f32.mrb[0].mxu0
    %v234 = vpop.f32.mrb[0].mxu0
    %235 = vdwg.mxu0
    %v236 = vtanh.pop %v231
    %v237 = vmul.f32 %v236, %v143
    %238 = vadd.xlane.f32.xlu0 %v237
    %v239 = vpop.xlane.xlu0 %238
    %v240 = vmax.f32 %v147, %v193
    %v241 = vmax.f32 %v240, %v239
    %v242 = vsub.f32 %v147, %v241
    %v243 = vmul.f32 %v242, 1.442695
    %v244 = vpow.pop %v243
    %v245 = vsub.f32 %v193, %v241
    %v246 = vmul.f32 %v245, 1.442695
    %v247 = vpow.pop %v246
    %v248 = vsub.f32 %v239, %v241
    %v249 = vmul.f32 %v248, 1.442695
    %v250 = vpow.pop %v249
    %v251 = vadd.f32 %v244, %v247
    %v252 = vadd.f32 %v251, %v250
    %v253 = vrcp.pop %v252
    %v254 = vmul.f32 %v244, %v253
    %v255 = vunpack.c.l.bf16 %v43
    %v256 = vmul.f32 %v254, %v255
    %v257 = vadd.f32 %v256, 0.0
    %v258 = vmul.f32 %v247, %v253
    %v259 = vunpack.c.l.bf16 %v149
    %v260 = vmul.f32 %v258, %v259
    %v261 = vadd.f32 %v257, %v260
    %v262 = vmul.f32 %v250, %v253
    %v263 = vunpack.c.l.bf16 %v195
    %v264 = vmul.f32 %v262, %v263
    %v265 = vadd.f32 %v261, %v264
    %v266 = vpack.c.bf16 %v265, %v265
    %v267 = vld [vmem:[%s4] sm:$0xf]
    %v268 = vld [vmem:[%s4 + $0x4] sm:$0xf]
    %v269 = vld [vmem:[%s4 + $0x8] sm:$0xf]
    %v270 = vld [vmem:[%s4 + $0xc] sm:$0xf]
    %v271 = vld [vmem:[%s4 + $0x10] sm:$0xf]
    %v272 = vld [vmem:[%s4 + $0x14] sm:$0xf]
    %v273 = vld [vmem:[%s4 + $0x18] sm:$0xf]
    %v274 = vld [vmem:[%s4 + $0x1c] sm:$0xf]
    %v275 = vld [vmem:[%s4 + $0x20] sm:$0xf]
    %v276 = vld [vmem:[%s4 + $0x24] sm:$0xf]
    %v277 = vld [vmem:[%s4 + $0x28] sm:$0xf]
    %v278 = vld [vmem:[%s4 + $0x2c] sm:$0xf]
    %v279 = vld [vmem:[%s4 + $0x30] sm:$0xf]
    %v280 = vld [vmem:[%s4 + $0x34] sm:$0xf]
    %v281 = vld [vmem:[%s4 + $0x38] sm:$0xf]
    %v282 = vld [vmem:[%s4 + $0x3c] sm:$0xf]
    %v283 = vld [vmem:[%s5] sm:$0x1]
    %v285 = vlaneseq
    %v286 = vshrl.u32 %v285, 7
    %v287 = vsub.s32 0, %v286
    %v288 = vrot.slane %v283, %v287
    %v306 = vunpack.c.l.b16 %v267
    %v307 = vunpack.c.l.b16 %v268
    %v308 = vunpack.c.l.b16 %v269
    %v309 = vunpack.c.l.b16 %v270
    %v310 = vunpack.c.l.b16 %v271
    %v311 = vunpack.c.l.b16 %v272
    %v312 = vunpack.c.l.b16 %v273
    %v313 = vunpack.c.l.b16 %v274
    %v314 = vunpack.c.l.b16 %v275
    %v315 = vunpack.c.l.b16 %v276
    %v316 = vunpack.c.l.b16 %v277
    %v317 = vunpack.c.l.b16 %v278
    %v318 = vunpack.c.l.b16 %v279
    %v319 = vunpack.c.l.b16 %v280
    %v320 = vunpack.c.l.b16 %v281
    %v321 = vunpack.c.l.b16 %v282
    %v322 = vpack.c.b16 %v307, %v306
    %v323 = vpack.c.b16 %v309, %v308
    %v324 = vpack.c.b16 %v311, %v310
    %v325 = vpack.c.b16 %v313, %v312
    %v326 = vpack.c.b16 %v315, %v314
    %v327 = vpack.c.b16 %v317, %v316
    %v328 = vpack.c.b16 %v319, %v318
    %v329 = vpack.c.b16 %v321, %v320
    %338 = vmatprep.subr.bf16.mxu0 0
    %339 = vmatpush1.bf16.msra.mxu0 %v322
    %340 = vmatprep.subr.bf16.mxu0 0
    %341 = vmatpush1.bf16.msra.mxu0 %v323
    %342 = vmatprep.subr.bf16.mxu0 0
    %343 = vmatpush1.bf16.msra.mxu0 %v324
    %344 = vmatprep.subr.bf16.mxu0 0
    %345 = vmatpush1.bf16.msra.mxu0 %v325
    %346 = vmatprep.subr.bf16.mxu0 0
    %347 = vmatpush1.bf16.msra.mxu0 %v326
    %348 = vmatprep.subr.bf16.mxu0 0
    %349 = vmatpush1.bf16.msra.mxu0 %v327
    %350 = vmatprep.subr.bf16.mxu0 0
    %351 = vmatpush1.bf16.msra.mxu0 %v328
    %352 = vmatprep.subr.bf16.mxu0 0
    %353 = vmatpush1.bf16.msra.mxu0 %v329
    %354 = vmatprep.subr.bf16.mxu0 0
    %355 = vmatpush1.bf16.msra.mxu0 0
    %356 = vmatprep.subr.bf16.mxu0 0
    %357 = vmatpush1.bf16.msra.mxu0 0
    %358 = vmatprep.subr.bf16.mxu0 0
    %359 = vmatpush1.bf16.msra.mxu0 0
    %360 = vmatprep.subr.bf16.mxu0 0
    %361 = vmatpush1.bf16.msra.mxu0 0
    %362 = vmatprep.subr.bf16.mxu0 0
    %363 = vmatpush1.bf16.msra.mxu0 0
    %364 = vmatprep.subr.bf16.mxu0 0
    %365 = vmatpush1.bf16.msra.mxu0 0
    %366 = vmatprep.subr.bf16.mxu0 0
    %367 = vmatpush1.bf16.msra.mxu0 0
    %368 = vmatprep.subr.bf16.mxu0 0
    %369 = vmatpush1.bf16.msra.mxu0 0
    %370 = vmatprep.mubr.bf16.mxu0 0
    %371 = vmatmul.mubr.bf16.gmra.mrb[0].mxu0 %v266
    %v372 = vpop.f32.mrb[0].mxu0
    %v373 = vadd.f32 %v288, %v372
    %v374 = vpop.f32.mrb[0].mxu0
    %v375 = vpop.f32.mrb[0].mxu0
    %v376 = vpop.f32.mrb[0].mxu0
    %377 = vdwg.mxu0
    %378 = vst [vmem:[#allocation2] sm:$0xff] %v373
    // Predicated region
    $region26: #{han_sage_forward.3} parent=1 // pred_check
      _
    $region27: #{han_sage_forward.3} parent=1 // pred_check_branch
      %380 = sbr.rel (0) target = $region29
    $region28: #{han_sage_forward.3} parent=1 // pred_region
      %s382 = ssub.s32 128, 128
      %383 = vsyncadd [#allocation3], %s382
      %s385 = sshll.u32 [#allocation2], 4
      %s386 = int_to_ptr.vmem [resolvable:$true] %s385
      %388 = dma.vmem_to_hbm [thread:$0]  %s386, 128, %s6, [#allocation3]
    $region29: #{han_sage_forward.3} parent=1 // pred_fallthru
      _
    // Predicated region
    $region30: #{han_sage_forward.3} parent=1 // pred_check
      _
    $region31: #{han_sage_forward.3} parent=1 // pred_check_branch
      %390 = sbr.rel (0) target = $region33
    $region32: #{han_sage_forward.3} parent=1 // pred_region
      %391 = dma.done [#allocation3], 128
    $region33: #{han_sage_forward.3} parent=1 // pred_fallthru
      _
    %392 = vsyncpa [#allocation3], 1

// kernel: han_sage_forward.2
$region0: #{han_sage_forward.2}
  #allocation0 [shape = 'u32[]', space=smem, size = 0x4, offset = 0x4, fixed_abs, tag = 'smem constant byte address 0x4 - core index']
  #allocation1 [shape = 'u32[144,128]{1,0:T(1,128)}', space=vmem, size = 0x12000, scoped, tag = 'internal scratch']
  #allocation2 [shape = 'bf16[512,128]{1,0:T(16,128)(2,1)}', space=vmem, size = 0x20000, scoped, tag = 'scratch operand']
  #allocation3 [shape = 'bf16[512,128]{1,0:T(16,128)(2,1)}', space=vmem, size = 0x20000, scoped, tag = 'scratch operand']
  %s0 = inlined_call_operand.vmem [shape: s32[8,1], index: 0, kind: input, shape index: {}]
  %s1 = inlined_call_operand.hbm [shape: bf16[3,512,512], index: 1, kind: input, shape index: {}]
  %s2 = inlined_call_operand.hbm [shape: bf16[512,128], index: 2, kind: input, shape index: {}]
  %s3 = inlined_call_operand.hbm [shape: bf16[3,2,128,128], index: 3, kind: input, shape index: {}]
  %s4 = inlined_call_operand.vmem [shape: bf16[3,8,128], index: 4, kind: output, shape index: {}]
  %s5 = sld [smem:[#allocation0]]
  $region75: #{han_sage_forward.2} parent=0
    _
  %s7 = ssub.s32 1, %s5
  %s8 = scalar_select 0, %s7, %s5
  $region1: #{han_sage_forward.2} parent=0
    #allocation4 [shape = 'u8[1048576]{0}', space=vmem, size = 0x100000, scoped, tag = 'input window, operand 1']
    #allocation5 [shape = 's32[2]{0}', space=sflag, size = 0x8, scoped, tag = 'scoped memory for han_sage_forward.2']
    #allocation6 [shape = 'u8[131072]{0}', space=vmem, size = 0x20000, scoped, tag = 'input window, operand 2, single buffered']
    #allocation7 [shape = 's32[1]{0}', space=sflag, size = 0x4, scoped, tag = 'scoped memory for han_sage_forward.2']
    #allocation8 [shape = 'u8[131072]{0}', space=vmem, size = 0x20000, scoped, tag = 'input window, operand 3']
    %9 = vsyncpa [#allocation5], 0
    %s10 = scalar_lea.sflag [#allocation5], 1
    %11 = vsyncpa %s10, 0
    %12 = vsyncpa [#allocation7], 0
    loop: start=0, step=1, limit=5
    $region2: #{han_sage_forward.2} parent=1 // loop_pre_header
      _
    $region3: #{han_sage_forward.2} parent=1 // loop_header
      %s14 = sphi 0, %s18
      %p15 = scmp.ge.s32.totalorder %s14, 5
      %s22 = sphi 0, %s22
      %s24 = sphi 0, %s22
      %s25 = sphi 0, %s24
      %s39 = sphi 0, %s25
      %s45 = sphi 0, %s47
      %s48 = sphi 0, %s45
      %s49 = sphi 0, %s48
      %s65 = sphi 0, %s49
      %s69 = sphi 0, %s69
      %s71 = sphi 0, %s69
      %s72 = sphi 0, %s71
      %s86 = sphi 0, %s72
      %s92 = sphi 0, %s94
      %s95 = sphi 0, %s92
      %s96 = sphi 0, %s95
      %s112 = sphi 0, %s96
      %s118 = sphi 0, %s120
      %s121 = sphi 0, %s118
      %s122 = sphi 0, %s121
      %s138 = sphi 0, %s122
    $region4: #{han_sage_forward.2} parent=1 // loop_header_branch
      %17 = sbr.rel (%p15) target = $region8
    $region5: #{han_sage_forward.2} parent=1 // loop_body
      %s19 = ssub.s32 %s14, 1
      %s20 = ssub.s32 %s14, 2
      %s21 = sadd.s32 %s14, 1
      %s23 = sadd.s32 %s22, 1
      %p26 = scmp.eq.s32.totalorder %s14, 2
      %p27 = scmp.ne.s32.totalorder %s22, %s24
      %p28 = scmp.eq.s32.totalorder %s14, 0
      %p29 = por %p27, %p28
      %p30 = scmp.ne.s32.totalorder %s22, %s24
      %p31 = scmp.eq.s32.totalorder %s19, 2
      %p32 = por %p30, %p31
      %p33 = scmp.ne.s32.totalorder %s24, %s25
      %p34 = scmp.eq.s32.totalorder %s19, 0
      %p35 = por %p33, %p34
      %p36 = scmp.ne.s32.totalorder %s24, %s25
      %p37 = scmp.eq.s32.totalorder %s20, 2
      %p38 = por %p36, %p37
      %p40 = scmp.ne.s32.totalorder %s25, %s39
      %p41 = scmp.eq.s32.totalorder %s20, 0
      %p42 = por %p40, %p41
      %s43 = ssub.s32 %s14, %s21
      %p44 = scmp.eq.s32.totalorder %s43, 0
      %s46 = sadd.s32 %s45, 1
      %s47 = scalar_select %p44, %s45, %s46
      %p50 = pneg %p44
      %p51 = scmp.eq.s32.totalorder %s14, 2
      %p52 = por %p50, %p51
      %p53 = scmp.ne.s32.totalorder %s45, %s48
      %p54 = scmp.eq.s32.totalorder %s14, 0
      %p55 = por %p53, %p54
      %p56 = scmp.ne.s32.totalorder %s45, %s48
      %p57 = scmp.eq.s32.totalorder %s19, 2
      %p58 = por %p56, %p57
      %p59 = scmp.ne.s32.totalorder %s48, %s49
      %p60 = scmp.eq.s32.totalorder %s19, 0
      %p61 = por %p59, %p60
      %p62 = scmp.ne.s32.totalorder %s48, %s49
      %p63 = scmp.eq.s32.totalorder %s20, 2
      %p64 = por %p62, %p63
      %p66 = scmp.ne.s32.totalorder %s49, %s65
      %p67 = scmp.eq.s32.totalorder %s20, 0
      %p68 = por %p66, %p67
      %s70 = sadd.s32 %s69, 1
      %p73 = scmp.eq.s32.totalorder %s14, 2
      %p74 = scmp.ne.s32.totalorder %s69, %s71
      %p75 = scmp.eq.s32.totalorder %s14, 0
      %p76 = por %p74, %p75
      %p77 = scmp.ne.s32.totalorder %s69, %s71
      %p78 = scmp.eq.s32.totalorder %s19, 2
      %p79 = por %p77, %p78
      %p80 = scmp.ne.s32.totalorder %s71, %s72
      %p81 = scmp.eq.s32.totalorder %s19, 0
      %p82 = por %p80, %p81
      %p83 = scmp.ne.s32.totalorder %s71, %s72
      %p84 = scmp.eq.s32.totalorder %s20, 2
      %p85 = por %p83, %p84
      %p87 = scmp.ne.s32.totalorder %s72, %s86
      %p88 = scmp.eq.s32.totalorder %s20, 0
      %p89 = por %p87, %p88
      %s90 = ssub.s32 %s14, %s21
      %p91 = scmp.eq.s32.totalorder %s90, 0
      %s93 = sadd.s32 %s92, 1
      %s94 = scalar_select %p91, %s92, %s93
      %p97 = pneg %p91
      %p98 = scmp.eq.s32.totalorder %s14, 2
      %p99 = por %p97, %p98
      %p100 = scmp.ne.s32.totalorder %s92, %s95
      %p101 = scmp.eq.s32.totalorder %s14, 0
      %p102 = por %p100, %p101
      %p103 = scmp.ne.s32.totalorder %s92, %s95
      %p104 = scmp.eq.s32.totalorder %s19, 2
      %p105 = por %p103, %p104
      %p106 = scmp.ne.s32.totalorder %s95, %s96
      %p107 = scmp.eq.s32.totalorder %s19, 0
      %p108 = por %p106, %p107
      %p109 = scmp.ne.s32.totalorder %s95, %s96
      %p110 = scmp.eq.s32.totalorder %s20, 2
      %p111 = por %p109, %p110
      %p113 = scmp.ne.s32.totalorder %s96, %s112
      %p114 = scmp.eq.s32.totalorder %s20, 0
      %p115 = por %p113, %p114
      %s116 = ssub.s32 %s14, %s21
      %p117 = scmp.eq.s32.totalorder %s116, 0
      %s119 = sadd.s32 %s118, 1
      %s120 = scalar_select %p117, %s118, %s119
      %p123 = pneg %p117
      %p124 = scmp.eq.s32.totalorder %s14, 2
      %p125 = por %p123, %p124
      %p126 = scmp.ne.s32.totalorder %s118, %s121
      %p127 = scmp.eq.s32.totalorder %s14, 0
      %p128 = por %p126, %p127
      %p129 = scmp.ne.s32.totalorder %s118, %s121
      %p130 = scmp.eq.s32.totalorder %s19, 2
      %p131 = por %p129, %p130
      %p132 = scmp.ne.s32.totalorder %s121, %s122
      %p133 = scmp.eq.s32.totalorder %s19, 0
      %p134 = por %p132, %p133
      %p135 = scmp.ne.s32.totalorder %s121, %s122
      %p136 = scmp.eq.s32.totalorder %s20, 2
      %p137 = por %p135, %p136
      %p139 = scmp.ne.s32.totalorder %s122, %s138
      %p140 = scmp.eq.s32.totalorder %s20, 0
      %p141 = por %p139, %p140
      %p142 = scmp.le.s32.totalorder 1, %s14
      %p143 = scmp.lt.s32.totalorder %s14, 4
      %p144 = pnand %p142, %p143
      %p145 = pneg %p144
      // Predicated region
      $region9: #{han_sage_forward.2} parent=5 // pred_check
        _
      $region10: #{han_sage_forward.2} parent=5 // pred_check_branch
        %147 = sbr.rel (%p144) target = $region12
      $region11: #{han_sage_forward.2} parent=5 // pred_region
        %s148 = ssub.s32 %s14, 1
        // Predicated region
        $region13: #{han_sage_forward.2} parent=11 // pred_check
          %p149 = pneg %p35
        $region14: #{han_sage_forward.2} parent=11 // pred_check_branch
          %151 = sbr.rel (%p149) target = $region16
        $region15: #{han_sage_forward.2} parent=11 // pred_region
          _
        $region16: #{han_sage_forward.2} parent=11 // pred_fallthru
          _
        // Predicated region
        $region17: #{han_sage_forward.2} parent=11 // pred_check
          %p152 = pneg %p82
        $region18: #{han_sage_forward.2} parent=11 // pred_check_branch
          %154 = sbr.rel (%p152) target = $region20
        $region19: #{han_sage_forward.2} parent=11 // pred_region
          %s156 = ssub.s32 4096, 4096
          %157 = vsyncadd [#allocation7], %s156
          %s158 = sshll.u32 [#allocation6], 4
          %s159 = int_to_ptr.vmem [resolvable:$true] %s158
          %164 = dma.hbm_to_vmem [thread:$0]  %s2, 4096, %s159, [#allocation7], 64, 64, 4
        $region20: #{han_sage_forward.2} parent=11 // pred_fallthru
          _
      $region12: #{han_sage_forward.2} parent=5 // pred_fallthru
        _
      %p165 = scmp.lt.s32.totalorder %s14, 3
      // Predicated region
      $region21: #{han_sage_forward.2} parent=5 // pred_check
        %p166 = pneg %p165
      $region22: #{han_sage_forward.2} parent=5 // pred_check_branch
        %168 = sbr.rel (%p166) target = $region24
      $region23: #{han_sage_forward.2} parent=5 // pred_region
        // Predicated region
        $region25: #{han_sage_forward.2} parent=23 // pred_check
          %p169 = pneg %p55
        $region26: #{han_sage_forward.2} parent=23 // pred_check_branch
          %171 = sbr.rel (%p169) target = $region28
        $region27: #{han_sage_forward.2} parent=23 // pred_region
          %s172 = sand.u32 %s14, 1
          %s173 = scalar_lea.sflag [#allocation5], %s172
          %s174 = sand.u32 %s45, 1
          %s175 = smul.addr %s174, 1024
          %s176 = scalar_lea.vmem [#allocation4], %s175
          %s178 = ssub.s32 16384, 16384
          %179 = vsyncadd %s173, %s178
          %s180 = smul.addr %s14, 256
          %s181 = smul.addr %s180, 64
          %s182 = scalar_lea.hbm %s1, %s181
          %s183 = sshll.u32 %s176, 4
          %s184 = int_to_ptr.vmem [resolvable:$true] %s183
          %189 = dma.hbm_to_vmem [thread:$0]  %s182, 16384, %s184, %s173, 256, 256, 16
        $region28: #{han_sage_forward.2} parent=23 // pred_fallthru
          _
        // Predicated region
        $region29: #{han_sage_forward.2} parent=23 // pred_check
          %p190 = pneg %p102
        $region30: #{han_sage_forward.2} parent=23 // pred_check_branch
          %192 = sbr.rel (%p190) target = $region32
        $region31: #{han_sage_forward.2} parent=23 // pred_region
          %s193 = sand.u32 %s14, 1
          %s194 = scalar_lea.sflag [#allocation5], %s193
          %s195 = sand.u32 %s92, 1
          %s196 = smul.addr %s195, 128
          %s197 = scalar_lea.vmem [#allocation8], %s196
          %s199 = ssub.s32 2048, 2048
          %200 = vsyncadd %s194, %s199
          %s201 = smul.addr %s14, 32
          %s202 = smul.addr %s201, 64
          %s203 = scalar_lea.hbm %s3, %s202
          %s204 = sshll.u32 %s197, 4
          %s205 = int_to_ptr.vmem [resolvable:$true] %s204
          %210 = dma.hbm_to_vmem [thread:$0]  %s203, 2048, %s205, %s194, 64, 64, 4
        $region32: #{han_sage_forward.2} parent=23 // pred_fallthru
          _
      $region24: #{han_sage_forward.2} parent=5 // pred_fallthru
        _
      %p211 = scmp.le.s32.totalorder 1, %s14
      %p212 = scmp.lt.s32.totalorder %s14, 4
      %p213 = pnand %p211, %p212
      %p214 = pneg %p213
      // Predicated region
      $region33: #{han_sage_forward.2} parent=5 // pred_check
        _
      $region34: #{han_sage_forward.2} parent=5 // pred_check_branch
        %216 = sbr.rel (%p213) target = $region36
      $region35: #{han_sage_forward.2} parent=5 // pred_region
        %s217 = ssub.s32 %s14, 1
        %s218 = sand.u32 %s19, 1
        %s219 = scalar_lea.sflag [#allocation5], %s218
        %s220 = sand.u32 %s48, 1
        %s221 = smul.addr %s220, 1024
        %s222 = scalar_lea.vmem [#allocation4], %s221
        // Predicated region
        $region37: #{han_sage_forward.2} parent=35 // pred_check
          %p223 = pneg %p61
        $region38: #{han_sage_forward.2} parent=35 // pred_check_branch
          %225 = sbr.rel (%p223) target = $region40
        $region39: #{han_sage_forward.2} parent=35 // pred_region
          %226 = dma.done %s219, 16384
        $region40: #{han_sage_forward.2} parent=35 // pred_fallthru
          _
        // Predicated region
        $region41: #{han_sage_forward.2} parent=35 // pred_check
          %p227 = pneg %p82
        $region42: #{han_sage_forward.2} parent=35 // pred_check_branch
          %229 = sbr.rel (%p227) target = $region44
        $region43: #{han_sage_forward.2} parent=35 // pred_region
          %230 = dma.done [#allocation7], 4096
        $region44: #{han_sage_forward.2} parent=35 // pred_fallthru
          _
        %s231 = sand.u32 %s19, 1
        %s232 = scalar_lea.sflag [#allocation5], %s231
        %s233 = sand.u32 %s95, 1
        %s234 = smul.addr %s233, 128
        %s235 = scalar_lea.vmem [#allocation8], %s234
        // Predicated region
        $region45: #{han_sage_forward.2} parent=35 // pred_check
          %p236 = pneg %p108
        $region46: #{han_sage_forward.2} parent=35 // pred_check_branch
          %238 = sbr.rel (%p236) target = $region48
        $region47: #{han_sage_forward.2} parent=35 // pred_region
          %239 = dma.done %s232, 2048
        $region48: #{han_sage_forward.2} parent=35 // pred_fallthru
          _
        %p240 = pneg %p35
        %p241 = pneg %p32
        %s242 = sand.u32 %s19, 1
        %s243 = scalar_lea.sflag [#allocation5], %s242
        %s244 = sand.u32 %s48, 1
        %s245 = smul.addr %s244, 1024
        %s246 = scalar_lea.vmem [#allocation4], %s245
        %p247 = pneg %p61
        %p248 = pneg %p58
        %p249 = pneg %p82
        %p250 = pneg %p79
        %s251 = sand.u32 %s19, 1
        %s252 = scalar_lea.sflag [#allocation5], %s251
        %s253 = sand.u32 %s95, 1
        %s254 = smul.addr %s253, 128
        %s255 = scalar_lea.vmem [#allocation8], %s254
        %p256 = pneg %p108
        %p257 = pneg %p105
        %p258 = pneg %p134
        %p259 = pneg %p131
        %p260 = scmp.lt.s32.totalorder %s19, 2
        %s261 = scalar_select %p260, %s19, 2
        %s262 = smul.addr %s261, 4
        %s263 = scalar_lea.vmem %s4, %s262
        %p264 = scmp.lt.s32.totalorder %s19, 2
        %s265 = scalar_select %p264, %s19, 2
        %s266 = smul.addr %s265, 4
        %s267 = scalar_lea.vmem %s4, %s266
        %v269 = vld [vmem:[%s235] sm:$0xf]
        %v270 = vld [vmem:[%s235 + $0x4] sm:$0xf]
        %v271 = vld [vmem:[%s235 + $0x8] sm:$0xf]
        %v272 = vld [vmem:[%s235 + $0xc] sm:$0xf]
        %v273 = vld [vmem:[%s235 + $0x10] sm:$0xf]
        %v274 = vld [vmem:[%s235 + $0x14] sm:$0xf]
        %v275 = vld [vmem:[%s235 + $0x18] sm:$0xf]
        %v276 = vld [vmem:[%s235 + $0x1c] sm:$0xf]
        %v277 = vld [vmem:[%s235 + $0x20] sm:$0xf]
        %v278 = vld [vmem:[%s235 + $0x24] sm:$0xf]
        %v279 = vld [vmem:[%s235 + $0x28] sm:$0xf]
        %v280 = vld [vmem:[%s235 + $0x2c] sm:$0xf]
        %v281 = vld [vmem:[%s235 + $0x30] sm:$0xf]
        %v282 = vld [vmem:[%s235 + $0x34] sm:$0xf]
        %v283 = vld [vmem:[%s235 + $0x38] sm:$0xf]
        %v284 = vld [vmem:[%s235 + $0x3c] sm:$0xf]
        loop: start=0, step=1, limit=2
        $region49: #{han_sage_forward.2} parent=35 // loop_pre_header
          _
        $region50: #{han_sage_forward.2} parent=35 // loop_header
          %s286 = sphi 0, %s290
          %p287 = scmp.ge.s32.totalorder %s286, 2
        $region51: #{han_sage_forward.2} parent=35 // loop_header_branch
          %289 = sbr.rel (%p287) target = $region55
        $region52: #{han_sage_forward.2} parent=35 // loop_body
          %s291 = smul.u32 %s286, 256
          %s292 = sshra.s32 %s291, 3
          %s293 = sand.u32 %s291, 7
          %s294 = smul.u32 %s292, 4
          %s295 = smul.addr %s294, 4
          %s296 = scalar_lea.vmem %s222, %s295 [#allocation4]
          %v297 = vld [vmem:[%s296] sm:$0xff]
          %v298 = vld [vmem:[%s296 + $0x8] sm:$0xff]
          %v299 = vld [vmem:[%s296 + $0x10] sm:$0xff]
          %v300 = vld [vmem:[%s296 + $0x18] sm:$0xff]
          %v301 = vld [vmem:[%s296 + $0x20] sm:$0xff]
          %v302 = vld [vmem:[%s296 + $0x28] sm:$0xff]
          %v303 = vld [vmem:[%s296 + $0x30] sm:$0xff]
          %v304 = vld [vmem:[%s296 + $0x38] sm:$0xff]
          %v305 = vld [vmem:[%s296 + $0x40] sm:$0xff]
          %v306 = vld [vmem:[%s296 + $0x48] sm:$0xff]
          %v307 = vld [vmem:[%s296 + $0x50] sm:$0xff]
          %v308 = vld [vmem:[%s296 + $0x58] sm:$0xff]
          %v309 = vld [vmem:[%s296 + $0x60] sm:$0xff]
          %v310 = vld [vmem:[%s296 + $0x68] sm:$0xff]
          %v311 = vld [vmem:[%s296 + $0x70] sm:$0xff]
          %v312 = vld [vmem:[%s296 + $0x78] sm:$0xff]
          %v313 = vld [vmem:[%s296 + $0x80] sm:$0xff]
          %v314 = vld [vmem:[%s296 + $0x88] sm:$0xff]
          %v315 = vld [vmem:[%s296 + $0x90] sm:$0xff]
          %v316 = vld [vmem:[%s296 + $0x98] sm:$0xff]
          %v317 = vld [vmem:[%s296 + $0xa0] sm:$0xff]
          %v318 = vld [vmem:[%s296 + $0xa8] sm:$0xff]
          %v319 = vld [vmem:[%s296 + $0xb0] sm:$0xff]
          %v320 = vld [vmem:[%s296 + $0xb8] sm:$0xff]
          %v321 = vld [vmem:[%s296 + $0xc0] sm:$0xff]
          %v322 = vld [vmem:[%s296 + $0xc8] sm:$0xff]
          %v323 = vld [vmem:[%s296 + $0xd0] sm:$0xff]
          %v324 = vld [vmem:[%s296 + $0xd8] sm:$0xff]
          %v325 = vld [vmem:[%s296 + $0xe0] sm:$0xff]
          %v326 = vld [vmem:[%s296 + $0xe8] sm:$0xff]
          %v327 = vld [vmem:[%s296 + $0xf0] sm:$0xff]
          %v328 = vld [vmem:[%s296 + $0xf8] sm:$0xff]
          %v329 = vld [vmem:[%s296 + $0x100] sm:$0xff]
          %v330 = vld [vmem:[%s296 + $0x108] sm:$0xff]
          %v331 = vld [vmem:[%s296 + $0x110] sm:$0xff]
          %v332 = vld [vmem:[%s296 + $0x118] sm:$0xff]
          %v333 = vld [vmem:[%s296 + $0x120] sm:$0xff]
          %v334 = vld [vmem:[%s296 + $0x128] sm:$0xff]
          %v335 = vld [vmem:[%s296 + $0x130] sm:$0xff]
          %v336 = vld [vmem:[%s296 + $0x138] sm:$0xff]
          %v337 = vld [vmem:[%s296 + $0x140] sm:$0xff]
          %v338 = vld [vmem:[%s296 + $0x148] sm:$0xff]
          %v339 = vld [vmem:[%s296 + $0x150] sm:$0xff]
          %v340 = vld [vmem:[%s296 + $0x158] sm:$0xff]
          %v341 = vld [vmem:[%s296 + $0x160] sm:$0xff]
          %v342 = vld [vmem:[%s296 + $0x168] sm:$0xff]
          %v343 = vld [vmem:[%s296 + $0x170] sm:$0xff]
          %v344 = vld [vmem:[%s296 + $0x178] sm:$0xff]
          %v345 = vld [vmem:[%s296 + $0x180] sm:$0xff]
          %v346 = vld [vmem:[%s296 + $0x188] sm:$0xff]
          %v347 = vld [vmem:[%s296 + $0x190] sm:$0xff]
          %v348 = vld [vmem:[%s296 + $0x198] sm:$0xff]
          %v349 = vld [vmem:[%s296 + $0x1a0] sm:$0xff]
          %v350 = vld [vmem:[%s296 + $0x1a8] sm:$0xff]
          %v351 = vld [vmem:[%s296 + $0x1b0] sm:$0xff]
          %v352 = vld [vmem:[%s296 + $0x1b8] sm:$0xff]
          %v353 = vld [vmem:[%s296 + $0x1c0] sm:$0xff]
          %v354 = vld [vmem:[%s296 + $0x1c8] sm:$0xff]
          %v355 = vld [vmem:[%s296 + $0x1d0] sm:$0xff]
          %v356 = vld [vmem:[%s296 + $0x1d8] sm:$0xff]
          %v357 = vld [vmem:[%s296 + $0x1e0] sm:$0xff]
          %v358 = vld [vmem:[%s296 + $0x1e8] sm:$0xff]
          %v359 = vld [vmem:[%s296 + $0x1f0] sm:$0xff]
          %v360 = vld [vmem:[%s296 + $0x1f8] sm:$0xff]
          %v361 = vld [vmem:[#allocation6] sm:$0xf]
          %v362 = vld [vmem:[#allocation6 + $0x4] sm:$0xf]
          %v363 = vld [vmem:[#allocation6 + $0x8] sm:$0xf]
          %v364 = vld [vmem:[#allocation6 + $0xc] sm:$0xf]
          %v365 = vld [vmem:[#allocation6 + $0x10] sm:$0xf]
          %v366 = vld [vmem:[#allocation6 + $0x14] sm:$0xf]
          %v367 = vld [vmem:[#allocation6 + $0x18] sm:$0xf]
          %v368 = vld [vmem:[#allocation6 + $0x1c] sm:$0xf]
          %v369 = vld [vmem:[#allocation6 + $0x20] sm:$0xf]
          %v370 = vld [vmem:[#allocation6 + $0x24] sm:$0xf]
          %v371 = vld [vmem:[#allocation6 + $0x28] sm:$0xf]
          %v372 = vld [vmem:[#allocation6 + $0x2c] sm:$0xf]
          %v373 = vld [vmem:[#allocation6 + $0x30] sm:$0xf]
          %v374 = vld [vmem:[#allocation6 + $0x34] sm:$0xf]
          %v375 = vld [vmem:[#allocation6 + $0x38] sm:$0xf]
          %v376 = vld [vmem:[#allocation6 + $0x3c] sm:$0xf]
          %v377 = vld [vmem:[#allocation6 + $0x40] sm:$0xf]
          %v378 = vld [vmem:[#allocation6 + $0x44] sm:$0xf]
          %v379 = vld [vmem:[#allocation6 + $0x48] sm:$0xf]
          %v380 = vld [vmem:[#allocation6 + $0x4c] sm:$0xf]
          %v381 = vld [vmem:[#allocation6 + $0x50] sm:$0xf]
          %v382 = vld [vmem:[#allocation6 + $0x54] sm:$0xf]
          %v383 = vld [vmem:[#allocation6 + $0x58] sm:$0xf]
          %v384 = vld [vmem:[#allocation6 + $0x5c] sm:$0xf]
          %v385 = vld [vmem:[#allocation6 + $0x60] sm:$0xf]
          %v386 = vld [vmem:[#allocation6 + $0x64] sm:$0xf]
          %v387 = vld [vmem:[#allocation6 + $0x68] sm:$0xf]
          %v388 = vld [vmem:[#allocation6 + $0x6c] sm:$0xf]
          %v389 = vld [vmem:[#allocation6 + $0x70] sm:$0xf]
          %v390 = vld [vmem:[#allocation6 + $0x74] sm:$0xf]
          %v391 = vld [vmem:[#allocation6 + $0x78] sm:$0xf]
          %v392 = vld [vmem:[#allocation6 + $0x7c] sm:$0xf]
          %v393 = vld [vmem:[#allocation6 + $0x80] sm:$0xf]
          %v394 = vld [vmem:[#allocation6 + $0x84] sm:$0xf]
          %v395 = vld [vmem:[#allocation6 + $0x88] sm:$0xf]
          %v396 = vld [vmem:[#allocation6 + $0x8c] sm:$0xf]
          %v397 = vld [vmem:[#allocation6 + $0x90] sm:$0xf]
          %v398 = vld [vmem:[#allocation6 + $0x94] sm:$0xf]
          %v399 = vld [vmem:[#allocation6 + $0x98] sm:$0xf]
          %v400 = vld [vmem:[#allocation6 + $0x9c] sm:$0xf]
          %v401 = vld [vmem:[#allocation6 + $0xa0] sm:$0xf]
          %v402 = vld [vmem:[#allocation6 + $0xa4] sm:$0xf]
          %v403 = vld [vmem:[#allocation6 + $0xa8] sm:$0xf]
          %v404 = vld [vmem:[#allocation6 + $0xac] sm:$0xf]
          %v405 = vld [vmem:[#allocation6 + $0xb0] sm:$0xf]
          %v406 = vld [vmem:[#allocation6 + $0xb4] sm:$0xf]
          %v407 = vld [vmem:[#allocation6 + $0xb8] sm:$0xf]
          %v408 = vld [vmem:[#allocation6 + $0xbc] sm:$0xf]
          %v409 = vld [vmem:[#allocation6 + $0xc0] sm:$0xf]
          %v410 = vld [vmem:[#allocation6 + $0xc4] sm:$0xf]
          %v411 = vld [vmem:[#allocation6 + $0xc8] sm:$0xf]
          %v412 = vld [vmem:[#allocation6 + $0xcc] sm:$0xf]
          %v413 = vld [vmem:[#allocation6 + $0xd0] sm:$0xf]
          %v414 = vld [vmem:[#allocation6 + $0xd4] sm:$0xf]
          %v415 = vld [vmem:[#allocation6 + $0xd8] sm:$0xf]
          %v416 = vld [vmem:[#allocation6 + $0xdc] sm:$0xf]
          %v417 = vld [vmem:[#allocation6 + $0xe0] sm:$0xf]
          %v418 = vld [vmem:[#allocation6 + $0xe4] sm:$0xf]
          %v419 = vld [vmem:[#allocation6 + $0xe8] sm:$0xf]
          %v420 = vld [vmem:[#allocation6 + $0xec] sm:$0xf]
          %v421 = vld [vmem:[#allocation6 + $0xf0] sm:$0xf]
          %v422 = vld [vmem:[#allocation6 + $0xf4] sm:$0xf]
          %v423 = vld [vmem:[#allocation6 + $0xf8] sm:$0xf]
          %v424 = vld [vmem:[#allocation6 + $0xfc] sm:$0xf]
          %v489 = vunpack.c.l.b16 %v297
          %v490 = vunpack.c.h.b16 %v297
          %v491 = vunpack.c.l.b16 %v298
          %v492 = vunpack.c.h.b16 %v298
          %v493 = vunpack.c.l.b16 %v299
          %v494 = vunpack.c.h.b16 %v299
          %v495 = vunpack.c.l.b16 %v300
          %v496 = vunpack.c.h.b16 %v300
          %v497 = vunpack.c.l.b16 %v301
          %v498 = vunpack.c.h.b16 %v301
          %v499 = vunpack.c.l.b16 %v302
          %v500 = vunpack.c.h.b16 %v302
          %v501 = vunpack.c.l.b16 %v303
          %v502 = vunpack.c.h.b16 %v303
          %v503 = vunpack.c.l.b16 %v304
          %v504 = vunpack.c.h.b16 %v304
          %v505 = vunpack.c.l.b16 %v305
          %v506 = vunpack.c.h.b16 %v305
          %v507 = vunpack.c.l.b16 %v306
          %v508 = vunpack.c.h.b16 %v306
          %v509 = vunpack.c.l.b16 %v307
          %v510 = vunpack.c.h.b16 %v307
          %v511 = vunpack.c.l.b16 %v308
          %v512 = vunpack.c.h.b16 %v308
          %v513 = vunpack.c.l.b16 %v309
          %v514 = vunpack.c.h.b16 %v309
          %v515 = vunpack.c.l.b16 %v310
          %v516 = vunpack.c.h.b16 %v310
          %v517 = vunpack.c.l.b16 %v311
          %v518 = vunpack.c.h.b16 %v311
          %v519 = vunpack.c.l.b16 %v312
          %v520 = vunpack.c.h.b16 %v312
          %v521 = vunpack.c.l.b16 %v313
          %v522 = vunpack.c.h.b16 %v313
          %v523 = vunpack.c.l.b16 %v314
          %v524 = vunpack.c.h.b16 %v314
          %v525 = vunpack.c.l.b16 %v315
          %v526 = vunpack.c.h.b16 %v315
          %v527 = vunpack.c.l.b16 %v316
          %v528 = vunpack.c.h.b16 %v316
          %v529 = vunpack.c.l.b16 %v317
          %v530 = vunpack.c.h.b16 %v317
          %v531 = vunpack.c.l.b16 %v318
          %v532 = vunpack.c.h.b16 %v318
          %v533 = vunpack.c.l.b16 %v319
          %v534 = vunpack.c.h.b16 %v319
          %v535 = vunpack.c.l.b16 %v320
          %v536 = vunpack.c.h.b16 %v320
          %v537 = vunpack.c.l.b16 %v321
          %v538 = vunpack.c.h.b16 %v321
          %v539 = vunpack.c.l.b16 %v322
          %v540 = vunpack.c.h.b16 %v322
          %v541 = vunpack.c.l.b16 %v323
          %v542 = vunpack.c.h.b16 %v323
          %v543 = vunpack.c.l.b16 %v324
          %v544 = vunpack.c.h.b16 %v324
          %v545 = vunpack.c.l.b16 %v325
          %v546 = vunpack.c.h.b16 %v325
          %v547 = vunpack.c.l.b16 %v326
          %v548 = vunpack.c.h.b16 %v326
          %v549 = vunpack.c.l.b16 %v327
          %v550 = vunpack.c.h.b16 %v327
          %v551 = vunpack.c.l.b16 %v328
          %v552 = vunpack.c.h.b16 %v328
          %v553 = vunpack.c.l.b16 %v329
          %v554 = vunpack.c.h.b16 %v329
          %v555 = vunpack.c.l.b16 %v330
          %v556 = vunpack.c.h.b16 %v330
          %v557 = vunpack.c.l.b16 %v331
          %v558 = vunpack.c.h.b16 %v331
          %v559 = vunpack.c.l.b16 %v332
          %v560 = vunpack.c.h.b16 %v332
          %v561 = vunpack.c.l.b16 %v333
          %v562 = vunpack.c.h.b16 %v333
          %v563 = vunpack.c.l.b16 %v334
          %v564 = vunpack.c.h.b16 %v334
          %v565 = vunpack.c.l.b16 %v335
          %v566 = vunpack.c.h.b16 %v335
          %v567 = vunpack.c.l.b16 %v336
          %v568 = vunpack.c.h.b16 %v336
          %v569 = vunpack.c.l.b16 %v337
          %v570 = vunpack.c.h.b16 %v337
          %v571 = vunpack.c.l.b16 %v338
          %v572 = vunpack.c.h.b16 %v338
          %v573 = vunpack.c.l.b16 %v339
          %v574 = vunpack.c.h.b16 %v339
          %v575 = vunpack.c.l.b16 %v340
          %v576 = vunpack.c.h.b16 %v340
          %v577 = vunpack.c.l.b16 %v341
          %v578 = vunpack.c.h.b16 %v341
          %v579 = vunpack.c.l.b16 %v342
          %v580 = vunpack.c.h.b16 %v342
          %v581 = vunpack.c.l.b16 %v343
          %v582 = vunpack.c.h.b16 %v343
          %v583 = vunpack.c.l.b16 %v344
          %v584 = vunpack.c.h.b16 %v344
          %v585 = vunpack.c.l.b16 %v345
          %v586 = vunpack.c.h.b16 %v345
          %v587 = vunpack.c.l.b16 %v346
          %v588 = vunpack.c.h.b16 %v346
          %v589 = vunpack.c.l.b16 %v347
          %v590 = vunpack.c.h.b16 %v347
          %v591 = vunpack.c.l.b16 %v348
          %v592 = vunpack.c.h.b16 %v348
          %v593 = vunpack.c.l.b16 %v349
          %v594 = vunpack.c.h.b16 %v349
          %v595 = vunpack.c.l.b16 %v350
          %v596 = vunpack.c.h.b16 %v350
          %v597 = vunpack.c.l.b16 %v351
          %v598 = vunpack.c.h.b16 %v351
          %v599 = vunpack.c.l.b16 %v352
          %v600 = vunpack.c.h.b16 %v352
          %v601 = vunpack.c.l.b16 %v353
          %v602 = vunpack.c.h.b16 %v353
          %v603 = vunpack.c.l.b16 %v354
          %v604 = vunpack.c.h.b16 %v354
          %v605 = vunpack.c.l.b16 %v355
          %v606 = vunpack.c.h.b16 %v355
          %v607 = vunpack.c.l.b16 %v356
          %v608 = vunpack.c.h.b16 %v356
          %v609 = vunpack.c.l.b16 %v357
          %v610 = vunpack.c.h.b16 %v357
          %v611 = vunpack.c.l.b16 %v358
          %v612 = vunpack.c.h.b16 %v358
          %v613 = vunpack.c.l.b16 %v359
          %v614 = vunpack.c.h.b16 %v359
          %v615 = vunpack.c.l.b16 %v360
          %v616 = vunpack.c.h.b16 %v360
          %v617 = vpack.c.b16 %v493, %v489
          %v618 = vpack.c.b16 %v494, %v490
          %v619 = vpack.c.b16 %v495, %v491
          %v620 = vpack.c.b16 %v496, %v492
          %v621 = vpack.c.b16 %v501, %v497
          %v622 = vpack.c.b16 %v502, %v498
          %v623 = vpack.c.b16 %v503, %v499
          %v624 = vpack.c.b16 %v504, %v500
          %v625 = vpack.c.b16 %v509, %v505
          %v626 = vpack.c.b16 %v510, %v506
          %v627 = vpack.c.b16 %v511, %v507
          %v628 = vpack.c.b16 %v512, %v508
          %v629 = vpack.c.b16 %v517, %v513
          %v630 = vpack.c.b16 %v518, %v514
          %v631 = vpack.c.b16 %v519, %v515
          %v632 = vpack.c.b16 %v520, %v516
          %v633 = vpack.c.b16 %v525, %v521
          %v634 = vpack.c.b16 %v526, %v522
          %v635 = vpack.c.b16 %v527, %v523
          %v636 = vpack.c.b16 %v528, %v524
          %v637 = vpack.c.b16 %v533, %v529
          %v638 = vpack.c.b16 %v534, %v530
          %v639 = vpack.c.b16 %v535, %v531
          %v640 = vpack.c.b16 %v536, %v532
          %v641 = vpack.c.b16 %v541, %v537
          %v642 = vpack.c.b16 %v542, %v538
          %v643 = vpack.c.b16 %v543, %v539
          %v644 = vpack.c.b16 %v544, %v540
          %v645 = vpack.c.b16 %v549, %v545
          %v646 = vpack.c.b16 %v550, %v546
          %v647 = vpack.c.b16 %v551, %v547
          %v648 = vpack.c.b16 %v552, %v548
          %v649 = vpack.c.b16 %v557, %v553
          %v650 = vpack.c.b16 %v558, %v554
          %v651 = vpack.c.b16 %v559, %v555
          %v652 = vpack.c.b16 %v560, %v556
          %v653 = vpack.c.b16 %v565, %v561
          %v654 = vpack.c.b16 %v566, %v562
          %v655 = vpack.c.b16 %v567, %v563
          %v656 = vpack.c.b16 %v568, %v564
          %v657 = vpack.c.b16 %v573, %v569
          %v658 = vpack.c.b16 %v574, %v570
          %v659 = vpack.c.b16 %v575, %v571
          %v660 = vpack.c.b16 %v576, %v572
          %v661 = vpack.c.b16 %v581, %v577
          %v662 = vpack.c.b16 %v582, %v578
          %v663 = vpack.c.b16 %v583, %v579
          %v664 = vpack.c.b16 %v584, %v580
          %v665 = vpack.c.b16 %v589, %v585
          %v666 = vpack.c.b16 %v590, %v586
          %v667 = vpack.c.b16 %v591, %v587
          %v668 = vpack.c.b16 %v592, %v588
          %v669 = vpack.c.b16 %v597, %v593
          %v670 = vpack.c.b16 %v598, %v594
          %v671 = vpack.c.b16 %v599, %v595
          %v672 = vpack.c.b16 %v600, %v596
          %v673 = vpack.c.b16 %v605, %v601
          %v674 = vpack.c.b16 %v606, %v602
          %v675 = vpack.c.b16 %v607, %v603
          %v676 = vpack.c.b16 %v608, %v604
          %v677 = vpack.c.b16 %v613, %v609
          %v678 = vpack.c.b16 %v614, %v610
          %v679 = vpack.c.b16 %v615, %v611
          %v680 = vpack.c.b16 %v616, %v612
          %v809 = vunpack.c.l.b16 %v361
          %v810 = vunpack.c.l.b16 %v362
          %v811 = vunpack.c.l.b16 %v363
          %v812 = vunpack.c.l.b16 %v364
          %v813 = vunpack.c.l.b16 %v365
          %v814 = vunpack.c.l.b16 %v366
          %v815 = vunpack.c.l.b16 %v367
          %v816 = vunpack.c.l.b16 %v368
          %v817 = vunpack.c.l.b16 %v369
          %v818 = vunpack.c.l.b16 %v370
          %v819 = vunpack.c.l.b16 %v371
          %v820 = vunpack.c.l.b16 %v372
          %v821 = vunpack.c.l.b16 %v373
          %v822 = vunpack.c.l.b16 %v374
          %v823 = vunpack.c.l.b16 %v375
          %v824 = vunpack.c.l.b16 %v376
          %v825 = vunpack.c.l.b16 %v377
          %v826 = vunpack.c.l.b16 %v378
          %v827 = vunpack.c.l.b16 %v379
          %v828 = vunpack.c.l.b16 %v380
          %v829 = vunpack.c.l.b16 %v381
          %v830 = vunpack.c.l.b16 %v382
          %v831 = vunpack.c.l.b16 %v383
          %v832 = vunpack.c.l.b16 %v384
          %v833 = vunpack.c.l.b16 %v385
          %v834 = vunpack.c.l.b16 %v386
          %v835 = vunpack.c.l.b16 %v387
          %v836 = vunpack.c.l.b16 %v388
          %v837 = vunpack.c.l.b16 %v389
          %v838 = vunpack.c.l.b16 %v390
          %v839 = vunpack.c.l.b16 %v391
          %v840 = vunpack.c.l.b16 %v392
          %v841 = vunpack.c.l.b16 %v393
          %v842 = vunpack.c.l.b16 %v394
          %v843 = vunpack.c.l.b16 %v395
          %v844 = vunpack.c.l.b16 %v396
          %v845 = vunpack.c.l.b16 %v397
          %v846 = vunpack.c.l.b16 %v398
          %v847 = vunpack.c.l.b16 %v399
          %v848 = vunpack.c.l.b16 %v400
          %v849 = vunpack.c.l.b16 %v401
          %v850 = vunpack.c.l.b16 %v402
          %v851 = vunpack.c.l.b16 %v403
          %v852 = vunpack.c.l.b16 %v404
          %v853 = vunpack.c.l.b16 %v405
          %v854 = vunpack.c.l.b16 %v406
          %v855 = vunpack.c.l.b16 %v407
          %v856 = vunpack.c.l.b16 %v408
          %v857 = vunpack.c.l.b16 %v409
          %v858 = vunpack.c.l.b16 %v410
          %v859 = vunpack.c.l.b16 %v411
          %v860 = vunpack.c.l.b16 %v412
          %v861 = vunpack.c.l.b16 %v413
          %v862 = vunpack.c.l.b16 %v414
          %v863 = vunpack.c.l.b16 %v415
          %v864 = vunpack.c.l.b16 %v416
          %v865 = vunpack.c.l.b16 %v417
          %v866 = vunpack.c.l.b16 %v418
          %v867 = vunpack.c.l.b16 %v419
          %v868 = vunpack.c.l.b16 %v420
          %v869 = vunpack.c.l.b16 %v421
          %v870 = vunpack.c.l.b16 %v422
          %v871 = vunpack.c.l.b16 %v423
          %v872 = vunpack.c.l.b16 %v424
          %v873 = vpack.c.b16 %v810, %v809
          %v874 = vpack.c.b16 %v812, %v811
          %v875 = vpack.c.b16 %v814, %v813
          %v876 = vpack.c.b16 %v816, %v815
          %v877 = vpack.c.b16 %v818, %v817
          %v878 = vpack.c.b16 %v820, %v819
          %v879 = vpack.c.b16 %v822, %v821
          %v880 = vpack.c.b16 %v824, %v823
          %v881 = vpack.c.b16 %v826, %v825
          %v882 = vpack.c.b16 %v828, %v827
          %v883 = vpack.c.b16 %v830, %v829
          %v884 = vpack.c.b16 %v832, %v831
          %v885 = vpack.c.b16 %v834, %v833
          %v886 = vpack.c.b16 %v836, %v835
          %v887 = vpack.c.b16 %v838, %v837
          %v888 = vpack.c.b16 %v840, %v839
          %v889 = vpack.c.b16 %v842, %v841
          %v890 = vpack.c.b16 %v844, %v843
          %v891 = vpack.c.b16 %v846, %v845
          %v892 = vpack.c.b16 %v848, %v847
          %v893 = vpack.c.b16 %v850, %v849
          %v894 = vpack.c.b16 %v852, %v851
          %v895 = vpack.c.b16 %v854, %v853
          %v896 = vpack.c.b16 %v856, %v855
          %v897 = vpack.c.b16 %v858, %v857
          %v898 = vpack.c.b16 %v860, %v859
          %v899 = vpack.c.b16 %v862, %v861
          %v900 = vpack.c.b16 %v864, %v863
          %v901 = vpack.c.b16 %v866, %v865
          %v902 = vpack.c.b16 %v868, %v867
          %v903 = vpack.c.b16 %v870, %v869
          %v904 = vpack.c.b16 %v872, %v871
          %937 = vmatprep.subr.bf16.mxu0 0
          %938 = vmatpush1.bf16.msra.mxu0 %v873
          %939 = vmatprep.subr.bf16.mxu0 0
          %940 = vmatpush1.bf16.msra.mxu0 %v874
          %941 = vmatprep.subr.bf16.mxu0 0
          %942 = vmatpush1.bf16.msra.mxu0 %v875
          %943 = vmatprep.subr.bf16.mxu0 0
          %944 = vmatpush1.bf16.msra.mxu0 %v876
          %945 = vmatprep.subr.bf16.mxu0 0
          %946 = vmatpush1.bf16.msra.mxu0 %v877
          %947 = vmatprep.subr.bf16.mxu0 0
          %948 = vmatpush1.bf16.msra.mxu0 %v878
          %949 = vmatprep.subr.bf16.mxu0 0
          %950 = vmatpush1.bf16.msra.mxu0 %v879
          %951 = vmatprep.subr.bf16.mxu0 0
          %952 = vmatpush1.bf16.msra.mxu0 %v880
          %953 = vmatprep.subr.bf16.mxu0 0
          %954 = vmatpush1.bf16.msra.mxu0 %v881
          %955 = vmatprep.subr.bf16.mxu0 0
          %956 = vmatpush1.bf16.msra.mxu0 %v882
          %957 = vmatprep.subr.bf16.mxu0 0
          %958 = vmatpush1.bf16.msra.mxu0 %v883
          %959 = vmatprep.subr.bf16.mxu0 0
          %960 = vmatpush1.bf16.msra.mxu0 %v884
          %961 = vmatprep.subr.bf16.mxu0 0
          %962 = vmatpush1.bf16.msra.mxu0 %v885
          %963 = vmatprep.subr.bf16.mxu0 0
          %964 = vmatpush1.bf16.msra.mxu0 %v886
          %965 = vmatprep.subr.bf16.mxu0 0
          %966 = vmatpush1.bf16.msra.mxu0 %v887
          %967 = vmatprep.subr.bf16.mxu0 0
          %968 = vmatpush1.bf16.msra.mxu0 %v888
          %969 = vmatprep.mubr.bf16.mxu0 %v618
          %970 = vmatmul.mubr.bf16.gmra.mrb[0].mxu0 %v617
          %v971 = vpop.f32.mrb[0].mxu0
          %v972 = vadd.f32 0.0, %v971
          %v973 = vpop.f32.mrb[0].mxu0
          %v974 = vpop.f32.mrb[0].mxu0
          %v975 = vadd.f32 0.0, %v974
          %v976 = vpop.f32.mrb[0].mxu0
          %977 = vmatprep.mubr.bf16.mxu0 %v622
          %978 = vmatmul.mubr.bf16.gmra.mrb[0].mxu0 %v621
          %v979 = vpop.f32.mrb[0].mxu0
          %v980 = vadd.f32 0.0, %v979
          %v981 = vpop.f32.mrb[0].mxu0
          %v982 = vpop.f32.mrb[0].mxu0
          %v983 = vadd.f32 0.0, %v982
          %v984 = vpop.f32.mrb[0].mxu0
          %985 = vmatprep.mubr.bf16.mxu0 %v626
          %986 = vmatmul.mubr.bf16.gmra.mrb[0].mxu0 %v625
          %v987 = vpop.f32.mrb[0].mxu0
          %v988 = vadd.f32 0.0, %v987
          %v989 = vpop.f32.mrb[0].mxu0
          %v990 = vpop.f32.mrb[0].mxu0
          %v991 = vadd.f32 0.0, %v990
          %v992 = vpop.f32.mrb[0].mxu0
          %993 = vmatprep.mubr.bf16.mxu0 %v630
          %994 = vmatmul.mubr.bf16.gmra.mrb[0].mxu0 %v629
          %v995 = vpop.f32.mrb[0].mxu0
          %v996 = vadd.f32 0.0, %v995
          %v997 = vpop.f32.mrb[0].mxu0
          %v998 = vpop.f32.mrb[0].mxu0
          %v999 = vadd.f32 0.0, %v998
          %v1000 = vpop.f32.mrb[0].mxu0
          %1001 = vmatprep.mubr.bf16.mxu0 %v634
          %1002 = vmatmul.mubr.bf16.gmra.mrb[0].mxu0 %v633
          %v1003 = vpop.f32.mrb[0].mxu0
          %v1004 = vadd.f32 0.0, %v1003
          %v1005 = vpop.f32.mrb[0].mxu0
          %v1006 = vpop.f32.mrb[0].mxu0
          %v1007 = vadd.f32 0.0, %v1006
          %v1008 = vpop.f32.mrb[0].mxu0
          %1009 = vmatprep.mubr.bf16.mxu0 %v638
          %1010 = vmatmul.mubr.bf16.gmra.mrb[0].mxu0 %v637
          %v1011 = vpop.f32.mrb[0].mxu0
          %v1012 = vadd.f32 0.0, %v1011
          %v1013 = vpop.f32.mrb[0].mxu0
          %v1014 = vpop.f32.mrb[0].mxu0
          %v1015 = vadd.f32 0.0, %v1014
          %v1016 = vpop.f32.mrb[0].mxu0
          %1017 = vmatprep.mubr.bf16.mxu0 %v642
          %1018 = vmatmul.mubr.bf16.gmra.mrb[0].mxu0 %v641
          %v1019 = vpop.f32.mrb[0].mxu0
          %v1020 = vadd.f32 0.0, %v1019
          %v1021 = vpop.f32.mrb[0].mxu0
          %v1022 = vpop.f32.mrb[0].mxu0
          %v1023 = vadd.f32 0.0, %v1022
          %v1024 = vpop.f32.mrb[0].mxu0
          %1025 = vmatprep.mubr.bf16.mxu0 %v646
          %1026 = vmatmul.mubr.bf16.gmra.mrb[0].mxu0 %v645
          %v1027 = vpop.f32.mrb[0].mxu0
          %v1028 = vadd.f32 0.0, %v1027
          %v1029 = vpop.f32.mrb[0].mxu0
          %v1030 = vpop.f32.mrb[0].mxu0
          %v1031 = vadd.f32 0.0, %v1030
          %v1032 = vpop.f32.mrb[0].mxu0
          %1033 = vmatprep.mubr.bf16.mxu0 %v650
          %1034 = vmatmul.mubr.bf16.gmra.mrb[0].mxu0 %v649
          %v1035 = vpop.f32.mrb[0].mxu0
          %v1036 = vadd.f32 0.0, %v1035
          %v1037 = vpop.f32.mrb[0].mxu0
          %v1038 = vpop.f32.mrb[0].mxu0
          %v1039 = vadd.f32 0.0, %v1038
          %v1040 = vpop.f32.mrb[0].mxu0
          %1041 = vmatprep.mubr.bf16.mxu0 %v654
          %1042 = vmatmul.mubr.bf16.gmra.mrb[0].mxu0 %v653
          %v1043 = vpop.f32.mrb[0].mxu0
          %v1044 = vadd.f32 0.0, %v1043
          %v1045 = vpop.f32.mrb[0].mxu0
          %v1046 = vpop.f32.mrb[0].mxu0
          %v1047 = vadd.f32 0.0, %v1046
          %v1048 = vpop.f32.mrb[0].mxu0
          %1049 = vmatprep.mubr.bf16.mxu0 %v658
          %1050 = vmatmul.mubr.bf16.gmra.mrb[0].mxu0 %v657
          %v1051 = vpop.f32.mrb[0].mxu0
          %v1052 = vadd.f32 0.0, %v1051
          %v1053 = vpop.f32.mrb[0].mxu0
          %v1054 = vpop.f32.mrb[0].mxu0
          %v1055 = vadd.f32 0.0, %v1054
          %v1056 = vpop.f32.mrb[0].mxu0
          %1057 = vmatprep.mubr.bf16.mxu0 %v662
          %1058 = vmatmul.mubr.bf16.gmra.mrb[0].mxu0 %v661
          %v1059 = vpop.f32.mrb[0].mxu0
          %v1060 = vadd.f32 0.0, %v1059
          %v1061 = vpop.f32.mrb[0].mxu0
          %v1062 = vpop.f32.mrb[0].mxu0
          %v1063 = vadd.f32 0.0, %v1062
          %v1064 = vpop.f32.mrb[0].mxu0
          %1065 = vmatprep.mubr.bf16.mxu0 %v666
          %1066 = vmatmul.mubr.bf16.gmra.mrb[0].mxu0 %v665
          %v1067 = vpop.f32.mrb[0].mxu0
          %v1068 = vadd.f32 0.0, %v1067
          %v1069 = vpop.f32.mrb[0].mxu0
          %v1070 = vpop.f32.mrb[0].mxu0
          %v1071 = vadd.f32 0.0, %v1070
          %v1072 = vpop.f32.mrb[0].mxu0
          %1073 = vmatprep.mubr.bf16.mxu0 %v670
          %1074 = vmatmul.mubr.bf16.gmra.mrb[0].mxu0 %v669
          %v1075 = vpop.f32.mrb[0].mxu0
          %v1076 = vadd.f32 0.0, %v1075
          %v1077 = vpop.f32.mrb[0].mxu0
          %v1078 = vpop.f32.mrb[0].mxu0
          %v1079 = vadd.f32 0.0, %v1078
          %v1080 = vpop.f32.mrb[0].mxu0
          %1081 = vmatprep.mubr.bf16.mxu0 %v674
          %1082 = vmatmul.mubr.bf16.gmra.mrb[0].mxu0 %v673
          %v1083 = vpop.f32.mrb[0].mxu0
          %v1084 = vadd.f32 0.0, %v1083
          %v1085 = vpop.f32.mrb[0].mxu0
          %v1086 = vpop.f32.mrb[0].mxu0
          %v1087 = vadd.f32 0.0, %v1086
          %v1088 = vpop.f32.mrb[0].mxu0
          %1089 = vmatprep.mubr.bf16.mxu0 %v678
          %1090 = vmatmul.mubr.bf16.gmra.mrb[0].mxu0 %v677
          %v1091 = vpop.f32.mrb[0].mxu0
          %v1092 = vadd.f32 0.0, %v1091
          %v1093 = vpop.f32.mrb[0].mxu0
          %v1094 = vpop.f32.mrb[0].mxu0
          %v1095 = vadd.f32 0.0, %v1094
          %v1096 = vpop.f32.mrb[0].mxu0
          %1097 = vdwg.mxu0
          %1098 = vmatprep.subr.bf16.mxu0 0
          %1099 = vmatpush1.bf16.msra.mxu0 %v889
          %1100 = vmatprep.subr.bf16.mxu0 0
          %1101 = vmatpush1.bf16.msra.mxu0 %v890
          %1102 = vmatprep.subr.bf16.mxu0 0
          %1103 = vmatpush1.bf16.msra.mxu0 %v891
          %1104 = vmatprep.subr.bf16.mxu0 0
          %1105 = vmatpush1.bf16.msra.mxu0 %v892
          %1106 = vmatprep.subr.bf16.mxu0 0
          %1107 = vmatpush1.bf16.msra.mxu0 %v893
          %1108 = vmatprep.subr.bf16.mxu0 0
          %1109 = vmatpush1.bf16.msra.mxu0 %v894
          %1110 = vmatprep.subr.bf16.mxu0 0
          %1111 = vmatpush1.bf16.msra.mxu0 %v895
          %1112 = vmatprep.subr.bf16.mxu0 0
          %1113 = vmatpush1.bf16.msra.mxu0 %v896
          %1114 = vmatprep.subr.bf16.mxu0 0
          %1115 = vmatpush1.bf16.msra.mxu0 %v897
          %1116 = vmatprep.subr.bf16.mxu0 0
          %1117 = vmatpush1.bf16.msra.mxu0 %v898
          %1118 = vmatprep.subr.bf16.mxu0 0
          %1119 = vmatpush1.bf16.msra.mxu0 %v899
          %1120 = vmatprep.subr.bf16.mxu0 0
          %1121 = vmatpush1.bf16.msra.mxu0 %v900
          %1122 = vmatprep.subr.bf16.mxu0 0
          %1123 = vmatpush1.bf16.msra.mxu0 %v901
          %1124 = vmatprep.subr.bf16.mxu0 0
          %1125 = vmatpush1.bf16.msra.mxu0 %v902
          %1126 = vmatprep.subr.bf16.mxu0 0
          %1127 = vmatpush1.bf16.msra.mxu0 %v903
          %1128 = vmatprep.subr.bf16.mxu0 0
          %1129 = vmatpush1.bf16.msra.mxu0 %v904
          %1130 = vmatprep.mubr.bf16.mxu0 %v620
          %1131 = vmatmul.mubr.bf16.gmra.mrb[0].mxu0 %v619
          %v1132 = vpop.f32.mrb[0].mxu0
          %v1133 = vadd.f32 %v972, %v1132
          %v1134 = vpop.f32.mrb[0].mxu0
          %v1135 = vpop.f32.mrb[0].mxu0
          %v1136 = vadd.f32 %v975, %v1135
          %v1137 = vpop.f32.mrb[0].mxu0
          %1138 = vmatprep.mubr.bf16.mxu0 %v624
          %1139 = vmatmul.mubr.bf16.gmra.mrb[0].mxu0 %v623
          %v1140 = vpop.f32.mrb[0].mxu0
          %v1141 = vadd.f32 %v980, %v1140
          %v1142 = vpop.f32.mrb[0].mxu0
          %v1143 = vpop.f32.mrb[0].mxu0
          %v1144 = vadd.f32 %v983, %v1143
          %v1145 = vpop.f32.mrb[0].mxu0
          %1146 = vmatprep.mubr.bf16.mxu0 %v628
          %1147 = vmatmul.mubr.bf16.gmra.mrb[0].mxu0 %v627
          %v1148 = vpop.f32.mrb[0].mxu0
          %v1149 = vadd.f32 %v988, %v1148
          %v1150 = vpop.f32.mrb[0].mxu0
          %v1151 = vpop.f32.mrb[0].mxu0
          %v1152 = vadd.f32 %v991, %v1151
          %v1153 = vpop.f32.mrb[0].mxu0
          %1154 = vmatprep.mubr.bf16.mxu0 %v632
          %1155 = vmatmul.mubr.bf16.gmra.mrb[0].mxu0 %v631
          %v1156 = vpop.f32.mrb[0].mxu0
          %v1157 = vadd.f32 %v996, %v1156
          %v1158 = vpop.f32.mrb[0].mxu0
          %v1159 = vpop.f32.mrb[0].mxu0
          %v1160 = vadd.f32 %v999, %v1159
          %v1161 = vpop.f32.mrb[0].mxu0
          %1162 = vmatprep.mubr.bf16.mxu0 %v636
          %1163 = vmatmul.mubr.bf16.gmra.mrb[0].mxu0 %v635
          %v1164 = vpop.f32.mrb[0].mxu0
          %v1165 = vadd.f32 %v1004, %v1164
          %v1166 = vpop.f32.mrb[0].mxu0
          %v1167 = vpop.f32.mrb[0].mxu0
          %v1168 = vadd.f32 %v1007, %v1167
          %v1169 = vpop.f32.mrb[0].mxu0
          %1170 = vmatprep.mubr.bf16.mxu0 %v640
          %1171 = vmatmul.mubr.bf16.gmra.mrb[0].mxu0 %v639
          %v1172 = vpop.f32.mrb[0].mxu0
          %v1173 = vadd.f32 %v1012, %v1172
          %v1174 = vpop.f32.mrb[0].mxu0
          %v1175 = vpop.f32.mrb[0].mxu0
          %v1176 = vadd.f32 %v1015, %v1175
          %v1177 = vpop.f32.mrb[0].mxu0
          %1178 = vmatprep.mubr.bf16.mxu0 %v644
          %1179 = vmatmul.mubr.bf16.gmra.mrb[0].mxu0 %v643
          %v1180 = vpop.f32.mrb[0].mxu0
          %v1181 = vadd.f32 %v1020, %v1180
          %v1182 = vpop.f32.mrb[0].mxu0
          %v1183 = vpop.f32.mrb[0].mxu0
          %v1184 = vadd.f32 %v1023, %v1183
          %v1185 = vpop.f32.mrb[0].mxu0
          %1186 = vmatprep.mubr.bf16.mxu0 %v648
          %1187 = vmatmul.mubr.bf16.gmra.mrb[0].mxu0 %v647
          %v1188 = vpop.f32.mrb[0].mxu0
          %v1189 = vadd.f32 %v1028, %v1188
          %v1190 = vpop.f32.mrb[0].mxu0
          %v1191 = vpop.f32.mrb[0].mxu0
          %v1192 = vadd.f32 %v1031, %v1191
          %v1193 = vpop.f32.mrb[0].mxu0
          %1194 = vmatprep.mubr.bf16.mxu0 %v652
          %1195 = vmatmul.mubr.bf16.gmra.mrb[0].mxu0 %v651
          %v1196 = vpop.f32.mrb[0].mxu0
          %v1197 = vadd.f32 %v1036, %v1196
          %v1198 = vpop.f32.mrb[0].mxu0
          %v1199 = vpop.f32.mrb[0].mxu0
          %v1200 = vadd.f32 %v1039, %v1199
          %v1201 = vpop.f32.mrb[0].mxu0
          %1202 = vmatprep.mubr.bf16.mxu0 %v656
          %1203 = vmatmul.mubr.bf16.gmra.mrb[0].mxu0 %v655
          %v1204 = vpop.f32.mrb[0].mxu0
          %v1205 = vadd.f32 %v1044, %v1204
          %v1206 = vpop.f32.mrb[0].mxu0
          %v1207 = vpop.f32.mrb[0].mxu0
          %v1208 = vadd.f32 %v1047, %v1207
          %v1209 = vpop.f32.mrb[0].mxu0
          %1210 = vmatprep.mubr.bf16.mxu0 %v660
          %1211 = vmatmul.mubr.bf16.gmra.mrb[0].mxu0 %v659
          %v1212 = vpop.f32.mrb[0].mxu0
          %v1213 = vadd.f32 %v1052, %v1212
          %v1214 = vpop.f32.mrb[0].mxu0
          %v1215 = vpop.f32.mrb[0].mxu0
          %v1216 = vadd.f32 %v1055, %v1215
          %v1217 = vpop.f32.mrb[0].mxu0
          %1218 = vmatprep.mubr.bf16.mxu0 %v664
          %1219 = vmatmul.mubr.bf16.gmra.mrb[0].mxu0 %v663
          %v1220 = vpop.f32.mrb[0].mxu0
          %v1221 = vadd.f32 %v1060, %v1220
          %v1222 = vpop.f32.mrb[0].mxu0
          %v1223 = vpop.f32.mrb[0].mxu0
          %v1224 = vadd.f32 %v1063, %v1223
          %v1225 = vpop.f32.mrb[0].mxu0
          %1226 = vmatprep.mubr.bf16.mxu0 %v668
          %1227 = vmatmul.mubr.bf16.gmra.mrb[0].mxu0 %v667
          %v1228 = vpop.f32.mrb[0].mxu0
          %v1229 = vadd.f32 %v1068, %v1228
          %v1230 = vpop.f32.mrb[0].mxu0
          %v1231 = vpop.f32.mrb[0].mxu0
          %v1232 = vadd.f32 %v1071, %v1231
          %v1233 = vpop.f32.mrb[0].mxu0
          %1234 = vmatprep.mubr.bf16.mxu0 %v672
          %1235 = vmatmul.mubr.bf16.gmra.mrb[0].mxu0 %v671
          %v1236 = vpop.f32.mrb[0].mxu0
          %v1237 = vadd.f32 %v1076, %v1236
          %v1238 = vpop.f32.mrb[0].mxu0
          %v1239 = vpop.f32.mrb[0].mxu0
          %v1240 = vadd.f32 %v1079, %v1239
          %v1241 = vpop.f32.mrb[0].mxu0
          %1242 = vmatprep.mubr.bf16.mxu0 %v676
          %1243 = vmatmul.mubr.bf16.gmra.mrb[0].mxu0 %v675
          %v1244 = vpop.f32.mrb[0].mxu0
          %v1245 = vadd.f32 %v1084, %v1244
          %v1246 = vpop.f32.mrb[0].mxu0
          %v1247 = vpop.f32.mrb[0].mxu0
          %v1248 = vadd.f32 %v1087, %v1247
          %v1249 = vpop.f32.mrb[0].mxu0
          %1250 = vmatprep.mubr.bf16.mxu0 %v680
          %1251 = vmatmul.mubr.bf16.gmra.mrb[0].mxu0 %v679
          %v1252 = vpop.f32.mrb[0].mxu0
          %v1253 = vadd.f32 %v1092, %v1252
          %v1254 = vpop.f32.mrb[0].mxu0
          %v1255 = vpop.f32.mrb[0].mxu0
          %v1256 = vadd.f32 %v1095, %v1255
          %v1257 = vpop.f32.mrb[0].mxu0
          %1258 = vdwg.mxu0
          %v1259 = vpack.c.bf16 %v1136, %v1133
          %v1260 = vpack.c.bf16 %v1144, %v1141
          %v1261 = vpack.c.bf16 %v1152, %v1149
          %v1262 = vpack.c.bf16 %v1160, %v1157
          %v1263 = vpack.c.bf16 %v1168, %v1165
          %v1264 = vpack.c.bf16 %v1176, %v1173
          %v1265 = vpack.c.bf16 %v1184, %v1181
          %v1266 = vpack.c.bf16 %v1192, %v1189
          %v1267 = vpack.c.bf16 %v1200, %v1197
          %v1268 = vpack.c.bf16 %v1208, %v1205
          %v1269 = vpack.c.bf16 %v1216, %v1213
          %v1270 = vpack.c.bf16 %v1224, %v1221
          %v1271 = vpack.c.bf16 %v1232, %v1229
          %v1272 = vpack.c.bf16 %v1240, %v1237
          %v1273 = vpack.c.bf16 %v1248, %v1245
          %v1274 = vpack.c.bf16 %v1256, %v1253
          %v1291 = vunpack.c.l.b16 %v269
          %v1292 = vunpack.c.l.b16 %v270
          %v1293 = vunpack.c.l.b16 %v271
          %v1294 = vunpack.c.l.b16 %v272
          %v1295 = vunpack.c.l.b16 %v273
          %v1296 = vunpack.c.l.b16 %v274
          %v1297 = vunpack.c.l.b16 %v275
          %v1298 = vunpack.c.l.b16 %v276
          %v1299 = vunpack.c.l.b16 %v277
          %v1300 = vunpack.c.l.b16 %v278
          %v1301 = vunpack.c.l.b16 %v279
          %v1302 = vunpack.c.l.b16 %v280
          %v1303 = vunpack.c.l.b16 %v281
          %v1304 = vunpack.c.l.b16 %v282
          %v1305 = vunpack.c.l.b16 %v283
          %v1306 = vunpack.c.l.b16 %v284
          %v1307 = vpack.c.b16 %v1292, %v1291
          %v1308 = vpack.c.b16 %v1294, %v1293
          %v1309 = vpack.c.b16 %v1296, %v1295
          %v1310 = vpack.c.b16 %v1298, %v1297
          %v1311 = vpack.c.b16 %v1300, %v1299
          %v1312 = vpack.c.b16 %v1302, %v1301
          %v1313 = vpack.c.b16 %v1304, %v1303
          %v1314 = vpack.c.b16 %v1306, %v1305
          %1323 = vmatprep.subr.bf16.mxu0 0
          %1324 = vmatpush1.bf16.msra.mxu0 %v1307
          %1325 = vmatprep.subr.bf16.mxu0 0
          %1326 = vmatpush1.bf16.msra.mxu0 %v1308
          %1327 = vmatprep.subr.bf16.mxu0 0
          %1328 = vmatpush1.bf16.msra.mxu0 %v1309
          %1329 = vmatprep.subr.bf16.mxu0 0
          %1330 = vmatpush1.bf16.msra.mxu0 %v1310
          %1331 = vmatprep.subr.bf16.mxu0 0
          %1332 = vmatpush1.bf16.msra.mxu0 %v1311
          %1333 = vmatprep.subr.bf16.mxu0 0
          %1334 = vmatpush1.bf16.msra.mxu0 %v1312
          %1335 = vmatprep.subr.bf16.mxu0 0
          %1336 = vmatpush1.bf16.msra.mxu0 %v1313
          %1337 = vmatprep.subr.bf16.mxu0 0
          %1338 = vmatpush1.bf16.msra.mxu0 %v1314
          %1339 = vmatprep.subr.bf16.mxu0 0
          %1340 = vmatpush1.bf16.msra.mxu0 0
          %1341 = vmatprep.subr.bf16.mxu0 0
          %1342 = vmatpush1.bf16.msra.mxu0 0
          %1343 = vmatprep.subr.bf16.mxu0 0
          %1344 = vmatpush1.bf16.msra.mxu0 0
          %1345 = vmatprep.subr.bf16.mxu0 0
          %1346 = vmatpush1.bf16.msra.mxu0 0
          %1347 = vmatprep.subr.bf16.mxu0 0
          %1348 = vmatpush1.bf16.msra.mxu0 0
          %1349 = vmatprep.subr.bf16.mxu0 0
          %1350 = vmatpush1.bf16.msra.mxu0 0
          %1351 = vmatprep.subr.bf16.mxu0 0
          %1352 = vmatpush1.bf16.msra.mxu0 0
          %1353 = vmatprep.subr.bf16.mxu0 0
          %1354 = vmatpush1.bf16.msra.mxu0 0
          %1355 = vmatprep.mubr.bf16.mxu0 0
          %1356 = vmatmul.mubr.bf16.gmra.mrb[0].mxu0 %v1259
          %v1357 = vpop.f32.mrb[0].mxu0
          %v1358 = vadd.f32 0.0, %v1357
          %v1359 = vpop.f32.mrb[0].mxu0
          %v1360 = vpop.f32.mrb[0].mxu0
          %v1361 = vadd.f32 0.0, %v1360
          %v1362 = vpop.f32.mrb[0].mxu0
          %1363 = vmatprep.mubr.bf16.mxu0 0
          %1364 = vmatmul.mubr.bf16.gmra.mrb[0].mxu0 %v1260
          %v1365 = vpop.f32.mrb[0].mxu0
          %v1366 = vadd.f32 0.0, %v1365
          %v1367 = vpop.f32.mrb[0].mxu0
          %v1368 = vpop.f32.mrb[0].mxu0
          %v1369 = vadd.f32 0.0, %v1368
          %v1370 = vpop.f32.mrb[0].mxu0
          %1371 = vmatprep.mubr.bf16.mxu0 0
          %1372 = vmatmul.mubr.bf16.gmra.mrb[0].mxu0 %v1261
          %v1373 = vpop.f32.mrb[0].mxu0
          %v1374 = vadd.f32 0.0, %v1373
          %v1375 = vpop.f32.mrb[0].mxu0
          %v1376 = vpop.f32.mrb[0].mxu0
          %v1377 = vadd.f32 0.0, %v1376
          %v1378 = vpop.f32.mrb[0].mxu0
          %1379 = vmatprep.mubr.bf16.mxu0 0
          %1380 = vmatmul.mubr.bf16.gmra.mrb[0].mxu0 %v1262
          %v1381 = vpop.f32.mrb[0].mxu0
          %v1382 = vadd.f32 0.0, %v1381
          %v1383 = vpop.f32.mrb[0].mxu0
          %v1384 = vpop.f32.mrb[0].mxu0
          %v1385 = vadd.f32 0.0, %v1384
          %v1386 = vpop.f32.mrb[0].mxu0
          %1387 = vmatprep.mubr.bf16.mxu0 0
          %1388 = vmatmul.mubr.bf16.gmra.mrb[0].mxu0 %v1263
          %v1389 = vpop.f32.mrb[0].mxu0
          %v1390 = vadd.f32 0.0, %v1389
          %v1391 = vpop.f32.mrb[0].mxu0
          %v1392 = vpop.f32.mrb[0].mxu0
          %v1393 = vadd.f32 0.0, %v1392
          %v1394 = vpop.f32.mrb[0].mxu0
          %1395 = vmatprep.mubr.bf16.mxu0 0
          %1396 = vmatmul.mubr.bf16.gmra.mrb[0].mxu0 %v1264
          %v1397 = vpop.f32.mrb[0].mxu0
          %v1398 = vadd.f32 0.0, %v1397
          %v1399 = vpop.f32.mrb[0].mxu0
          %v1400 = vpop.f32.mrb[0].mxu0
          %v1401 = vadd.f32 0.0, %v1400
          %v1402 = vpop.f32.mrb[0].mxu0
          %1403 = vmatprep.mubr.bf16.mxu0 0
          %1404 = vmatmul.mubr.bf16.gmra.mrb[0].mxu0 %v1265
          %v1405 = vpop.f32.mrb[0].mxu0
          %v1406 = vadd.f32 0.0, %v1405
          %v1407 = vpop.f32.mrb[0].mxu0
          %v1408 = vpop.f32.mrb[0].mxu0
          %v1409 = vadd.f32 0.0, %v1408
          %v1410 = vpop.f32.mrb[0].mxu0
          %1411 = vmatprep.mubr.bf16.mxu0 0
          %1412 = vmatmul.mubr.bf16.gmra.mrb[0].mxu0 %v1266
          %v1413 = vpop.f32.mrb[0].mxu0
          %v1414 = vadd.f32 0.0, %v1413
          %v1415 = vpop.f32.mrb[0].mxu0
          %v1416 = vpop.f32.mrb[0].mxu0
          %v1417 = vadd.f32 0.0, %v1416
          %v1418 = vpop.f32.mrb[0].mxu0
          %1419 = vmatprep.mubr.bf16.mxu0 0
          %1420 = vmatmul.mubr.bf16.gmra.mrb[0].mxu0 %v1267
          %v1421 = vpop.f32.mrb[0].mxu0
          %v1422 = vadd.f32 0.0, %v1421
          %v1423 = vpop.f32.mrb[0].mxu0
          %v1424 = vpop.f32.mrb[0].mxu0
          %v1425 = vadd.f32 0.0, %v1424
          %v1426 = vpop.f32.mrb[0].mxu0
          %1427 = vmatprep.mubr.bf16.mxu0 0
          %1428 = vmatmul.mubr.bf16.gmra.mrb[0].mxu0 %v1268
          %v1429 = vpop.f32.mrb[0].mxu0
          %v1430 = vadd.f32 0.0, %v1429
          %v1431 = vpop.f32.mrb[0].mxu0
          %v1432 = vpop.f32.mrb[0].mxu0
          %v1433 = vadd.f32 0.0, %v1432
          %v1434 = vpop.f32.mrb[0].mxu0
          %1435 = vmatprep.mubr.bf16.mxu0 0
          %1436 = vmatmul.mubr.bf16.gmra.mrb[0].mxu0 %v1269
          %v1437 = vpop.f32.mrb[0].mxu0
          %v1438 = vadd.f32 0.0, %v1437
          %v1439 = vpop.f32.mrb[0].mxu0
          %v1440 = vpop.f32.mrb[0].mxu0
          %v1441 = vadd.f32 0.0, %v1440
          %v1442 = vpop.f32.mrb[0].mxu0
          %1443 = vmatprep.mubr.bf16.mxu0 0
          %1444 = vmatmul.mubr.bf16.gmra.mrb[0].mxu0 %v1270
          %v1445 = vpop.f32.mrb[0].mxu0
          %v1446 = vadd.f32 0.0, %v1445
          %v1447 = vpop.f32.mrb[0].mxu0
          %v1448 = vpop.f32.mrb[0].mxu0
          %v1449 = vadd.f32 0.0, %v1448
          %v1450 = vpop.f32.mrb[0].mxu0
          %1451 = vmatprep.mubr.bf16.mxu0 0
          %1452 = vmatmul.mubr.bf16.gmra.mrb[0].mxu0 %v1271
          %v1453 = vpop.f32.mrb[0].mxu0
          %v1454 = vadd.f32 0.0, %v1453
          %v1455 = vpop.f32.mrb[0].mxu0
          %v1456 = vpop.f32.mrb[0].mxu0
          %v1457 = vadd.f32 0.0, %v1456
          %v1458 = vpop.f32.mrb[0].mxu0
          %1459 = vmatprep.mubr.bf16.mxu0 0
          %1460 = vmatmul.mubr.bf16.gmra.mrb[0].mxu0 %v1272
          %v1461 = vpop.f32.mrb[0].mxu0
          %v1462 = vadd.f32 0.0, %v1461
          %v1463 = vpop.f32.mrb[0].mxu0
          %v1464 = vpop.f32.mrb[0].mxu0
          %v1465 = vadd.f32 0.0, %v1464
          %v1466 = vpop.f32.mrb[0].mxu0
          %1467 = vmatprep.mubr.bf16.mxu0 0
          %1468 = vmatmul.mubr.bf16.gmra.mrb[0].mxu0 %v1273
          %v1469 = vpop.f32.mrb[0].mxu0
          %v1470 = vadd.f32 0.0, %v1469
          %v1471 = vpop.f32.mrb[0].mxu0
          %v1472 = vpop.f32.mrb[0].mxu0
          %v1473 = vadd.f32 0.0, %v1472
          %v1474 = vpop.f32.mrb[0].mxu0
          %1475 = vmatprep.mubr.bf16.mxu0 0
          %1476 = vmatmul.mubr.bf16.gmra.mrb[0].mxu0 %v1274
          %v1477 = vpop.f32.mrb[0].mxu0
          %v1478 = vadd.f32 0.0, %v1477
          %v1479 = vpop.f32.mrb[0].mxu0
          %v1480 = vpop.f32.mrb[0].mxu0
          %v1481 = vadd.f32 0.0, %v1480
          %v1482 = vpop.f32.mrb[0].mxu0
          %1483 = vdwg.mxu0
          %v1484 = vmax.f32 %v1358, 0.0
          %v1485 = vmax.f32 %v1361, 0.0
          %v1486 = vmax.f32 %v1366, 0.0
          %v1487 = vmax.f32 %v1369, 0.0
          %v1488 = vmax.f32 %v1374, 0.0
          %v1489 = vmax.f32 %v1377, 0.0
          %v1490 = vmax.f32 %v1382, 0.0
          %v1491 = vmax.f32 %v1385, 0.0
          %v1492 = vmax.f32 %v1390, 0.0
          %v1493 = vmax.f32 %v1393, 0.0
          %v1494 = vmax.f32 %v1398, 0.0
          %v1495 = vmax.f32 %v1401, 0.0
          %v1496 = vmax.f32 %v1406, 0.0
          %v1497 = vmax.f32 %v1409, 0.0
          %v1498 = vmax.f32 %v1414, 0.0
          %v1499 = vmax.f32 %v1417, 0.0
          %v1500 = vmax.f32 %v1422, 0.0
          %v1501 = vmax.f32 %v1425, 0.0
          %v1502 = vmax.f32 %v1430, 0.0
          %v1503 = vmax.f32 %v1433, 0.0
          %v1504 = vmax.f32 %v1438, 0.0
          %v1505 = vmax.f32 %v1441, 0.0
          %v1506 = vmax.f32 %v1446, 0.0
          %v1507 = vmax.f32 %v1449, 0.0
          %v1508 = vmax.f32 %v1454, 0.0
          %v1509 = vmax.f32 %v1457, 0.0
          %v1510 = vmax.f32 %v1462, 0.0
          %v1511 = vmax.f32 %v1465, 0.0
          %v1512 = vmax.f32 %v1470, 0.0
          %v1513 = vmax.f32 %v1473, 0.0
          %v1514 = vmax.f32 %v1478, 0.0
          %v1515 = vmax.f32 %v1481, 0.0
          %v1516 = vpack.c.bf16 %v1485, %v1484
          %v1517 = vpack.c.bf16 %v1487, %v1486
          %v1518 = vpack.c.bf16 %v1489, %v1488
          %v1519 = vpack.c.bf16 %v1491, %v1490
          %v1520 = vpack.c.bf16 %v1493, %v1492
          %v1521 = vpack.c.bf16 %v1495, %v1494
          %v1522 = vpack.c.bf16 %v1497, %v1496
          %v1523 = vpack.c.bf16 %v1499, %v1498
          %v1524 = vpack.c.bf16 %v1501, %v1500
          %v1525 = vpack.c.bf16 %v1503, %v1502
          %v1526 = vpack.c.bf16 %v1505, %v1504
          %v1527 = vpack.c.bf16 %v1507, %v1506
          %v1528 = vpack.c.bf16 %v1509, %v1508
          %v1529 = vpack.c.bf16 %v1511, %v1510
          %v1530 = vpack.c.bf16 %v1513, %v1512
          %v1531 = vpack.c.bf16 %v1515, %v1514
          %s1532 = sshra.s32 %s291, 4
          %s1533 = sand.u32 %s291, 15
          %s1534 = smul.addr %s1532, 8
          %s1535 = scalar_lea.vmem [#allocation2], %s1534
          %1536 = vst [vmem:[%s1535] sm:$0xff] %v1516
          %1537 = vst [vmem:[%s1535 + $0x8] sm:$0xff] %v1517
          %1538 = vst [vmem:[%s1535 + $0x10] sm:$0xff] %v1518
          %1539 = vst [vmem:[%s1535 + $0x18] sm:$0xff] %v1519
          %1540 = vst [vmem:[%s1535 + $0x20] sm:$0xff] %v1520
          %1541 = vst [vmem:[%s1535 + $0x28] sm:$0xff] %v1521
          %1542 = vst [vmem:[%s1535 + $0x30] sm:$0xff] %v1522
          %1543 = vst [vmem:[%s1535 + $0x38] sm:$0xff] %v1523
          %1544 = vst [vmem:[%s1535 + $0x40] sm:$0xff] %v1524
          %1545 = vst [vmem:[%s1535 + $0x48] sm:$0xff] %v1525
          %1546 = vst [vmem:[%s1535 + $0x50] sm:$0xff] %v1526
          %1547 = vst [vmem:[%s1535 + $0x58] sm:$0xff] %v1527
          %1548 = vst [vmem:[%s1535 + $0x60] sm:$0xff] %v1528
          %1549 = vst [vmem:[%s1535 + $0x68] sm:$0xff] %v1529
          %1550 = vst [vmem:[%s1535 + $0x70] sm:$0xff] %v1530
          %1551 = vst [vmem:[%s1535 + $0x78] sm:$0xff] %v1531
        $region53: #{han_sage_forward.2} parent=35 // loop_footer
          %s290 = sadd.s32 1, %s286
        $region54: #{han_sage_forward.2} parent=35 // loop_footer_branch
          %285 = sbr.rel target = $region50
        $region55: #{han_sage_forward.2} parent=35 // loop_exit
          _
        %s1552 = scalar_lea.vmem %s235, 64 [#allocation8]
        %v1553 = vld [vmem:[%s1552] sm:$0xf]
        %v1554 = vld [vmem:[%s1552 + $0x4] sm:$0xf]
        %v1555 = vld [vmem:[%s1552 + $0x8] sm:$0xf]
        %v1556 = vld [vmem:[%s1552 + $0xc] sm:$0xf]
        %v1557 = vld [vmem:[%s1552 + $0x10] sm:$0xf]
        %v1558 = vld [vmem:[%s1552 + $0x14] sm:$0xf]
        %v1559 = vld [vmem:[%s1552 + $0x18] sm:$0xf]
        %v1560 = vld [vmem:[%s1552 + $0x1c] sm:$0xf]
        %v1561 = vld [vmem:[%s1552 + $0x20] sm:$0xf]
        %v1562 = vld [vmem:[%s1552 + $0x24] sm:$0xf]
        %v1563 = vld [vmem:[%s1552 + $0x28] sm:$0xf]
        %v1564 = vld [vmem:[%s1552 + $0x2c] sm:$0xf]
        %v1565 = vld [vmem:[%s1552 + $0x30] sm:$0xf]
        %v1566 = vld [vmem:[%s1552 + $0x34] sm:$0xf]
        %v1567 = vld [vmem:[%s1552 + $0x38] sm:$0xf]
        %v1568 = vld [vmem:[%s1552 + $0x3c] sm:$0xf]
        loop: start=0, step=1, limit=2
        $region56: #{han_sage_forward.2} parent=35 // loop_pre_header
          _
        $region57: #{han_sage_forward.2} parent=35 // loop_header
          %s1570 = sphi 0, %s1574
          %p1571 = scmp.ge.s32.totalorder %s1570, 2
        $region58: #{han_sage_forward.2} parent=35 // loop_header_branch
          %1573 = sbr.rel (%p1571) target = $region62
        $region59: #{han_sage_forward.2} parent=35 // loop_body
          %s1575 = smul.u32 %s1570, 256
          %s1576 = sshra.s32 %s1575, 3
          %s1577 = sand.u32 %s1575, 7
          %s1578 = smul.u32 %s1576, 4
          %s1579 = smul.addr %s1578, 4
          %s1580 = scalar_lea.vmem %s222, %s1579 [#allocation4]
          %v1581 = vld [vmem:[%s1580] sm:$0xff]
          %v1582 = vld [vmem:[%s1580 + $0x8] sm:$0xff]
          %v1583 = vld [vmem:[%s1580 + $0x10] sm:$0xff]
          %v1584 = vld [vmem:[%s1580 + $0x18] sm:$0xff]
          %v1585 = vld [vmem:[%s1580 + $0x20] sm:$0xff]
          %v1586 = vld [vmem:[%s1580 + $0x28] sm:$0xff]
          %v1587 = vld [vmem:[%s1580 + $0x30] sm:$0xff]
          %v1588 = vld [vmem:[%s1580 + $0x38] sm:$0xff]
          %v1589 = vld [vmem:[%s1580 + $0x40] sm:$0xff]
          %v1590 = vld [vmem:[%s1580 + $0x48] sm:$0xff]
          %v1591 = vld [vmem:[%s1580 + $0x50] sm:$0xff]
          %v1592 = vld [vmem:[%s1580 + $0x58] sm:$0xff]
          %v1593 = vld [vmem:[%s1580 + $0x60] sm:$0xff]
          %v1594 = vld [vmem:[%s1580 + $0x68] sm:$0xff]
          %v1595 = vld [vmem:[%s1580 + $0x70] sm:$0xff]
          %v1596 = vld [vmem:[%s1580 + $0x78] sm:$0xff]
          %v1597 = vld [vmem:[%s1580 + $0x80] sm:$0xff]
          %v1598 = vld [vmem:[%s1580 + $0x88] sm:$0xff]
          %v1599 = vld [vmem:[%s1580 + $0x90] sm:$0xff]
          %v1600 = vld [vmem:[%s1580 + $0x98] sm:$0xff]
          %v1601 = vld [vmem:[%s1580 + $0xa0] sm:$0xff]
          %v1602 = vld [vmem:[%s1580 + $0xa8] sm:$0xff]
          %v1603 = vld [vmem:[%s1580 + $0xb0] sm:$0xff]
          %v1604 = vld [vmem:[%s1580 + $0xb8] sm:$0xff]
          %v1605 = vld [vmem:[%s1580 + $0xc0] sm:$0xff]
          %v1606 = vld [vmem:[%s1580 + $0xc8] sm:$0xff]
          %v1607 = vld [vmem:[%s1580 + $0xd0] sm:$0xff]
          %v1608 = vld [vmem:[%s1580 + $0xd8] sm:$0xff]
          %v1609 = vld [vmem:[%s1580 + $0xe0] sm:$0xff]
          %v1610 = vld [vmem:[%s1580 + $0xe8] sm:$0xff]
          %v1611 = vld [vmem:[%s1580 + $0xf0] sm:$0xff]
          %v1612 = vld [vmem:[%s1580 + $0xf8] sm:$0xff]
          %v1613 = vld [vmem:[%s1580 + $0x100] sm:$0xff]
          %v1614 = vld [vmem:[%s1580 + $0x108] sm:$0xff]
          %v1615 = vld [vmem:[%s1580 + $0x110] sm:$0xff]
          %v1616 = vld [vmem:[%s1580 + $0x118] sm:$0xff]
          %v1617 = vld [vmem:[%s1580 + $0x120] sm:$0xff]
          %v1618 = vld [vmem:[%s1580 + $0x128] sm:$0xff]
          %v1619 = vld [vmem:[%s1580 + $0x130] sm:$0xff]
          %v1620 = vld [vmem:[%s1580 + $0x138] sm:$0xff]
          %v1621 = vld [vmem:[%s1580 + $0x140] sm:$0xff]
          %v1622 = vld [vmem:[%s1580 + $0x148] sm:$0xff]
          %v1623 = vld [vmem:[%s1580 + $0x150] sm:$0xff]
          %v1624 = vld [vmem:[%s1580 + $0x158] sm:$0xff]
          %v1625 = vld [vmem:[%s1580 + $0x160] sm:$0xff]
          %v1626 = vld [vmem:[%s1580 + $0x168] sm:$0xff]
          %v1627 = vld [vmem:[%s1580 + $0x170] sm:$0xff]
          %v1628 = vld [vmem:[%s1580 + $0x178] sm:$0xff]
          %v1629 = vld [vmem:[%s1580 + $0x180] sm:$0xff]
          %v1630 = vld [vmem:[%s1580 + $0x188] sm:$0xff]
          %v1631 = vld [vmem:[%s1580 + $0x190] sm:$0xff]
          %v1632 = vld [vmem:[%s1580 + $0x198] sm:$0xff]
          %v1633 = vld [vmem:[%s1580 + $0x1a0] sm:$0xff]
          %v1634 = vld [vmem:[%s1580 + $0x1a8] sm:$0xff]
          %v1635 = vld [vmem:[%s1580 + $0x1b0] sm:$0xff]
          %v1636 = vld [vmem:[%s1580 + $0x1b8] sm:$0xff]
          %v1637 = vld [vmem:[%s1580 + $0x1c0] sm:$0xff]
          %v1638 = vld [vmem:[%s1580 + $0x1c8] sm:$0xff]
          %v1639 = vld [vmem:[%s1580 + $0x1d0] sm:$0xff]
          %v1640 = vld [vmem:[%s1580 + $0x1d8] sm:$0xff]
          %v1641 = vld [vmem:[%s1580 + $0x1e0] sm:$0xff]
          %v1642 = vld [vmem:[%s1580 + $0x1e8] sm:$0xff]
          %v1643 = vld [vmem:[%s1580 + $0x1f0] sm:$0xff]
          %v1644 = vld [vmem:[%s1580 + $0x1f8] sm:$0xff]
          %v1645 = vld [vmem:[#allocation2] sm:$0xff]
          %v1646 = vld [vmem:[#allocation2 + $0x8] sm:$0xff]
          %v1647 = vld [vmem:[#allocation2 + $0x10] sm:$0xff]
          %v1648 = vld [vmem:[#allocation2 + $0x18] sm:$0xff]
          %v1649 = vld [vmem:[#allocation2 + $0x20] sm:$0xff]
          %v1650 = vld [vmem:[#allocation2 + $0x28] sm:$0xff]
          %v1651 = vld [vmem:[#allocation2 + $0x30] sm:$0xff]
          %v1652 = vld [vmem:[#allocation2 + $0x38] sm:$0xff]
          %v1653 = vld [vmem:[#allocation2 + $0x40] sm:$0xff]
          %v1654 = vld [vmem:[#allocation2 + $0x48] sm:$0xff]
          %v1655 = vld [vmem:[#allocation2 + $0x50] sm:$0xff]
          %v1656 = vld [vmem:[#allocation2 + $0x58] sm:$0xff]
          %v1657 = vld [vmem:[#allocation2 + $0x60] sm:$0xff]
          %v1658 = vld [vmem:[#allocation2 + $0x68] sm:$0xff]
          %v1659 = vld [vmem:[#allocation2 + $0x70] sm:$0xff]
          %v1660 = vld [vmem:[#allocation2 + $0x78] sm:$0xff]
          %v1661 = vld [vmem:[#allocation2 + $0x80] sm:$0xff]
          %v1662 = vld [vmem:[#allocation2 + $0x88] sm:$0xff]
          %v1663 = vld [vmem:[#allocation2 + $0x90] sm:$0xff]
          %v1664 = vld [vmem:[#allocation2 + $0x98] sm:$0xff]
          %v1665 = vld [vmem:[#allocation2 + $0xa0] sm:$0xff]
          %v1666 = vld [vmem:[#allocation2 + $0xa8] sm:$0xff]
          %v1667 = vld [vmem:[#allocation2 + $0xb0] sm:$0xff]
          %v1668 = vld [vmem:[#allocation2 + $0xb8] sm:$0xff]
          %v1669 = vld [vmem:[#allocation2 + $0xc0] sm:$0xff]
          %v1670 = vld [vmem:[#allocation2 + $0xc8] sm:$0xff]
          %v1671 = vld [vmem:[#allocation2 + $0xd0] sm:$0xff]
          %v1672 = vld [vmem:[#allocation2 + $0xd8] sm:$0xff]
          %v1673 = vld [vmem:[#allocation2 + $0xe0] sm:$0xff]
          %v1674 = vld [vmem:[#allocation2 + $0xe8] sm:$0xff]
          %v1675 = vld [vmem:[#allocation2 + $0xf0] sm:$0xff]
          %v1676 = vld [vmem:[#allocation2 + $0xf8] sm:$0xff]
          %v1741 = vunpack.c.l.b16 %v1581
          %v1742 = vunpack.c.h.b16 %v1581
          %v1743 = vunpack.c.l.b16 %v1582
          %v1744 = vunpack.c.h.b16 %v1582
          %v1745 = vunpack.c.l.b16 %v1583
          %v1746 = vunpack.c.h.b16 %v1583
          %v1747 = vunpack.c.l.b16 %v1584
          %v1748 = vunpack.c.h.b16 %v1584
          %v1749 = vunpack.c.l.b16 %v1585
          %v1750 = vunpack.c.h.b16 %v1585
          %v1751 = vunpack.c.l.b16 %v1586
          %v1752 = vunpack.c.h.b16 %v1586
          %v1753 = vunpack.c.l.b16 %v1587
          %v1754 = vunpack.c.h.b16 %v1587
          %v1755 = vunpack.c.l.b16 %v1588
          %v1756 = vunpack.c.h.b16 %v1588
          %v1757 = vunpack.c.l.b16 %v1589
          %v1758 = vunpack.c.h.b16 %v1589
          %v1759 = vunpack.c.l.b16 %v1590
          %v1760 = vunpack.c.h.b16 %v1590
          %v1761 = vunpack.c.l.b16 %v1591
          %v1762 = vunpack.c.h.b16 %v1591
          %v1763 = vunpack.c.l.b16 %v1592
          %v1764 = vunpack.c.h.b16 %v1592
          %v1765 = vunpack.c.l.b16 %v1593
          %v1766 = vunpack.c.h.b16 %v1593
          %v1767 = vunpack.c.l.b16 %v1594
          %v1768 = vunpack.c.h.b16 %v1594
          %v1769 = vunpack.c.l.b16 %v1595
          %v1770 = vunpack.c.h.b16 %v1595
          %v1771 = vunpack.c.l.b16 %v1596
          %v1772 = vunpack.c.h.b16 %v1596
          %v1773 = vunpack.c.l.b16 %v1597
          %v1774 = vunpack.c.h.b16 %v1597
          %v1775 = vunpack.c.l.b16 %v1598
          %v1776 = vunpack.c.h.b16 %v1598
          %v1777 = vunpack.c.l.b16 %v1599
          %v1778 = vunpack.c.h.b16 %v1599
          %v1779 = vunpack.c.l.b16 %v1600
          %v1780 = vunpack.c.h.b16 %v1600
          %v1781 = vunpack.c.l.b16 %v1601
          %v1782 = vunpack.c.h.b16 %v1601
          %v1783 = vunpack.c.l.b16 %v1602
          %v1784 = vunpack.c.h.b16 %v1602
          %v1785 = vunpack.c.l.b16 %v1603
          %v1786 = vunpack.c.h.b16 %v1603
          %v1787 = vunpack.c.l.b16 %v1604
          %v1788 = vunpack.c.h.b16 %v1604
          %v1789 = vunpack.c.l.b16 %v1605
          %v1790 = vunpack.c.h.b16 %v1605
          %v1791 = vunpack.c.l.b16 %v1606
          %v1792 = vunpack.c.h.b16 %v1606
          %v1793 = vunpack.c.l.b16 %v1607
          %v1794 = vunpack.c.h.b16 %v1607
          %v1795 = vunpack.c.l.b16 %v1608
          %v1796 = vunpack.c.h.b16 %v1608
          %v1797 = vunpack.c.l.b16 %v1609
          %v1798 = vunpack.c.h.b16 %v1609
          %v1799 = vunpack.c.l.b16 %v1610
          %v1800 = vunpack.c.h.b16 %v1610
          %v1801 = vunpack.c.l.b16 %v1611
          %v1802 = vunpack.c.h.b16 %v1611
          %v1803 = vunpack.c.l.b16 %v1612
          %v1804 = vunpack.c.h.b16 %v1612
          %v1805 = vunpack.c.l.b16 %v1613
          %v1806 = vunpack.c.h.b16 %v1613
          %v1807 = vunpack.c.l.b16 %v1614
          %v1808 = vunpack.c.h.b16 %v1614
          %v1809 = vunpack.c.l.b16 %v1615
          %v1810 = vunpack.c.h.b16 %v1615
          %v1811 = vunpack.c.l.b16 %v1616
          %v1812 = vunpack.c.h.b16 %v1616
          %v1813 = vunpack.c.l.b16 %v1617
          %v1814 = vunpack.c.h.b16 %v1617
          %v1815 = vunpack.c.l.b16 %v1618
          %v1816 = vunpack.c.h.b16 %v1618
          %v1817 = vunpack.c.l.b16 %v1619
          %v1818 = vunpack.c.h.b16 %v1619
          %v1819 = vunpack.c.l.b16 %v1620
          %v1820 = vunpack.c.h.b16 %v1620
          %v1821 = vunpack.c.l.b16 %v1621
          %v1822 = vunpack.c.h.b16 %v1621
          %v1823 = vunpack.c.l.b16 %v1622
          %v1824 = vunpack.c.h.b16 %v1622
          %v1825 = vunpack.c.l.b16 %v1623
          %v1826 = vunpack.c.h.b16 %v1623
          %v1827 = vunpack.c.l.b16 %v1624
          %v1828 = vunpack.c.h.b16 %v1624
          %v1829 = vunpack.c.l.b16 %v1625
          %v1830 = vunpack.c.h.b16 %v1625
          %v1831 = vunpack.c.l.b16 %v1626
          %v1832 = vunpack.c.h.b16 %v1626
          %v1833 = vunpack.c.l.b16 %v1627
          %v1834 = vunpack.c.h.b16 %v1627
          %v1835 = vunpack.c.l.b16 %v1628
          %v1836 = vunpack.c.h.b16 %v1628
          %v1837 = vunpack.c.l.b16 %v1629
          %v1838 = vunpack.c.h.b16 %v1629
          %v1839 = vunpack.c.l.b16 %v1630
          %v1840 = vunpack.c.h.b16 %v1630
          %v1841 = vunpack.c.l.b16 %v1631
          %v1842 = vunpack.c.h.b16 %v1631
          %v1843 = vunpack.c.l.b16 %v1632
          %v1844 = vunpack.c.h.b16 %v1632
          %v1845 = vunpack.c.l.b16 %v1633
          %v1846 = vunpack.c.h.b16 %v1633
          %v1847 = vunpack.c.l.b16 %v1634
          %v1848 = vunpack.c.h.b16 %v1634
          %v1849 = vunpack.c.l.b16 %v1635
          %v1850 = vunpack.c.h.b16 %v1635
          %v1851 = vunpack.c.l.b16 %v1636
          %v1852 = vunpack.c.h.b16 %v1636
          %v1853 = vunpack.c.l.b16 %v1637
          %v1854 = vunpack.c.h.b16 %v1637
          %v1855 = vunpack.c.l.b16 %v1638
          %v1856 = vunpack.c.h.b16 %v1638
          %v1857 = vunpack.c.l.b16 %v1639
          %v1858 = vunpack.c.h.b16 %v1639
          %v1859 = vunpack.c.l.b16 %v1640
          %v1860 = vunpack.c.h.b16 %v1640
          %v1861 = vunpack.c.l.b16 %v1641
          %v1862 = vunpack.c.h.b16 %v1641
          %v1863 = vunpack.c.l.b16 %v1642
          %v1864 = vunpack.c.h.b16 %v1642
          %v1865 = vunpack.c.l.b16 %v1643
          %v1866 = vunpack.c.h.b16 %v1643
          %v1867 = vunpack.c.l.b16 %v1644
          %v1868 = vunpack.c.h.b16 %v1644
          %v1869 = vpack.c.b16 %v1745, %v1741
          %v1870 = vpack.c.b16 %v1746, %v1742
          %v1871 = vpack.c.b16 %v1747, %v1743
          %v1872 = vpack.c.b16 %v1748, %v1744
          %v1873 = vpack.c.b16 %v1753, %v1749
          %v1874 = vpack.c.b16 %v1754, %v1750
          %v1875 = vpack.c.b16 %v1755, %v1751
          %v1876 = vpack.c.b16 %v1756, %v1752
          %v1877 = vpack.c.b16 %v1761, %v1757
          %v1878 = vpack.c.b16 %v1762, %v1758
          %v1879 = vpack.c.b16 %v1763, %v1759
          %v1880 = vpack.c.b16 %v1764, %v1760
          %v1881 = vpack.c.b16 %v1769, %v1765
          %v1882 = vpack.c.b16 %v1770, %v1766
          %v1883 = vpack.c.b16 %v1771, %v1767
          %v1884 = vpack.c.b16 %v1772, %v1768
          %v1885 = vpack.c.b16 %v1777, %v1773
          %v1886 = vpack.c.b16 %v1778, %v1774
          %v1887 = vpack.c.b16 %v1779, %v1775
          %v1888 = vpack.c.b16 %v1780, %v1776
          %v1889 = vpack.c.b16 %v1785, %v1781
          %v1890 = vpack.c.b16 %v1786, %v1782
          %v1891 = vpack.c.b16 %v1787, %v1783
          %v1892 = vpack.c.b16 %v1788, %v1784
          %v1893 = vpack.c.b16 %v1793, %v1789
          %v1894 = vpack.c.b16 %v1794, %v1790
          %v1895 = vpack.c.b16 %v1795, %v1791
          %v1896 = vpack.c.b16 %v1796, %v1792
          %v1897 = vpack.c.b16 %v1801, %v1797
          %v1898 = vpack.c.b16 %v1802, %v1798
          %v1899 = vpack.c.b16 %v1803, %v1799
          %v1900 = vpack.c.b16 %v1804, %v1800
          %v1901 = vpack.c.b16 %v1809, %v1805
          %v1902 = vpack.c.b16 %v1810, %v1806
          %v1903 = vpack.c.b16 %v1811, %v1807
          %v1904 = vpack.c.b16 %v1812, %v1808
          %v1905 = vpack.c.b16 %v1817, %v1813
          %v1906 = vpack.c.b16 %v1818, %v1814
          %v1907 = vpack.c.b16 %v1819, %v1815
          %v1908 = vpack.c.b16 %v1820, %v1816
          %v1909 = vpack.c.b16 %v1825, %v1821
          %v1910 = vpack.c.b16 %v1826, %v1822
          %v1911 = vpack.c.b16 %v1827, %v1823
          %v1912 = vpack.c.b16 %v1828, %v1824
          %v1913 = vpack.c.b16 %v1833, %v1829
          %v1914 = vpack.c.b16 %v1834, %v1830
          %v1915 = vpack.c.b16 %v1835, %v1831
          %v1916 = vpack.c.b16 %v1836, %v1832
          %v1917 = vpack.c.b16 %v1841, %v1837
          %v1918 = vpack.c.b16 %v1842, %v1838
          %v1919 = vpack.c.b16 %v1843, %v1839
          %v1920 = vpack.c.b16 %v1844, %v1840
          %v1921 = vpack.c.b16 %v1849, %v1845
          %v1922 = vpack.c.b16 %v1850, %v1846
          %v1923 = vpack.c.b16 %v1851, %v1847
          %v1924 = vpack.c.b16 %v1852, %v1848
          %v1925 = vpack.c.b16 %v1857, %v1853
          %v1926 = vpack.c.b16 %v1858, %v1854
          %v1927 = vpack.c.b16 %v1859, %v1855
          %v1928 = vpack.c.b16 %v1860, %v1856
          %v1929 = vpack.c.b16 %v1865, %v1861
          %v1930 = vpack.c.b16 %v1866, %v1862
          %v1931 = vpack.c.b16 %v1867, %v1863
          %v1932 = vpack.c.b16 %v1868, %v1864
          %1997 = vmatprep.subr.bf16.mxu0 0
          %1998 = vmatpush1.bf16.msra.mxu0 %v1645
          %1999 = vmatprep.subr.bf16.mxu0 0
          %2000 = vmatpush1.bf16.msra.mxu0 %v1646
          %2001 = vmatprep.subr.bf16.mxu0 0
          %2002 = vmatpush1.bf16.msra.mxu0 %v1647
          %2003 = vmatprep.subr.bf16.mxu0 0
          %2004 = vmatpush1.bf16.msra.mxu0 %v1648
          %2005 = vmatprep.subr.bf16.mxu0 0
          %2006 = vmatpush1.bf16.msra.mxu0 %v1649
          %2007 = vmatprep.subr.bf16.mxu0 0
          %2008 = vmatpush1.bf16.msra.mxu0 %v1650
          %2009 = vmatprep.subr.bf16.mxu0 0
          %2010 = vmatpush1.bf16.msra.mxu0 %v1651
          %2011 = vmatprep.subr.bf16.mxu0 0
          %2012 = vmatpush1.bf16.msra.mxu0 %v1652
          %2013 = vmatprep.subr.bf16.mxu0 0
          %2014 = vmatpush1.bf16.msra.mxu0 %v1653
          %2015 = vmatprep.subr.bf16.mxu0 0
          %2016 = vmatpush1.bf16.msra.mxu0 %v1654
          %2017 = vmatprep.subr.bf16.mxu0 0
          %2018 = vmatpush1.bf16.msra.mxu0 %v1655
          %2019 = vmatprep.subr.bf16.mxu0 0
          %2020 = vmatpush1.bf16.msra.mxu0 %v1656
          %2021 = vmatprep.subr.bf16.mxu0 0
          %2022 = vmatpush1.bf16.msra.mxu0 %v1657
          %2023 = vmatprep.subr.bf16.mxu0 0
          %2024 = vmatpush1.bf16.msra.mxu0 %v1658
          %2025 = vmatprep.subr.bf16.mxu0 0
          %2026 = vmatpush1.bf16.msra.mxu0 %v1659
          %2027 = vmatprep.subr.bf16.mxu0 0
          %2028 = vmatpush1.bf16.msra.mxu0 %v1660
          %2029 = vmatprep.mubr.bf16.mxu0 %v1870
          %2030 = vmatmul.mubr.bf16.gmra.mrb[0].mxu0 %v1869
          %v2031 = vpop.f32.mrb[0].mxu0
          %v2032 = vadd.f32 0.0, %v2031
          %v2033 = vpop.f32.mrb[0].mxu0
          %v2034 = vpop.f32.mrb[0].mxu0
          %v2035 = vadd.f32 0.0, %v2034
          %v2036 = vpop.f32.mrb[0].mxu0
          %2037 = vmatprep.mubr.bf16.mxu0 %v1874
          %2038 = vmatmul.mubr.bf16.gmra.mrb[0].mxu0 %v1873
          %v2039 = vpop.f32.mrb[0].mxu0
          %v2040 = vadd.f32 0.0, %v2039
          %v2041 = vpop.f32.mrb[0].mxu0
          %v2042 = vpop.f32.mrb[0].mxu0
          %v2043 = vadd.f32 0.0, %v2042
          %v2044 = vpop.f32.mrb[0].mxu0
          %2045 = vmatprep.mubr.bf16.mxu0 %v1878
          %2046 = vmatmul.mubr.bf16.gmra.mrb[0].mxu0 %v1877
          %v2047 = vpop.f32.mrb[0].mxu0
          %v2048 = vadd.f32 0.0, %v2047
          %v2049 = vpop.f32.mrb[0].mxu0
          %v2050 = vpop.f32.mrb[0].mxu0
          %v2051 = vadd.f32 0.0, %v2050
          %v2052 = vpop.f32.mrb[0].mxu0
          %2053 = vmatprep.mubr.bf16.mxu0 %v1882
          %2054 = vmatmul.mubr.bf16.gmra.mrb[0].mxu0 %v1881
          %v2055 = vpop.f32.mrb[0].mxu0
          %v2056 = vadd.f32 0.0, %v2055
          %v2057 = vpop.f32.mrb[0].mxu0
          %v2058 = vpop.f32.mrb[0].mxu0
          %v2059 = vadd.f32 0.0, %v2058
          %v2060 = vpop.f32.mrb[0].mxu0
          %2061 = vmatprep.mubr.bf16.mxu0 %v1886
          %2062 = vmatmul.mubr.bf16.gmra.mrb[0].mxu0 %v1885
          %v2063 = vpop.f32.mrb[0].mxu0
          %v2064 = vadd.f32 0.0, %v2063
          %v2065 = vpop.f32.mrb[0].mxu0
          %v2066 = vpop.f32.mrb[0].mxu0
          %v2067 = vadd.f32 0.0, %v2066
          %v2068 = vpop.f32.mrb[0].mxu0
          %2069 = vmatprep.mubr.bf16.mxu0 %v1890
          %2070 = vmatmul.mubr.bf16.gmra.mrb[0].mxu0 %v1889
          %v2071 = vpop.f32.mrb[0].mxu0
          %v2072 = vadd.f32 0.0, %v2071
          %v2073 = vpop.f32.mrb[0].mxu0
          %v2074 = vpop.f32.mrb[0].mxu0
          %v2075 = vadd.f32 0.0, %v2074
          %v2076 = vpop.f32.mrb[0].mxu0
          %2077 = vmatprep.mubr.bf16.mxu0 %v1894
          %2078 = vmatmul.mubr.bf16.gmra.mrb[0].mxu0 %v1893
          %v2079 = vpop.f32.mrb[0].mxu0
          %v2080 = vadd.f32 0.0, %v2079
          %v2081 = vpop.f32.mrb[0].mxu0
          %v2082 = vpop.f32.mrb[0].mxu0
          %v2083 = vadd.f32 0.0, %v2082
          %v2084 = vpop.f32.mrb[0].mxu0
          %2085 = vmatprep.mubr.bf16.mxu0 %v1898
          %2086 = vmatmul.mubr.bf16.gmra.mrb[0].mxu0 %v1897
          %v2087 = vpop.f32.mrb[0].mxu0
          %v2088 = vadd.f32 0.0, %v2087
          %v2089 = vpop.f32.mrb[0].mxu0
          %v2090 = vpop.f32.mrb[0].mxu0
          %v2091 = vadd.f32 0.0, %v2090
          %v2092 = vpop.f32.mrb[0].mxu0
          %2093 = vmatprep.mubr.bf16.mxu0 %v1902
          %2094 = vmatmul.mubr.bf16.gmra.mrb[0].mxu0 %v1901
          %v2095 = vpop.f32.mrb[0].mxu0
          %v2096 = vadd.f32 0.0, %v2095
          %v2097 = vpop.f32.mrb[0].mxu0
          %v2098 = vpop.f32.mrb[0].mxu0
          %v2099 = vadd.f32 0.0, %v2098
          %v2100 = vpop.f32.mrb[0].mxu0
          %2101 = vmatprep.mubr.bf16.mxu0 %v1906
          %2102 = vmatmul.mubr.bf16.gmra.mrb[0].mxu0 %v1905
          %v2103 = vpop.f32.mrb[0].mxu0
          %v2104 = vadd.f32 0.0, %v2103
          %v2105 = vpop.f32.mrb[0].mxu0
          %v2106 = vpop.f32.mrb[0].mxu0
          %v2107 = vadd.f32 0.0, %v2106
          %v2108 = vpop.f32.mrb[0].mxu0
          %2109 = vmatprep.mubr.bf16.mxu0 %v1910
          %2110 = vmatmul.mubr.bf16.gmra.mrb[0].mxu0 %v1909
          %v2111 = vpop.f32.mrb[0].mxu0
          %v2112 = vadd.f32 0.0, %v2111
          %v2113 = vpop.f32.mrb[0].mxu0
          %v2114 = vpop.f32.mrb[0].mxu0
          %v2115 = vadd.f32 0.0, %v2114
          %v2116 = vpop.f32.mrb[0].mxu0
          %2117 = vmatprep.mubr.bf16.mxu0 %v1914
          %2118 = vmatmul.mubr.bf16.gmra.mrb[0].mxu0 %v1913
          %v2119 = vpop.f32.mrb[0].mxu0
          %v2120 = vadd.f32 0.0, %v2119
          %v2121 = vpop.f32.mrb[0].mxu0
          %v2122 = vpop.f32.mrb[0].mxu0
          %v2123 = vadd.f32 0.0, %v2122
          %v2124 = vpop.f32.mrb[0].mxu0
          %2125 = vmatprep.mubr.bf16.mxu0 %v1918
          %2126 = vmatmul.mubr.bf16.gmra.mrb[0].mxu0 %v1917
          %v2127 = vpop.f32.mrb[0].mxu0
          %v2128 = vadd.f32 0.0, %v2127
          %v2129 = vpop.f32.mrb[0].mxu0
          %v2130 = vpop.f32.mrb[0].mxu0
          %v2131 = vadd.f32 0.0, %v2130
          %v2132 = vpop.f32.mrb[0].mxu0
          %2133 = vmatprep.mubr.bf16.mxu0 %v1922
          %2134 = vmatmul.mubr.bf16.gmra.mrb[0].mxu0 %v1921
          %v2135 = vpop.f32.mrb[0].mxu0
          %v2136 = vadd.f32 0.0, %v2135
          %v2137 = vpop.f32.mrb[0].mxu0
          %v2138 = vpop.f32.mrb[0].mxu0
          %v2139 = vadd.f32 0.0, %v2138
          %v2140 = vpop.f32.mrb[0].mxu0
          %2141 = vmatprep.mubr.bf16.mxu0 %v1926
          %2142 = vmatmul.mubr.bf16.gmra.mrb[0].mxu0 %v1925
          %v2143 = vpop.f32.mrb[0].mxu0
          %v2144 = vadd.f32 0.0, %v2143
          %v2145 = vpop.f32.mrb[0].mxu0
          %v2146 = vpop.f32.mrb[0].mxu0
          %v2147 = vadd.f32 0.0, %v2146
          %v2148 = vpop.f32.mrb[0].mxu0
          %2149 = vmatprep.mubr.bf16.mxu0 %v1930
          %2150 = vmatmul.mubr.bf16.gmra.mrb[0].mxu0 %v1929
          %v2151 = vpop.f32.mrb[0].mxu0
          %v2152 = vadd.f32 0.0, %v2151
          %v2153 = vpop.f32.mrb[0].mxu0
          %v2154 = vpop.f32.mrb[0].mxu0
          %v2155 = vadd.f32 0.0, %v2154
          %v2156 = vpop.f32.mrb[0].mxu0
          %2157 = vdwg.mxu0
          %2158 = vmatprep.subr.bf16.mxu0 0
          %2159 = vmatpush1.bf16.msra.mxu0 %v1661
          %2160 = vmatprep.subr.bf16.mxu0 0
          %2161 = vmatpush1.bf16.msra.mxu0 %v1662
          %2162 = vmatprep.subr.bf16.mxu0 0
          %2163 = vmatpush1.bf16.msra.mxu0 %v1663
          %2164 = vmatprep.subr.bf16.mxu0 0
          %2165 = vmatpush1.bf16.msra.mxu0 %v1664
          %2166 = vmatprep.subr.bf16.mxu0 0
          %2167 = vmatpush1.bf16.msra.mxu0 %v1665
          %2168 = vmatprep.subr.bf16.mxu0 0
          %2169 = vmatpush1.bf16.msra.mxu0 %v1666
          %2170 = vmatprep.subr.bf16.mxu0 0
          %2171 = vmatpush1.bf16.msra.mxu0 %v1667
          %2172 = vmatprep.subr.bf16.mxu0 0
          %2173 = vmatpush1.bf16.msra.mxu0 %v1668
          %2174 = vmatprep.subr.bf16.mxu0 0
          %2175 = vmatpush1.bf16.msra.mxu0 %v1669
          %2176 = vmatprep.subr.bf16.mxu0 0
          %2177 = vmatpush1.bf16.msra.mxu0 %v1670
          %2178 = vmatprep.subr.bf16.mxu0 0
          %2179 = vmatpush1.bf16.msra.mxu0 %v1671
          %2180 = vmatprep.subr.bf16.mxu0 0
          %2181 = vmatpush1.bf16.msra.mxu0 %v1672
          %2182 = vmatprep.subr.bf16.mxu0 0
          %2183 = vmatpush1.bf16.msra.mxu0 %v1673
          %2184 = vmatprep.subr.bf16.mxu0 0
          %2185 = vmatpush1.bf16.msra.mxu0 %v1674
          %2186 = vmatprep.subr.bf16.mxu0 0
          %2187 = vmatpush1.bf16.msra.mxu0 %v1675
          %2188 = vmatprep.subr.bf16.mxu0 0
          %2189 = vmatpush1.bf16.msra.mxu0 %v1676
          %2190 = vmatprep.mubr.bf16.mxu0 %v1872
          %2191 = vmatmul.mubr.bf16.gmra.mrb[0].mxu0 %v1871
          %v2192 = vpop.f32.mrb[0].mxu0
          %v2193 = vadd.f32 %v2032, %v2192
          %v2194 = vpop.f32.mrb[0].mxu0
          %v2195 = vpop.f32.mrb[0].mxu0
          %v2196 = vadd.f32 %v2035, %v2195
          %v2197 = vpop.f32.mrb[0].mxu0
          %2198 = vmatprep.mubr.bf16.mxu0 %v1876
          %2199 = vmatmul.mubr.bf16.gmra.mrb[0].mxu0 %v1875
          %v2200 = vpop.f32.mrb[0].mxu0
          %v2201 = vadd.f32 %v2040, %v2200
          %v2202 = vpop.f32.mrb[0].mxu0
          %v2203 = vpop.f32.mrb[0].mxu0
          %v2204 = vadd.f32 %v2043, %v2203
          %v2205 = vpop.f32.mrb[0].mxu0
          %2206 = vmatprep.mubr.bf16.mxu0 %v1880
          %2207 = vmatmul.mubr.bf16.gmra.mrb[0].mxu0 %v1879
          %v2208 = vpop.f32.mrb[0].mxu0
          %v2209 = vadd.f32 %v2048, %v2208
          %v2210 = vpop.f32.mrb[0].mxu0
          %v2211 = vpop.f32.mrb[0].mxu0
          %v2212 = vadd.f32 %v2051, %v2211
          %v2213 = vpop.f32.mrb[0].mxu0
          %2214 = vmatprep.mubr.bf16.mxu0 %v1884
          %2215 = vmatmul.mubr.bf16.gmra.mrb[0].mxu0 %v1883
          %v2216 = vpop.f32.mrb[0].mxu0
          %v2217 = vadd.f32 %v2056, %v2216
          %v2218 = vpop.f32.mrb[0].mxu0
          %v2219 = vpop.f32.mrb[0].mxu0
          %v2220 = vadd.f32 %v2059, %v2219
          %v2221 = vpop.f32.mrb[0].mxu0
          %2222 = vmatprep.mubr.bf16.mxu0 %v1888
          %2223 = vmatmul.mubr.bf16.gmra.mrb[0].mxu0 %v1887
          %v2224 = vpop.f32.mrb[0].mxu0
          %v2225 = vadd.f32 %v2064, %v2224
          %v2226 = vpop.f32.mrb[0].mxu0
          %v2227 = vpop.f32.mrb[0].mxu0
          %v2228 = vadd.f32 %v2067, %v2227
          %v2229 = vpop.f32.mrb[0].mxu0
          %2230 = vmatprep.mubr.bf16.mxu0 %v1892
          %2231 = vmatmul.mubr.bf16.gmra.mrb[0].mxu0 %v1891
          %v2232 = vpop.f32.mrb[0].mxu0
          %v2233 = vadd.f32 %v2072, %v2232
          %v2234 = vpop.f32.mrb[0].mxu0
          %v2235 = vpop.f32.mrb[0].mxu0
          %v2236 = vadd.f32 %v2075, %v2235
          %v2237 = vpop.f32.mrb[0].mxu0
          %2238 = vmatprep.mubr.bf16.mxu0 %v1896
          %2239 = vmatmul.mubr.bf16.gmra.mrb[0].mxu0 %v1895
          %v2240 = vpop.f32.mrb[0].mxu0
          %v2241 = vadd.f32 %v2080, %v2240
          %v2242 = vpop.f32.mrb[0].mxu0
          %v2243 = vpop.f32.mrb[0].mxu0
          %v2244 = vadd.f32 %v2083, %v2243
          %v2245 = vpop.f32.mrb[0].mxu0
          %2246 = vmatprep.mubr.bf16.mxu0 %v1900
          %2247 = vmatmul.mubr.bf16.gmra.mrb[0].mxu0 %v1899
          %v2248 = vpop.f32.mrb[0].mxu0
          %v2249 = vadd.f32 %v2088, %v2248
          %v2250 = vpop.f32.mrb[0].mxu0
          %v2251 = vpop.f32.mrb[0].mxu0
          %v2252 = vadd.f32 %v2091, %v2251
          %v2253 = vpop.f32.mrb[0].mxu0
          %2254 = vmatprep.mubr.bf16.mxu0 %v1904
          %2255 = vmatmul.mubr.bf16.gmra.mrb[0].mxu0 %v1903
          %v2256 = vpop.f32.mrb[0].mxu0
          %v2257 = vadd.f32 %v2096, %v2256
          %v2258 = vpop.f32.mrb[0].mxu0
          %v2259 = vpop.f32.mrb[0].mxu0
          %v2260 = vadd.f32 %v2099, %v2259
          %v2261 = vpop.f32.mrb[0].mxu0
          %2262 = vmatprep.mubr.bf16.mxu0 %v1908
          %2263 = vmatmul.mubr.bf16.gmra.mrb[0].mxu0 %v1907
          %v2264 = vpop.f32.mrb[0].mxu0
          %v2265 = vadd.f32 %v2104, %v2264
          %v2266 = vpop.f32.mrb[0].mxu0
          %v2267 = vpop.f32.mrb[0].mxu0
          %v2268 = vadd.f32 %v2107, %v2267
          %v2269 = vpop.f32.mrb[0].mxu0
          %2270 = vmatprep.mubr.bf16.mxu0 %v1912
          %2271 = vmatmul.mubr.bf16.gmra.mrb[0].mxu0 %v1911
          %v2272 = vpop.f32.mrb[0].mxu0
          %v2273 = vadd.f32 %v2112, %v2272
          %v2274 = vpop.f32.mrb[0].mxu0
          %v2275 = vpop.f32.mrb[0].mxu0
          %v2276 = vadd.f32 %v2115, %v2275
          %v2277 = vpop.f32.mrb[0].mxu0
          %2278 = vmatprep.mubr.bf16.mxu0 %v1916
          %2279 = vmatmul.mubr.bf16.gmra.mrb[0].mxu0 %v1915
          %v2280 = vpop.f32.mrb[0].mxu0
          %v2281 = vadd.f32 %v2120, %v2280
          %v2282 = vpop.f32.mrb[0].mxu0
          %v2283 = vpop.f32.mrb[0].mxu0
          %v2284 = vadd.f32 %v2123, %v2283
          %v2285 = vpop.f32.mrb[0].mxu0
          %2286 = vmatprep.mubr.bf16.mxu0 %v1920
          %2287 = vmatmul.mubr.bf16.gmra.mrb[0].mxu0 %v1919
          %v2288 = vpop.f32.mrb[0].mxu0
          %v2289 = vadd.f32 %v2128, %v2288
          %v2290 = vpop.f32.mrb[0].mxu0
          %v2291 = vpop.f32.mrb[0].mxu0
          %v2292 = vadd.f32 %v2131, %v2291
          %v2293 = vpop.f32.mrb[0].mxu0
          %2294 = vmatprep.mubr.bf16.mxu0 %v1924
          %2295 = vmatmul.mubr.bf16.gmra.mrb[0].mxu0 %v1923
          %v2296 = vpop.f32.mrb[0].mxu0
          %v2297 = vadd.f32 %v2136, %v2296
          %v2298 = vpop.f32.mrb[0].mxu0
          %v2299 = vpop.f32.mrb[0].mxu0
          %v2300 = vadd.f32 %v2139, %v2299
          %v2301 = vpop.f32.mrb[0].mxu0
          %2302 = vmatprep.mubr.bf16.mxu0 %v1928
          %2303 = vmatmul.mubr.bf16.gmra.mrb[0].mxu0 %v1927
          %v2304 = vpop.f32.mrb[0].mxu0
          %v2305 = vadd.f32 %v2144, %v2304
          %v2306 = vpop.f32.mrb[0].mxu0
          %v2307 = vpop.f32.mrb[0].mxu0
          %v2308 = vadd.f32 %v2147, %v2307
          %v2309 = vpop.f32.mrb[0].mxu0
          %2310 = vmatprep.mubr.bf16.mxu0 %v1932
          %2311 = vmatmul.mubr.bf16.gmra.mrb[0].mxu0 %v1931
          %v2312 = vpop.f32.mrb[0].mxu0
          %v2313 = vadd.f32 %v2152, %v2312
          %v2314 = vpop.f32.mrb[0].mxu0
          %v2315 = vpop.f32.mrb[0].mxu0
          %v2316 = vadd.f32 %v2155, %v2315
          %v2317 = vpop.f32.mrb[0].mxu0
          %2318 = vdwg.mxu0
          %v2319 = vpack.c.bf16 %v2196, %v2193
          %v2320 = vpack.c.bf16 %v2204, %v2201
          %v2321 = vpack.c.bf16 %v2212, %v2209
          %v2322 = vpack.c.bf16 %v2220, %v2217
          %v2323 = vpack.c.bf16 %v2228, %v2225
          %v2324 = vpack.c.bf16 %v2236, %v2233
          %v2325 = vpack.c.bf16 %v2244, %v2241
          %v2326 = vpack.c.bf16 %v2252, %v2249
          %v2327 = vpack.c.bf16 %v2260, %v2257
          %v2328 = vpack.c.bf16 %v2268, %v2265
          %v2329 = vpack.c.bf16 %v2276, %v2273
          %v2330 = vpack.c.bf16 %v2284, %v2281
          %v2331 = vpack.c.bf16 %v2292, %v2289
          %v2332 = vpack.c.bf16 %v2300, %v2297
          %v2333 = vpack.c.bf16 %v2308, %v2305
          %v2334 = vpack.c.bf16 %v2316, %v2313
          %v2351 = vunpack.c.l.b16 %v1553
          %v2352 = vunpack.c.l.b16 %v1554
          %v2353 = vunpack.c.l.b16 %v1555
          %v2354 = vunpack.c.l.b16 %v1556
          %v2355 = vunpack.c.l.b16 %v1557
          %v2356 = vunpack.c.l.b16 %v1558
          %v2357 = vunpack.c.l.b16 %v1559
          %v2358 = vunpack.c.l.b16 %v1560
          %v2359 = vunpack.c.l.b16 %v1561
          %v2360 = vunpack.c.l.b16 %v1562
          %v2361 = vunpack.c.l.b16 %v1563
          %v2362 = vunpack.c.l.b16 %v1564
          %v2363 = vunpack.c.l.b16 %v1565
          %v2364 = vunpack.c.l.b16 %v1566
          %v2365 = vunpack.c.l.b16 %v1567
          %v2366 = vunpack.c.l.b16 %v1568
          %v2367 = vpack.c.b16 %v2352, %v2351
          %v2368 = vpack.c.b16 %v2354, %v2353
          %v2369 = vpack.c.b16 %v2356, %v2355
          %v2370 = vpack.c.b16 %v2358, %v2357
          %v2371 = vpack.c.b16 %v2360, %v2359
          %v2372 = vpack.c.b16 %v2362, %v2361
          %v2373 = vpack.c.b16 %v2364, %v2363
          %v2374 = vpack.c.b16 %v2366, %v2365
          %2383 = vmatprep.subr.bf16.mxu0 0
          %2384 = vmatpush1.bf16.msra.mxu0 %v2367
          %2385 = vmatprep.subr.bf16.mxu0 0
          %2386 = vmatpush1.bf16.msra.mxu0 %v2368
          %2387 = vmatprep.subr.bf16.mxu0 0
          %2388 = vmatpush1.bf16.msra.mxu0 %v2369
          %2389 = vmatprep.subr.bf16.mxu0 0
          %2390 = vmatpush1.bf16.msra.mxu0 %v2370
          %2391 = vmatprep.subr.bf16.mxu0 0
          %2392 = vmatpush1.bf16.msra.mxu0 %v2371
          %2393 = vmatprep.subr.bf16.mxu0 0
          %2394 = vmatpush1.bf16.msra.mxu0 %v2372
          %2395 = vmatprep.subr.bf16.mxu0 0
          %2396 = vmatpush1.bf16.msra.mxu0 %v2373
          %2397 = vmatprep.subr.bf16.mxu0 0
          %2398 = vmatpush1.bf16.msra.mxu0 %v2374
          %2399 = vmatprep.subr.bf16.mxu0 0
          %2400 = vmatpush1.bf16.msra.mxu0 0
          %2401 = vmatprep.subr.bf16.mxu0 0
          %2402 = vmatpush1.bf16.msra.mxu0 0
          %2403 = vmatprep.subr.bf16.mxu0 0
          %2404 = vmatpush1.bf16.msra.mxu0 0
          %2405 = vmatprep.subr.bf16.mxu0 0
          %2406 = vmatpush1.bf16.msra.mxu0 0
          %2407 = vmatprep.subr.bf16.mxu0 0
          %2408 = vmatpush1.bf16.msra.mxu0 0
          %2409 = vmatprep.subr.bf16.mxu0 0
          %2410 = vmatpush1.bf16.msra.mxu0 0
          %2411 = vmatprep.subr.bf16.mxu0 0
          %2412 = vmatpush1.bf16.msra.mxu0 0
          %2413 = vmatprep.subr.bf16.mxu0 0
          %2414 = vmatpush1.bf16.msra.mxu0 0
          %2415 = vmatprep.mubr.bf16.mxu0 0
          %2416 = vmatmul.mubr.bf16.gmra.mrb[0].mxu0 %v2319
          %v2417 = vpop.f32.mrb[0].mxu0
          %v2418 = vadd.f32 0.0, %v2417
          %v2419 = vpop.f32.mrb[0].mxu0
          %v2420 = vpop.f32.mrb[0].mxu0
          %v2421 = vadd.f32 0.0, %v2420
          %v2422 = vpop.f32.mrb[0].mxu0
          %2423 = vmatprep.mubr.bf16.mxu0 0
          %2424 = vmatmul.mubr.bf16.gmra.mrb[0].mxu0 %v2320
          %v2425 = vpop.f32.mrb[0].mxu0
          %v2426 = vadd.f32 0.0, %v2425
          %v2427 = vpop.f32.mrb[0].mxu0
          %v2428 = vpop.f32.mrb[0].mxu0
          %v2429 = vadd.f32 0.0, %v2428
          %v2430 = vpop.f32.mrb[0].mxu0
          %2431 = vmatprep.mubr.bf16.mxu0 0
          %2432 = vmatmul.mubr.bf16.gmra.mrb[0].mxu0 %v2321
          %v2433 = vpop.f32.mrb[0].mxu0
          %v2434 = vadd.f32 0.0, %v2433
          %v2435 = vpop.f32.mrb[0].mxu0
          %v2436 = vpop.f32.mrb[0].mxu0
          %v2437 = vadd.f32 0.0, %v2436
          %v2438 = vpop.f32.mrb[0].mxu0
          %2439 = vmatprep.mubr.bf16.mxu0 0
          %2440 = vmatmul.mubr.bf16.gmra.mrb[0].mxu0 %v2322
          %v2441 = vpop.f32.mrb[0].mxu0
          %v2442 = vadd.f32 0.0, %v2441
          %v2443 = vpop.f32.mrb[0].mxu0
          %v2444 = vpop.f32.mrb[0].mxu0
          %v2445 = vadd.f32 0.0, %v2444
          %v2446 = vpop.f32.mrb[0].mxu0
          %2447 = vmatprep.mubr.bf16.mxu0 0
          %2448 = vmatmul.mubr.bf16.gmra.mrb[0].mxu0 %v2323
          %v2449 = vpop.f32.mrb[0].mxu0
          %v2450 = vadd.f32 0.0, %v2449
          %v2451 = vpop.f32.mrb[0].mxu0
          %v2452 = vpop.f32.mrb[0].mxu0
          %v2453 = vadd.f32 0.0, %v2452
          %v2454 = vpop.f32.mrb[0].mxu0
          %2455 = vmatprep.mubr.bf16.mxu0 0
          %2456 = vmatmul.mubr.bf16.gmra.mrb[0].mxu0 %v2324
          %v2457 = vpop.f32.mrb[0].mxu0
          %v2458 = vadd.f32 0.0, %v2457
          %v2459 = vpop.f32.mrb[0].mxu0
          %v2460 = vpop.f32.mrb[0].mxu0
          %v2461 = vadd.f32 0.0, %v2460
          %v2462 = vpop.f32.mrb[0].mxu0
          %2463 = vmatprep.mubr.bf16.mxu0 0
          %2464 = vmatmul.mubr.bf16.gmra.mrb[0].mxu0 %v2325
          %v2465 = vpop.f32.mrb[0].mxu0
          %v2466 = vadd.f32 0.0, %v2465
          %v2467 = vpop.f32.mrb[0].mxu0
          %v2468 = vpop.f32.mrb[0].mxu0
          %v2469 = vadd.f32 0.0, %v2468
          %v2470 = vpop.f32.mrb[0].mxu0
          %2471 = vmatprep.mubr.bf16.mxu0 0
          %2472 = vmatmul.mubr.bf16.gmra.mrb[0].mxu0 %v2326
          %v2473 = vpop.f32.mrb[0].mxu0
          %v2474 = vadd.f32 0.0, %v2473
          %v2475 = vpop.f32.mrb[0].mxu0
          %v2476 = vpop.f32.mrb[0].mxu0
          %v2477 = vadd.f32 0.0, %v2476
          %v2478 = vpop.f32.mrb[0].mxu0
          %2479 = vmatprep.mubr.bf16.mxu0 0
          %2480 = vmatmul.mubr.bf16.gmra.mrb[0].mxu0 %v2327
          %v2481 = vpop.f32.mrb[0].mxu0
          %v2482 = vadd.f32 0.0, %v2481
          %v2483 = vpop.f32.mrb[0].mxu0
          %v2484 = vpop.f32.mrb[0].mxu0
          %v2485 = vadd.f32 0.0, %v2484
          %v2486 = vpop.f32.mrb[0].mxu0
          %2487 = vmatprep.mubr.bf16.mxu0 0
          %2488 = vmatmul.mubr.bf16.gmra.mrb[0].mxu0 %v2328
          %v2489 = vpop.f32.mrb[0].mxu0
          %v2490 = vadd.f32 0.0, %v2489
          %v2491 = vpop.f32.mrb[0].mxu0
          %v2492 = vpop.f32.mrb[0].mxu0
          %v2493 = vadd.f32 0.0, %v2492
          %v2494 = vpop.f32.mrb[0].mxu0
          %2495 = vmatprep.mubr.bf16.mxu0 0
          %2496 = vmatmul.mubr.bf16.gmra.mrb[0].mxu0 %v2329
          %v2497 = vpop.f32.mrb[0].mxu0
          %v2498 = vadd.f32 0.0, %v2497
          %v2499 = vpop.f32.mrb[0].mxu0
          %v2500 = vpop.f32.mrb[0].mxu0
          %v2501 = vadd.f32 0.0, %v2500
          %v2502 = vpop.f32.mrb[0].mxu0
          %2503 = vmatprep.mubr.bf16.mxu0 0
          %2504 = vmatmul.mubr.bf16.gmra.mrb[0].mxu0 %v2330
          %v2505 = vpop.f32.mrb[0].mxu0
          %v2506 = vadd.f32 0.0, %v2505
          %v2507 = vpop.f32.mrb[0].mxu0
          %v2508 = vpop.f32.mrb[0].mxu0
          %v2509 = vadd.f32 0.0, %v2508
          %v2510 = vpop.f32.mrb[0].mxu0
          %2511 = vmatprep.mubr.bf16.mxu0 0
          %2512 = vmatmul.mubr.bf16.gmra.mrb[0].mxu0 %v2331
          %v2513 = vpop.f32.mrb[0].mxu0
          %v2514 = vadd.f32 0.0, %v2513
          %v2515 = vpop.f32.mrb[0].mxu0
          %v2516 = vpop.f32.mrb[0].mxu0
          %v2517 = vadd.f32 0.0, %v2516
          %v2518 = vpop.f32.mrb[0].mxu0
          %2519 = vmatprep.mubr.bf16.mxu0 0
          %2520 = vmatmul.mubr.bf16.gmra.mrb[0].mxu0 %v2332
          %v2521 = vpop.f32.mrb[0].mxu0
          %v2522 = vadd.f32 0.0, %v2521
          %v2523 = vpop.f32.mrb[0].mxu0
          %v2524 = vpop.f32.mrb[0].mxu0
          %v2525 = vadd.f32 0.0, %v2524
          %v2526 = vpop.f32.mrb[0].mxu0
          %2527 = vmatprep.mubr.bf16.mxu0 0
          %2528 = vmatmul.mubr.bf16.gmra.mrb[0].mxu0 %v2333
          %v2529 = vpop.f32.mrb[0].mxu0
          %v2530 = vadd.f32 0.0, %v2529
          %v2531 = vpop.f32.mrb[0].mxu0
          %v2532 = vpop.f32.mrb[0].mxu0
          %v2533 = vadd.f32 0.0, %v2532
          %v2534 = vpop.f32.mrb[0].mxu0
          %2535 = vmatprep.mubr.bf16.mxu0 0
          %2536 = vmatmul.mubr.bf16.gmra.mrb[0].mxu0 %v2334
          %v2537 = vpop.f32.mrb[0].mxu0
          %v2538 = vadd.f32 0.0, %v2537
          %v2539 = vpop.f32.mrb[0].mxu0
          %v2540 = vpop.f32.mrb[0].mxu0
          %v2541 = vadd.f32 0.0, %v2540
          %v2542 = vpop.f32.mrb[0].mxu0
          %2543 = vdwg.mxu0
          %v2544 = vmax.f32 %v2418, 0.0
          %v2545 = vmax.f32 %v2421, 0.0
          %v2546 = vmax.f32 %v2426, 0.0
          %v2547 = vmax.f32 %v2429, 0.0
          %v2548 = vmax.f32 %v2434, 0.0
          %v2549 = vmax.f32 %v2437, 0.0
          %v2550 = vmax.f32 %v2442, 0.0
          %v2551 = vmax.f32 %v2445, 0.0
          %v2552 = vmax.f32 %v2450, 0.0
          %v2553 = vmax.f32 %v2453, 0.0
          %v2554 = vmax.f32 %v2458, 0.0
          %v2555 = vmax.f32 %v2461, 0.0
          %v2556 = vmax.f32 %v2466, 0.0
          %v2557 = vmax.f32 %v2469, 0.0
          %v2558 = vmax.f32 %v2474, 0.0
          %v2559 = vmax.f32 %v2477, 0.0
          %v2560 = vmax.f32 %v2482, 0.0
          %v2561 = vmax.f32 %v2485, 0.0
          %v2562 = vmax.f32 %v2490, 0.0
          %v2563 = vmax.f32 %v2493, 0.0
          %v2564 = vmax.f32 %v2498, 0.0
          %v2565 = vmax.f32 %v2501, 0.0
          %v2566 = vmax.f32 %v2506, 0.0
          %v2567 = vmax.f32 %v2509, 0.0
          %v2568 = vmax.f32 %v2514, 0.0
          %v2569 = vmax.f32 %v2517, 0.0
          %v2570 = vmax.f32 %v2522, 0.0
          %v2571 = vmax.f32 %v2525, 0.0
          %v2572 = vmax.f32 %v2530, 0.0
          %v2573 = vmax.f32 %v2533, 0.0
          %v2574 = vmax.f32 %v2538, 0.0
          %v2575 = vmax.f32 %v2541, 0.0
          %v2576 = vpack.c.bf16 %v2545, %v2544
          %v2577 = vpack.c.bf16 %v2547, %v2546
          %v2578 = vpack.c.bf16 %v2549, %v2548
          %v2579 = vpack.c.bf16 %v2551, %v2550
          %v2580 = vpack.c.bf16 %v2553, %v2552
          %v2581 = vpack.c.bf16 %v2555, %v2554
          %v2582 = vpack.c.bf16 %v2557, %v2556
          %v2583 = vpack.c.bf16 %v2559, %v2558
          %v2584 = vpack.c.bf16 %v2561, %v2560
          %v2585 = vpack.c.bf16 %v2563, %v2562
          %v2586 = vpack.c.bf16 %v2565, %v2564
          %v2587 = vpack.c.bf16 %v2567, %v2566
          %v2588 = vpack.c.bf16 %v2569, %v2568
          %v2589 = vpack.c.bf16 %v2571, %v2570
          %v2590 = vpack.c.bf16 %v2573, %v2572
          %v2591 = vpack.c.bf16 %v2575, %v2574
          %s2592 = sshra.s32 %s1575, 4
          %s2593 = sand.u32 %s1575, 15
          %s2594 = smul.addr %s2592, 8
          %s2595 = scalar_lea.vmem [#allocation3], %s2594
          %2596 = vst [vmem:[%s2595] sm:$0xff] %v2576
          %2597 = vst [vmem:[%s2595 + $0x8] sm:$0xff] %v2577
          %2598 = vst [vmem:[%s2595 + $0x10] sm:$0xff] %v2578
          %2599 = vst [vmem:[%s2595 + $0x18] sm:$0xff] %v2579
          %2600 = vst [vmem:[%s2595 + $0x20] sm:$0xff] %v2580
          %2601 = vst [vmem:[%s2595 + $0x28] sm:$0xff] %v2581
          %2602 = vst [vmem:[%s2595 + $0x30] sm:$0xff] %v2582
          %2603 = vst [vmem:[%s2595 + $0x38] sm:$0xff] %v2583
          %2604 = vst [vmem:[%s2595 + $0x40] sm:$0xff] %v2584
          %2605 = vst [vmem:[%s2595 + $0x48] sm:$0xff] %v2585
          %2606 = vst [vmem:[%s2595 + $0x50] sm:$0xff] %v2586
          %2607 = vst [vmem:[%s2595 + $0x58] sm:$0xff] %v2587
          %2608 = vst [vmem:[%s2595 + $0x60] sm:$0xff] %v2588
          %2609 = vst [vmem:[%s2595 + $0x68] sm:$0xff] %v2589
          %2610 = vst [vmem:[%s2595 + $0x70] sm:$0xff] %v2590
          %2611 = vst [vmem:[%s2595 + $0x78] sm:$0xff] %v2591
        $region60: #{han_sage_forward.2} parent=35 // loop_footer
          %s1574 = sadd.s32 1, %s1570
        $region61: #{han_sage_forward.2} parent=35 // loop_footer_branch
          %1569 = sbr.rel target = $region57
        $region62: #{han_sage_forward.2} parent=35 // loop_exit
          _
        %v2612 = vld [vmem:[%s0] sm:$0xff]
        %v2613 = vlaneseq
        %v2614 = vand.u32 %v2613, 127
        %v2615 = vadd.s32 %v2614, 128
        %v2616 = vadd.s32 %v2614, 256
        %v2617 = vadd.s32 %v2614, 384
        %2618 = vset.pattern.permute.xlu0 0
        %2619 = vperm.xlu0 %2618, %v2612
        %v2620 = vpop.permute.xlu0 %2619
        %vm2621 = vcmp.eq.s32.totalorder %v2614, %v2620
        %vm2622 = vcmp.eq.s32.totalorder %v2615, %v2620
        %vm2623 = vcmp.eq.s32.totalorder %v2616, %v2620
        %vm2624 = vcmp.eq.s32.totalorder %v2617, %v2620
        %v2625 = vsel %vm2621, 1, 0
        %v2626 = vsel %vm2622, 1, 0
        %v2627 = vsel %vm2623, 1, 0
        %v2628 = vsel %vm2624, 1, 0
        %v2629 = vcvt.s32.f32 %v2625
        %v2630 = vcvt.s32.f32 %v2626
        %v2631 = vcvt.s32.f32 %v2627
        %v2632 = vcvt.s32.f32 %v2628
        %v2633 = vpack.c.bf16 %v2629, %v2629
        %v2634 = vpack.c.bf16 %v2630, %v2630
        %v2635 = vpack.c.bf16 %v2631, %v2631
        %v2636 = vpack.c.bf16 %v2632, %v2632
        %v2637 = vld [vmem:[#allocation3] sm:$0xff]
        %v2638 = vld [vmem:[#allocation3 + $0x8] sm:$0xff]
        %v2639 = vld [vmem:[#allocation3 + $0x10] sm:$0xff]
        %v2640 = vld [vmem:[#allocation3 + $0x18] sm:$0xff]
        %v2641 = vld [vmem:[#allocation3 + $0x20] sm:$0xff]
        %v2642 = vld [vmem:[#allocation3 + $0x28] sm:$0xff]
        %v2643 = vld [vmem:[#allocation3 + $0x30] sm:$0xff]
        %v2644 = vld [vmem:[#allocation3 + $0x38] sm:$0xff]
        %v2645 = vld [vmem:[#allocation3 + $0x40] sm:$0xff]
        %v2646 = vld [vmem:[#allocation3 + $0x48] sm:$0xff]
        %v2647 = vld [vmem:[#allocation3 + $0x50] sm:$0xff]
        %v2648 = vld [vmem:[#allocation3 + $0x58] sm:$0xff]
        %v2649 = vld [vmem:[#allocation3 + $0x60] sm:$0xff]
        %v2650 = vld [vmem:[#allocation3 + $0x68] sm:$0xff]
        %v2651 = vld [vmem:[#allocation3 + $0x70] sm:$0xff]
        %v2652 = vld [vmem:[#allocation3 + $0x78] sm:$0xff]
        %v2653 = vld [vmem:[#allocation3 + $0x80] sm:$0xff]
        %v2654 = vld [vmem:[#allocation3 + $0x88] sm:$0xff]
        %v2655 = vld [vmem:[#allocation3 + $0x90] sm:$0xff]
        %v2656 = vld [vmem:[#allocation3 + $0x98] sm:$0xff]
        %v2657 = vld [vmem:[#allocation3 + $0xa0] sm:$0xff]
        %v2658 = vld [vmem:[#allocation3 + $0xa8] sm:$0xff]
        %v2659 = vld [vmem:[#allocation3 + $0xb0] sm:$0xff]
        %v2660 = vld [vmem:[#allocation3 + $0xb8] sm:$0xff]
        %v2661 = vld [vmem:[#allocation3 + $0xc0] sm:$0xff]
        %v2662 = vld [vmem:[#allocation3 + $0xc8] sm:$0xff]
        %v2663 = vld [vmem:[#allocation3 + $0xd0] sm:$0xff]
        %v2664 = vld [vmem:[#allocation3 + $0xd8] sm:$0xff]
        %v2665 = vld [vmem:[#allocation3 + $0xe0] sm:$0xff]
        %v2666 = vld [vmem:[#allocation3 + $0xe8] sm:$0xff]
        %v2667 = vld [vmem:[#allocation3 + $0xf0] sm:$0xff]
        %v2668 = vld [vmem:[#allocation3 + $0xf8] sm:$0xff]
        %2669 = vmatprep.subr.bf16.mxu0 0
        %2670 = vmatpush1.bf16.msra.mxu0 %v2637
        %2671 = vmatprep.subr.bf16.mxu0 0
        %2672 = vmatpush1.bf16.msra.mxu0 %v2638
        %2673 = vmatprep.subr.bf16.mxu0 0
        %2674 = vmatpush1.bf16.msra.mxu0 %v2639
        %2675 = vmatprep.subr.bf16.mxu0 0
        %2676 = vmatpush1.bf16.msra.mxu0 %v2640
        %2677 = vmatprep.subr.bf16.mxu0 0
        %2678 = vmatpush1.bf16.msra.mxu0 %v2641
        %2679 = vmatprep.subr.bf16.mxu0 0
        %2680 = vmatpush1.bf16.msra.mxu0 %v2642
        %2681 = vmatprep.subr.bf16.mxu0 0
        %2682 = vmatpush1.bf16.msra.mxu0 %v2643
        %2683 = vmatprep.subr.bf16.mxu0 0
        %2684 = vmatpush1.bf16.msra.mxu0 %v2644
        %2685 = vmatprep.subr.bf16.mxu0 0
        %2686 = vmatpush1.bf16.msra.mxu0 %v2645
        %2687 = vmatprep.subr.bf16.mxu0 0
        %2688 = vmatpush1.bf16.msra.mxu0 %v2646
        %2689 = vmatprep.subr.bf16.mxu0 0
        %2690 = vmatpush1.bf16.msra.mxu0 %v2647
        %2691 = vmatprep.subr.bf16.mxu0 0
        %2692 = vmatpush1.bf16.msra.mxu0 %v2648
        %2693 = vmatprep.subr.bf16.mxu0 0
        %2694 = vmatpush1.bf16.msra.mxu0 %v2649
        %2695 = vmatprep.subr.bf16.mxu0 0
        %2696 = vmatpush1.bf16.msra.mxu0 %v2650
        %2697 = vmatprep.subr.bf16.mxu0 0
        %2698 = vmatpush1.bf16.msra.mxu0 %v2651
        %2699 = vmatprep.subr.bf16.mxu0 0
        %2700 = vmatpush1.bf16.msra.mxu0 %v2652
        %2701 = vmatprep.mubr.bf16.mxu0 %v2634
        %2702 = vmatmul.mubr.bf16.gmra.mrb[0].mxu0 %v2633
        %v2703 = vpop.f32.mrb[0].mxu0
        %v2704 = vadd.f32 0.0, %v2703
        %v2705 = vpop.f32.mrb[0].mxu0
        %v2706 = vpop.f32.mrb[0].mxu0
        %v2707 = vpop.f32.mrb[0].mxu0
        %2708 = vdwg.mxu0
        %2709 = vmatprep.subr.bf16.mxu0 0
        %2710 = vmatpush1.bf16.msra.mxu0 %v2653
        %2711 = vmatprep.subr.bf16.mxu0 0
        %2712 = vmatpush1.bf16.msra.mxu0 %v2654
        %2713 = vmatprep.subr.bf16.mxu0 0
        %2714 = vmatpush1.bf16.msra.mxu0 %v2655
        %2715 = vmatprep.subr.bf16.mxu0 0
        %2716 = vmatpush1.bf16.msra.mxu0 %v2656
        %2717 = vmatprep.subr.bf16.mxu0 0
        %2718 = vmatpush1.bf16.msra.mxu0 %v2657
        %2719 = vmatprep.subr.bf16.mxu0 0
        %2720 = vmatpush1.bf16.msra.mxu0 %v2658
        %2721 = vmatprep.subr.bf16.mxu0 0
        %2722 = vmatpush1.bf16.msra.mxu0 %v2659
        %2723 = vmatprep.subr.bf16.mxu0 0
        %2724 = vmatpush1.bf16.msra.mxu0 %v2660
        %2725 = vmatprep.subr.bf16.mxu0 0
        %2726 = vmatpush1.bf16.msra.mxu0 %v2661
        %2727 = vmatprep.subr.bf16.mxu0 0
        %2728 = vmatpush1.bf16.msra.mxu0 %v2662
        %2729 = vmatprep.subr.bf16.mxu0 0
        %2730 = vmatpush1.bf16.msra.mxu0 %v2663
        %2731 = vmatprep.subr.bf16.mxu0 0
        %2732 = vmatpush1.bf16.msra.mxu0 %v2664
        %2733 = vmatprep.subr.bf16.mxu0 0
        %2734 = vmatpush1.bf16.msra.mxu0 %v2665
        %2735 = vmatprep.subr.bf16.mxu0 0
        %2736 = vmatpush1.bf16.msra.mxu0 %v2666
        %2737 = vmatprep.subr.bf16.mxu0 0
        %2738 = vmatpush1.bf16.msra.mxu0 %v2667
        %2739 = vmatprep.subr.bf16.mxu0 0
        %2740 = vmatpush1.bf16.msra.mxu0 %v2668
        %2741 = vmatprep.mubr.bf16.mxu0 %v2636
        %2742 = vmatmul.mubr.bf16.gmra.mrb[0].mxu0 %v2635
        %v2743 = vpop.f32.mrb[0].mxu0
        %v2744 = vadd.f32 %v2704, %v2743
        %v2745 = vpop.f32.mrb[0].mxu0
        %v2746 = vpop.f32.mrb[0].mxu0
        %v2747 = vpop.f32.mrb[0].mxu0
        %2748 = vdwg.mxu0
        %v2749 = vpack.c.bf16 %v2744, %v2744
        %2750 = vst [vmem:[%s267] sm:$0xf] %v2749
        %p2751 = scmp.lt.s32.totalorder %s19, 2
        %s2752 = scalar_select %p2751, %s19, 2
        %s2753 = smul.addr %s2752, 4
        %s2754 = scalar_lea.vmem %s4, %s2753
        // Predicated region
        $region63: #{han_sage_forward.2} parent=35 // pred_check
          %p2755 = pneg %p131
        $region64: #{han_sage_forward.2} parent=35 // pred_check_branch
          %2757 = sbr.rel (%p2755) target = $region66
        $region65: #{han_sage_forward.2} parent=35 // pred_region
          _
        $region66: #{han_sage_forward.2} parent=35 // pred_fallthru
          _
      $region36: #{han_sage_forward.2} parent=5 // pred_fallthru
        _
      %p2758 = scmp.le.s32.totalorder 2, %s14
      // Predicated region
      $region67: #{han_sage_forward.2} parent=5 // pred_check
        %p2759 = pneg %p2758
      $region68: #{han_sage_forward.2} parent=5 // pred_check_branch
        %2761 = sbr.rel (%p2759) target = $region70
      $region69: #{han_sage_forward.2} parent=5 // pred_region
        %s2762 = ssub.s32 %s14, 2
        // Predicated region
        $region71: #{han_sage_forward.2} parent=69 // pred_check
          %p2763 = pneg %p137
        $region72: #{han_sage_forward.2} parent=69 // pred_check_branch
          %2765 = sbr.rel (%p2763) target = $region74
        $region73: #{han_sage_forward.2} parent=69 // pred_region
          %p2766 = scmp.lt.s32.totalorder %s20, 2
          %s2767 = scalar_select %p2766, %s20, 2
          %s2768 = smul.addr %s2767, 4
          %s2769 = scalar_lea.vmem %s4, %s2768
        $region74: #{han_sage_forward.2} parent=69 // pred_fallthru
          _
      $region70: #{han_sage_forward.2} parent=5 // pred_fallthru
        _
    $region6: #{han_sage_forward.2} parent=1 // loop_footer
      %s18 = sadd.s32 1, %s14
    $region7: #{han_sage_forward.2} parent=1 // loop_footer_branch
      %13 = sbr.rel target = $region3
    $region8: #{han_sage_forward.2} parent=1 // loop_exit
      _
    %2770 = vsyncpa [#allocation5], 1
    %s2771 = scalar_lea.sflag [#allocation5], 1
    %2772 = vsyncpa %s2771, 1
    %2773 = vsyncpa [#allocation7], 1

</llo_original>
